<compile_context>
chip_gen: v7x
topology: tpu7x:2x2x1
jax: 0.10.0
libtpu: 0.0.40
codegen_flags: <defaults>
</compile_context>

<pallas_src>
import jax
import jax.numpy as jnp
from jax.experimental import pallas as pl
from jax.experimental.pallas import tpu as pltpu

# ----------------------------------------------------------------------------
# Small synthetic configuration consistent with the CTGENERATE forward pass.
# ----------------------------------------------------------------------------
D, H, W = 8, 32, 32                 # CT volume  [1, 1, D, H, W]
PT, PH, PW = 2, 8, 8                # ctvit patch size
TP, HP, WP = D // PT, H // PH, W // PW   # video_patch_shape = (4, 4, 4)
N_TOK = TP * HP * WP                # 64 video tokens
PATCH_DIM = PT * PH * PW            # 128
DIM = 128                           # model / context dim
CODEBOOK = 256                      # ctvit codebook size
SEQ = 16                            # text sequence length (char tokens, padded)
VOCAB = 128                         # ascii-ish vocab, id 0 == pad
HEADS = 4
HEAD_DIM = DIM // HEADS             # 32
NEG_BIAS = -1e30

_VMEM = pl.BlockSpec(memory_space=pltpu.MemorySpace.VMEM)


# ----------------------------------------------------------------------------
# Single fused kernel: ctvit patch-embed + VQ + one-hot token embed,
# t5 projection, maskgit multi-head cross-attention.
# ----------------------------------------------------------------------------
def _ctgenerate_fused_kernel(patches_ref, patch_w_ref, cb_t_ref,
                             tok_emb_w_ref, pos_emb_ref,
                             text_raw_ref, t5_w_ref, bias_ref,
                             wq_ref, wkv_ref, wo_ref,
                             fmap_ref, attn_ref):
    f32 = jnp.float32
    bf16 = jnp.bfloat16

    # ---- ctvit: patch embedding + vector quantization (f32 distance math) ---
    z = jnp.dot(patches_ref[...], patch_w_ref[...],
                preferred_element_type=f32)                       # [N_TOK, DIM]
    cb_t = cb_t_ref[...]                                          # [DIM, CODEBOOK] (pre-transposed)
    zc = jnp.dot(z, cb_t, preferred_element_type=f32)             # [N_TOK, CODEBOOK]
    c2 = jnp.sum(cb_t * cb_t, axis=0, keepdims=True)              # [1, CODEBOOK]
    # ||z||^2 is constant per row -> irrelevant for the argmin, so drop it.
    dist = c2 - 2.0 * zc                                          # [N_TOK, CODEBOOK]
    min_d = jnp.min(dist, axis=-1, keepdims=True)
    iota = jax.lax.broadcasted_iota(jnp.int32, dist.shape, 1)
    cand = jnp.where(dist <= min_d, iota, jnp.int32(CODEBOOK))
    ids = jnp.min(cand, axis=-1, keepdims=True)                   # first argmin, [N_TOK, 1]
    one_hot = (iota == ids).astype(bf16)                          # [N_TOK, CODEBOOK]

    # ---- maskgit token embedding via one-hot MXU matmul (no gather) ---------
    tok = jnp.dot(one_hot, tok_emb_w_ref[...],
                  preferred_element_type=f32) + pos_emb_ref[...]  # [N_TOK, DIM]

    # ---- t5 projection of character embeddings ------------------------------
    ctx = jnp.dot(text_raw_ref[...].astype(bf16), t5_w_ref[...],
                  preferred_element_type=f32)                     # [SEQ, DIM]

    # ---- maskgit cross-attention --------------------------------------------
    q = jnp.dot(tok.astype(bf16), wq_ref[...],
                preferred_element_type=f32)                       # [N_TOK, DIM]
    kv = jnp.dot(ctx.astype(bf16), wkv_ref[...],
                 preferred_element_type=f32)                      # [SEQ, 2*DIM]
    k = kv[:, :DIM]                                               # [SEQ, DIM]
    v = kv[:, DIM:]                                               # [SEQ, DIM]

    scale = 1.0 / (HEAD_DIM ** 0.5)
    bias = bias_ref[...]                                          # [1, SEQ] additive mask bias

    fmap_acc = jnp.zeros((N_TOK, DIM), f32)
    attn_cols = []
    for h in range(HEADS):                                        # static, unrolled
        lo = h * HEAD_DIM
        hi = lo + HEAD_DIM
        # scores: contract last dims directly (no explicit transpose of k)
        s = jax.lax.dot_general(q[:, lo:hi], k[:, lo:hi],
                                (((1,), (1,)), ((), ())),
                                preferred_element_type=f32) * scale + bias
        s = s - jnp.max(s, axis=-1, keepdims=True)
        e = jnp.exp(s)
        a = e * pl.reciprocal(jnp.sum(e, axis=-1, keepdims=True), approx=True)
        attn_cols.append(a)                                       # [N_TOK, SEQ]
        av = jnp.dot(a, v[:, lo:hi], preferred_element_type=f32)  # [N_TOK, HEAD_DIM]
        # accumulate output projection per head (no concatenate for fmap)
        fmap_acc = fmap_acc + jnp.dot(av.astype(bf16), wo_ref[lo:hi, :],
                                      preferred_element_type=f32)

    fmap_ref[...] = fmap_acc                                      # [N_TOK, DIM]
    # lane-dense attention output: [N_TOK, HEADS*SEQ]
    attn_ref[...] = jnp.concatenate(attn_cols, axis=-1)


def _run_fused(kp, patches, raw_emb, attn_bias):
    return pl.pallas_call(
        _ctgenerate_fused_kernel,
        out_shape=(
            jax.ShapeDtypeStruct((N_TOK, DIM), jnp.float32),
            jax.ShapeDtypeStruct((N_TOK, HEADS * SEQ), jnp.float32),
        ),
        in_specs=[_VMEM] * 11,
        out_specs=(_VMEM, _VMEM),
    )(patches, kp["patch_w"], kp["cb_t"], kp["tok_emb_w"], kp["pos_emb"],
      raw_emb, kp["t5_proj_w"], attn_bias, kp["wq"], kp["wkv"], kp["wo"])


# ----------------------------------------------------------------------------
# Deterministic parameter initialization (shapes implied by the module).
# ----------------------------------------------------------------------------
def init_params(key):
    ks = jax.random.split(key, 10)
    scale = 0.02
    p = {
        "ctvit_patch_w": jax.random.normal(ks[0], (PATCH_DIM, DIM), jnp.float32) * scale,
        "ctvit_codebook": jax.random.normal(ks[1], (CODEBOOK, DIM), jnp.float32) * scale,
        "t5_emb": jax.random.normal(ks[2], (VOCAB, DIM), jnp.float32) * scale,
        "t5_proj_w": jax.random.normal(ks[3], (DIM, DIM), jnp.float32) * scale,
        "maskgit_tok_emb": jax.random.normal(ks[4], (CODEBOOK, DIM), jnp.float32) * scale,
        "maskgit_pos_emb": jax.random.normal(ks[5], (N_TOK, DIM), jnp.float32) * scale,
        "wq": jax.random.normal(ks[6], (DIM, DIM), jnp.float32) * scale,
        "wk": jax.random.normal(ks[7], (DIM, DIM), jnp.float32) * scale,
        "wv": jax.random.normal(ks[8], (DIM, DIM), jnp.float32) * scale,
        "wo": jax.random.normal(ks[9], (DIM, DIM), jnp.float32) * scale,
    }
    # Pad token (id 0) -> zero embedding, mirroring the module's masking contract.
    p["t5_emb"] = p["t5_emb"].at[0].set(0.0)
    return p


def prepare_kernel_params(p):
    """One-time kernel-layout prep: transpose codebook, pack wk|wv, bf16 weights."""
    return {
        "patch_w": p["ctvit_patch_w"].astype(jnp.float32),        # VQ path stays f32
        "cb_t": p["ctvit_codebook"].T.astype(jnp.float32),        # [DIM, CODEBOOK]
        "tok_emb_w": p["maskgit_tok_emb"].astype(jnp.bfloat16),   # [CODEBOOK, DIM]
        "pos_emb": p["maskgit_pos_emb"].astype(jnp.float32),
        "t5_emb": p["t5_emb"],                                    # gather table (XLA glue)
        "t5_proj_w": p["t5_proj_w"].astype(jnp.bfloat16),
        "wq": p["wq"].astype(jnp.bfloat16),
        "wkv": jnp.concatenate([p["wk"], p["wv"]], axis=-1).astype(jnp.bfloat16),  # [DIM, 2*DIM]
        "wo": p["wo"].astype(jnp.bfloat16),
    }


# ----------------------------------------------------------------------------
# Plain-JAX / Python glue mirroring ctvit / t5 / maskgit submodule plumbing.
# ----------------------------------------------------------------------------
def tokenize_report(report):
    # TODO(synk): host string tokenization has no Pallas equivalent.
    ids = [ord(c) % VOCAB for c in report[:SEQ]]
    ids = ids + [0] * (SEQ - len(ids))                            # pad with id 0
    return jnp.asarray(ids, dtype=jnp.int32)


def get_token_indices(report, positive_pathologies):
    # TODO(synk): keyword -> token-index extraction is host-side Python, like t5.get_token_indices.
    out = {}
    for kw in positive_pathologies:
        idxs = [i for i, c in enumerate(report[:SEQ]) if c in kw]
        out[kw] = jnp.asarray(idxs if idxs else [0], dtype=jnp.int32)
    return out


@jax.jit
def _forward_core(kp, ct_scan, char_ids):
    # patchify: [1,1,D,H,W] -> [N_TOK, PATCH_DIM]
    vol = ct_scan.reshape(D, H, W)
    patches = (vol.reshape(TP, PT, HP, PH, WP, PW)
                  .transpose(0, 2, 4, 1, 3, 5)
                  .reshape(N_TOK, PATCH_DIM)).astype(jnp.float32)

    # t5 char embedding gather (glue) + text mask from ids (not from embeddings)
    raw_emb = kp["t5_emb"][char_ids].astype(jnp.float32)          # [SEQ, DIM]
    attn_bias = jnp.where(char_ids != 0, 0.0, NEG_BIAS).astype(jnp.float32)[None, :]

    fmap, attn_flat = _run_fused(kp, patches, raw_emb, attn_bias)

    feature_map = fmap[None, ...]                                 # [1, N_TOK, DIM]
    attention = attn_flat.reshape(N_TOK, HEADS, SEQ).transpose(1, 0, 2)[None, ...]
    return feature_map, attention                                 # [1, HEADS, N_TOK, SEQ]


def ctgenerate_forward(kparams, ct_scan, report, positive_pathologies,
                       return_embeds=True):
    char_ids = tokenize_report(report)
    feature_map, attention = _forward_core(kparams, ct_scan, char_ids)

    keyword_indices = get_token_indices(report, positive_pathologies)
    kw_attention = {kw: attention[..., idx] for kw, idx in keyword_indices.items()}
    return feature_map, kw_attention


# ----------------------------------------------------------------------------
if __name__ == "__main__":
    key = jax.random.PRNGKey(0)
    pkey, xkey = jax.random.split(key)
    params = init_params(pkey)
    kparams = prepare_kernel_params(params)

    ct_scan = jax.random.normal(xkey, (1, 1, D, H, W), jnp.float32)
    report = "lung opacity"                    # shorter than SEQ -> padded tail
    positive_pathologies = ["opacity", "lung"]

    feature_map, kw_attention = ctgenerate_forward(
        kparams, ct_scan, report, positive_pathologies)

    jax.block_until_ready(feature_map)
    for v in kw_attention.values():
        jax.block_until_ready(v)

    assert feature_map.shape == (1, N_TOK, DIM)
    for kw, v in kw_attention.items():
        assert v.shape[:3] == (1, HEADS, N_TOK)
    assert bool(jnp.all(jnp.isfinite(feature_map)))

    print("KERNEL_OK")
</pallas_src>

<mosaic_0001>
module attributes {stable_mosaic.version = 11 : i64} {
  func.func @_ctgenerate_fused_kernel(%arg0: memref<64x128xf32, #tpu.memory_space<vmem>>, %arg1: memref<128x128xf32, #tpu.memory_space<vmem>>, %arg2: memref<128x256xf32, #tpu.memory_space<vmem>>, %arg3: memref<256x128xbf16, #tpu.memory_space<vmem>>, %arg4: memref<64x128xf32, #tpu.memory_space<vmem>>, %arg5: memref<16x128xf32, #tpu.memory_space<vmem>>, %arg6: memref<128x128xbf16, #tpu.memory_space<vmem>>, %arg7: memref<1x16xf32, #tpu.memory_space<vmem>>, %arg8: memref<128x128xbf16, #tpu.memory_space<vmem>>, %arg9: memref<128x256xbf16, #tpu.memory_space<vmem>>, %arg10: memref<128x128xbf16, #tpu.memory_space<vmem>>, %arg11: memref<64x128xf32, #tpu.memory_space<vmem>>, %arg12: memref<64x64xf32, #tpu.memory_space<vmem>>) attributes {dimension_semantics = [], scalar_prefetch = 0 : i64, scratch_operands = 0 : i64, tpu.core_type = #tpu.core_type<tc>} {
    %c0 = arith.constant 0 : index
    %c0_0 = arith.constant 0 : index
    %0 = vector.load %arg0[%c0, %c0_0] : memref<64x128xf32, #tpu.memory_space<vmem>>, vector<64x128xf32>
    %c0_1 = arith.constant 0 : index
    %c0_2 = arith.constant 0 : index
    %1 = vector.load %arg1[%c0_1, %c0_2] : memref<128x128xf32, #tpu.memory_space<vmem>>, vector<128x128xf32>
    %cst = arith.constant dense<0.000000e+00> : vector<64x128xf32>
    %2 = tpu.matmul %0, %1, %cst {dimension_numbers = #tpu.dot_dimension_numbers<[1], [0], [0], [1], [0, 0, 1, 1], [], []>} : vector<64x128xf32>, vector<128x128xf32>, vector<64x128xf32> -> vector<64x128xf32>
    %c0_3 = arith.constant 0 : index
    %c0_4 = arith.constant 0 : index
    %3 = vector.load %arg2[%c0_3, %c0_4] : memref<128x256xf32, #tpu.memory_space<vmem>>, vector<128x256xf32>
    %cst_5 = arith.constant dense<0.000000e+00> : vector<64x256xf32>
    %4 = tpu.matmul %2, %3, %cst_5 {dimension_numbers = #tpu.dot_dimension_numbers<[1], [0], [0], [1], [0, 0, 1, 1], [], []>} : vector<64x128xf32>, vector<128x256xf32>, vector<64x256xf32> -> vector<64x256xf32>
    %5 = arith.mulf %3, %3 : vector<128x256xf32>
    %cst_6 = arith.constant dense<0.000000e+00> : vector<256xf32>
    %6 = vector.multi_reduction <add>, %5, %cst_6 [0] : vector<128x256xf32> to vector<256xf32>
    %7 = vector.shape_cast %6 : vector<256xf32> to vector<1x256xf32>
    %cst_7 = arith.constant 2.000000e+00 : f32
    %8 = vector.broadcast %cst_7 : f32 to vector<64x256xf32>
    %9 = arith.mulf %8, %4 : vector<64x256xf32>
    %10 = vector.broadcast %7 : vector<1x256xf32> to vector<64x256xf32>
    %11 = arith.subf %10, %9 : vector<64x256xf32>
    %cst_8 = arith.constant dense<0x7F800000> : vector<64xf32>
    %12 = vector.multi_reduction <minimumf>, %11, %cst_8 [1] : vector<64x256xf32> to vector<64xf32>
    %13 = vector.shape_cast %12 : vector<64xf32> to vector<64x1xf32>
    %14 = tpu.iota {dimensions = array<i32: 1>} : vector<64x256xi32>
    %15 = vector.broadcast %13 : vector<64x1xf32> to vector<64x256xf32>
    %16 = arith.cmpf ole, %11, %15 : vector<64x256xf32>
    %c256_i32 = arith.constant 256 : i32
    %17 = vector.broadcast %c256_i32 : i32 to vector<64x256xi32>
    %18 = arith.select %16, %14, %17 : vector<64x256xi1>, vector<64x256xi32>
    %cst_9 = arith.constant dense<2147483647> : vector<64xi32>
    %19 = vector.multi_reduction <minsi>, %18, %cst_9 [1] : vector<64x256xi32> to vector<64xi32>
    %20 = vector.shape_cast %19 : vector<64xi32> to vector<64x1xi32>
    %21 = vector.broadcast %20 : vector<64x1xi32> to vector<64x256xi32>
    %22 = arith.cmpi eq, %14, %21 : vector<64x256xi32>
    %23 = arith.extui %22 : vector<64x256xi1> to vector<64x256xi32>
    %24 = arith.sitofp %23 : vector<64x256xi32> to vector<64x256xf32>
    %25 = arith.truncf %24 : vector<64x256xf32> to vector<64x256xbf16>
    %c0_10 = arith.constant 0 : index
    %c0_11 = arith.constant 0 : index
    %26 = vector.load %arg3[%c0_10, %c0_11] : memref<256x128xbf16, #tpu.memory_space<vmem>>, vector<256x128xbf16>
    %cst_12 = arith.constant dense<0.000000e+00> : vector<64x128xf32>
    %27 = tpu.matmul %25, %26, %cst_12 {dimension_numbers = #tpu.dot_dimension_numbers<[1], [0], [0], [1], [0, 0, 1, 1], [], []>} : vector<64x256xbf16>, vector<256x128xbf16>, vector<64x128xf32> -> vector<64x128xf32>
    %c0_13 = arith.constant 0 : index
    %c0_14 = arith.constant 0 : index
    %28 = vector.load %arg4[%c0_13, %c0_14] : memref<64x128xf32, #tpu.memory_space<vmem>>, vector<64x128xf32>
    %29 = arith.addf %27, %28 : vector<64x128xf32>
    %c0_15 = arith.constant 0 : index
    %c0_16 = arith.constant 0 : index
    %30 = vector.load %arg5[%c0_15, %c0_16] : memref<16x128xf32, #tpu.memory_space<vmem>>, vector<16x128xf32>
    %31 = arith.truncf %30 : vector<16x128xf32> to vector<16x128xbf16>
    %c0_17 = arith.constant 0 : index
    %c0_18 = arith.constant 0 : index
    %32 = vector.load %arg6[%c0_17, %c0_18] : memref<128x128xbf16, #tpu.memory_space<vmem>>, vector<128x128xbf16>
    %cst_19 = arith.constant dense<0.000000e+00> : vector<16x128xf32>
    %33 = tpu.matmul %31, %32, %cst_19 {dimension_numbers = #tpu.dot_dimension_numbers<[1], [0], [0], [1], [0, 0, 1, 1], [], []>} : vector<16x128xbf16>, vector<128x128xbf16>, vector<16x128xf32> -> vector<16x128xf32>
    %34 = arith.truncf %29 : vector<64x128xf32> to vector<64x128xbf16>
    %c0_20 = arith.constant 0 : index
    %c0_21 = arith.constant 0 : index
    %35 = vector.load %arg8[%c0_20, %c0_21] : memref<128x128xbf16, #tpu.memory_space<vmem>>, vector<128x128xbf16>
    %cst_22 = arith.constant dense<0.000000e+00> : vector<64x128xf32>
    %36 = tpu.matmul %34, %35, %cst_22 {dimension_numbers = #tpu.dot_dimension_numbers<[1], [0], [0], [1], [0, 0, 1, 1], [], []>} : vector<64x128xbf16>, vector<128x128xbf16>, vector<64x128xf32> -> vector<64x128xf32>
    %37 = arith.truncf %33 : vector<16x128xf32> to vector<16x128xbf16>
    %c0_23 = arith.constant 0 : index
    %c0_24 = arith.constant 0 : index
    %38 = vector.load %arg9[%c0_23, %c0_24] : memref<128x256xbf16, #tpu.memory_space<vmem>>, vector<128x256xbf16>
    %cst_25 = arith.constant dense<0.000000e+00> : vector<16x256xf32>
    %39 = tpu.matmul %37, %38, %cst_25 {dimension_numbers = #tpu.dot_dimension_numbers<[1], [0], [0], [1], [0, 0, 1, 1], [], []>} : vector<16x128xbf16>, vector<128x256xbf16>, vector<16x256xf32> -> vector<16x256xf32>
    %40 = vector.extract_strided_slice %39 {offsets = [0, 0], sizes = [16, 128], strides = [1, 1]} : vector<16x256xf32> to vector<16x128xf32>
    %41 = vector.extract_strided_slice %39 {offsets = [0, 128], sizes = [16, 128], strides = [1, 1]} : vector<16x256xf32> to vector<16x128xf32>
    %c0_26 = arith.constant 0 : index
    %c0_27 = arith.constant 0 : index
    %42 = vector.load %arg7[%c0_26, %c0_27] : memref<1x16xf32, #tpu.memory_space<vmem>>, vector<1x16xf32>
    %cst_28 = arith.constant 0.000000e+00 : f32
    %43 = vector.broadcast %cst_28 : f32 to vector<64x128xf32>
    %44 = vector.extract_strided_slice %36 {offsets = [0, 0], sizes = [64, 32], strides = [1, 1]} : vector<64x128xf32> to vector<64x32xf32>
    %45 = vector.extract_strided_slice %40 {offsets = [0, 0], sizes = [16, 32], strides = [1, 1]} : vector<16x128xf32> to vector<16x32xf32>
    %cst_29 = arith.constant dense<0.000000e+00> : vector<64x16xf32>
    %46 = tpu.matmul %44, %45, %cst_29 {dimension_numbers = #tpu.dot_dimension_numbers<[1], [1], [0], [0], [0, 0, 1, 0], [], []>} : vector<64x32xf32>, vector<16x32xf32>, vector<64x16xf32> -> vector<64x16xf32>
    %cst_30 = arith.constant 0.176776692 : f32
    %47 = vector.broadcast %cst_30 : f32 to vector<64x16xf32>
    %48 = arith.mulf %46, %47 : vector<64x16xf32>
    %49 = vector.broadcast %42 : vector<1x16xf32> to vector<64x16xf32>
    %50 = arith.addf %48, %49 : vector<64x16xf32>
    %cst_31 = arith.constant dense<0xFF800000> : vector<64xf32>
    %51 = vector.multi_reduction <maximumf>, %50, %cst_31 [1] : vector<64x16xf32> to vector<64xf32>
    %52 = vector.shape_cast %51 : vector<64xf32> to vector<64x1xf32>
    %53 = vector.broadcast %52 : vector<64x1xf32> to vector<64x16xf32>
    %54 = arith.subf %50, %53 : vector<64x16xf32>
    %55 = math.exp %54 : vector<64x16xf32>
    %cst_32 = arith.constant dense<0.000000e+00> : vector<64xf32>
    %56 = vector.multi_reduction <add>, %55, %cst_32 [1] : vector<64x16xf32> to vector<64xf32>
    %57 = vector.shape_cast %56 : vector<64xf32> to vector<64x1xf32>
    %58 = tpu.reciprocal %57 {approx = true} : vector<64x1xf32> -> vector<64x1xf32>
    %59 = vector.broadcast %58 : vector<64x1xf32> to vector<64x16xf32>
    %60 = arith.mulf %55, %59 : vector<64x16xf32>
    %61 = vector.extract_strided_slice %41 {offsets = [0, 0], sizes = [16, 32], strides = [1, 1]} : vector<16x128xf32> to vector<16x32xf32>
    %cst_33 = arith.constant dense<0.000000e+00> : vector<64x32xf32>
    %62 = tpu.matmul %60, %61, %cst_33 {dimension_numbers = #tpu.dot_dimension_numbers<[1], [0], [0], [1], [0, 0, 1, 1], [], []>} : vector<64x16xf32>, vector<16x32xf32>, vector<64x32xf32> -> vector<64x32xf32>
    %63 = arith.truncf %62 : vector<64x32xf32> to vector<64x32xbf16>
    %c0_34 = arith.constant 0 : index
    %c0_35 = arith.constant 0 : index
    %64 = vector.load %arg10[%c0_34, %c0_35] : memref<128x128xbf16, #tpu.memory_space<vmem>>, vector<32x128xbf16>
    %cst_36 = arith.constant dense<0.000000e+00> : vector<64x128xf32>
    %65 = tpu.matmul %63, %64, %cst_36 {dimension_numbers = #tpu.dot_dimension_numbers<[1], [0], [0], [1], [0, 0, 1, 1], [], []>} : vector<64x32xbf16>, vector<32x128xbf16>, vector<64x128xf32> -> vector<64x128xf32>
    %66 = arith.addf %43, %65 : vector<64x128xf32>
    %67 = vector.extract_strided_slice %36 {offsets = [0, 32], sizes = [64, 32], strides = [1, 1]} : vector<64x128xf32> to vector<64x32xf32>
    %68 = vector.extract_strided_slice %40 {offsets = [0, 32], sizes = [16, 32], strides = [1, 1]} : vector<16x128xf32> to vector<16x32xf32>
    %cst_37 = arith.constant dense<0.000000e+00> : vector<64x16xf32>
    %69 = tpu.matmul %67, %68, %cst_37 {dimension_numbers = #tpu.dot_dimension_numbers<[1], [1], [0], [0], [0, 0, 1, 0], [], []>} : vector<64x32xf32>, vector<16x32xf32>, vector<64x16xf32> -> vector<64x16xf32>
    %cst_38 = arith.constant 0.176776692 : f32
    %70 = vector.broadcast %cst_38 : f32 to vector<64x16xf32>
    %71 = arith.mulf %69, %70 : vector<64x16xf32>
    %72 = vector.broadcast %42 : vector<1x16xf32> to vector<64x16xf32>
    %73 = arith.addf %71, %72 : vector<64x16xf32>
    %cst_39 = arith.constant dense<0xFF800000> : vector<64xf32>
    %74 = vector.multi_reduction <maximumf>, %73, %cst_39 [1] : vector<64x16xf32> to vector<64xf32>
    %75 = vector.shape_cast %74 : vector<64xf32> to vector<64x1xf32>
    %76 = vector.broadcast %75 : vector<64x1xf32> to vector<64x16xf32>
    %77 = arith.subf %73, %76 : vector<64x16xf32>
    %78 = math.exp %77 : vector<64x16xf32>
    %cst_40 = arith.constant dense<0.000000e+00> : vector<64xf32>
    %79 = vector.multi_reduction <add>, %78, %cst_40 [1] : vector<64x16xf32> to vector<64xf32>
    %80 = vector.shape_cast %79 : vector<64xf32> to vector<64x1xf32>
    %81 = tpu.reciprocal %80 {approx = true} : vector<64x1xf32> -> vector<64x1xf32>
    %82 = vector.broadcast %81 : vector<64x1xf32> to vector<64x16xf32>
    %83 = arith.mulf %78, %82 : vector<64x16xf32>
    %84 = vector.extract_strided_slice %41 {offsets = [0, 32], sizes = [16, 32], strides = [1, 1]} : vector<16x128xf32> to vector<16x32xf32>
    %cst_41 = arith.constant dense<0.000000e+00> : vector<64x32xf32>
    %85 = tpu.matmul %83, %84, %cst_41 {dimension_numbers = #tpu.dot_dimension_numbers<[1], [0], [0], [1], [0, 0, 1, 1], [], []>} : vector<64x16xf32>, vector<16x32xf32>, vector<64x32xf32> -> vector<64x32xf32>
    %86 = arith.truncf %85 : vector<64x32xf32> to vector<64x32xbf16>
    %c32 = arith.constant 32 : index
    %c0_42 = arith.constant 0 : index
    %87 = vector.load %arg10[%c32, %c0_42] : memref<128x128xbf16, #tpu.memory_space<vmem>>, vector<32x128xbf16>
    %cst_43 = arith.constant dense<0.000000e+00> : vector<64x128xf32>
    %88 = tpu.matmul %86, %87, %cst_43 {dimension_numbers = #tpu.dot_dimension_numbers<[1], [0], [0], [1], [0, 0, 1, 1], [], []>} : vector<64x32xbf16>, vector<32x128xbf16>, vector<64x128xf32> -> vector<64x128xf32>
    %89 = arith.addf %66, %88 : vector<64x128xf32>
    %90 = vector.extract_strided_slice %36 {offsets = [0, 64], sizes = [64, 32], strides = [1, 1]} : vector<64x128xf32> to vector<64x32xf32>
    %91 = vector.extract_strided_slice %40 {offsets = [0, 64], sizes = [16, 32], strides = [1, 1]} : vector<16x128xf32> to vector<16x32xf32>
    %cst_44 = arith.constant dense<0.000000e+00> : vector<64x16xf32>
    %92 = tpu.matmul %90, %91, %cst_44 {dimension_numbers = #tpu.dot_dimension_numbers<[1], [1], [0], [0], [0, 0, 1, 0], [], []>} : vector<64x32xf32>, vector<16x32xf32>, vector<64x16xf32> -> vector<64x16xf32>
    %cst_45 = arith.constant 0.176776692 : f32
    %93 = vector.broadcast %cst_45 : f32 to vector<64x16xf32>
    %94 = arith.mulf %92, %93 : vector<64x16xf32>
    %95 = vector.broadcast %42 : vector<1x16xf32> to vector<64x16xf32>
    %96 = arith.addf %94, %95 : vector<64x16xf32>
    %cst_46 = arith.constant dense<0xFF800000> : vector<64xf32>
    %97 = vector.multi_reduction <maximumf>, %96, %cst_46 [1] : vector<64x16xf32> to vector<64xf32>
    %98 = vector.shape_cast %97 : vector<64xf32> to vector<64x1xf32>
    %99 = vector.broadcast %98 : vector<64x1xf32> to vector<64x16xf32>
    %100 = arith.subf %96, %99 : vector<64x16xf32>
    %101 = math.exp %100 : vector<64x16xf32>
    %cst_47 = arith.constant dense<0.000000e+00> : vector<64xf32>
    %102 = vector.multi_reduction <add>, %101, %cst_47 [1] : vector<64x16xf32> to vector<64xf32>
    %103 = vector.shape_cast %102 : vector<64xf32> to vector<64x1xf32>
    %104 = tpu.reciprocal %103 {approx = true} : vector<64x1xf32> -> vector<64x1xf32>
    %105 = vector.broadcast %104 : vector<64x1xf32> to vector<64x16xf32>
    %106 = arith.mulf %101, %105 : vector<64x16xf32>
    %107 = vector.extract_strided_slice %41 {offsets = [0, 64], sizes = [16, 32], strides = [1, 1]} : vector<16x128xf32> to vector<16x32xf32>
    %cst_48 = arith.constant dense<0.000000e+00> : vector<64x32xf32>
    %108 = tpu.matmul %106, %107, %cst_48 {dimension_numbers = #tpu.dot_dimension_numbers<[1], [0], [0], [1], [0, 0, 1, 1], [], []>} : vector<64x16xf32>, vector<16x32xf32>, vector<64x32xf32> -> vector<64x32xf32>
    %109 = arith.truncf %108 : vector<64x32xf32> to vector<64x32xbf16>
    %c64 = arith.constant 64 : index
    %c0_49 = arith.constant 0 : index
    %110 = vector.load %arg10[%c64, %c0_49] : memref<128x128xbf16, #tpu.memory_space<vmem>>, vector<32x128xbf16>
    %cst_50 = arith.constant dense<0.000000e+00> : vector<64x128xf32>
    %111 = tpu.matmul %109, %110, %cst_50 {dimension_numbers = #tpu.dot_dimension_numbers<[1], [0], [0], [1], [0, 0, 1, 1], [], []>} : vector<64x32xbf16>, vector<32x128xbf16>, vector<64x128xf32> -> vector<64x128xf32>
    %112 = arith.addf %89, %111 : vector<64x128xf32>
    %113 = vector.extract_strided_slice %36 {offsets = [0, 96], sizes = [64, 32], strides = [1, 1]} : vector<64x128xf32> to vector<64x32xf32>
    %114 = vector.extract_strided_slice %40 {offsets = [0, 96], sizes = [16, 32], strides = [1, 1]} : vector<16x128xf32> to vector<16x32xf32>
    %cst_51 = arith.constant dense<0.000000e+00> : vector<64x16xf32>
    %115 = tpu.matmul %113, %114, %cst_51 {dimension_numbers = #tpu.dot_dimension_numbers<[1], [1], [0], [0], [0, 0, 1, 0], [], []>} : vector<64x32xf32>, vector<16x32xf32>, vector<64x16xf32> -> vector<64x16xf32>
    %cst_52 = arith.constant 0.176776692 : f32
    %116 = vector.broadcast %cst_52 : f32 to vector<64x16xf32>
    %117 = arith.mulf %115, %116 : vector<64x16xf32>
    %118 = vector.broadcast %42 : vector<1x16xf32> to vector<64x16xf32>
    %119 = arith.addf %117, %118 : vector<64x16xf32>
    %cst_53 = arith.constant dense<0xFF800000> : vector<64xf32>
    %120 = vector.multi_reduction <maximumf>, %119, %cst_53 [1] : vector<64x16xf32> to vector<64xf32>
    %121 = vector.shape_cast %120 : vector<64xf32> to vector<64x1xf32>
    %122 = vector.broadcast %121 : vector<64x1xf32> to vector<64x16xf32>
    %123 = arith.subf %119, %122 : vector<64x16xf32>
    %124 = math.exp %123 : vector<64x16xf32>
    %cst_54 = arith.constant dense<0.000000e+00> : vector<64xf32>
    %125 = vector.multi_reduction <add>, %124, %cst_54 [1] : vector<64x16xf32> to vector<64xf32>
    %126 = vector.shape_cast %125 : vector<64xf32> to vector<64x1xf32>
    %127 = tpu.reciprocal %126 {approx = true} : vector<64x1xf32> -> vector<64x1xf32>
    %128 = vector.broadcast %127 : vector<64x1xf32> to vector<64x16xf32>
    %129 = arith.mulf %124, %128 : vector<64x16xf32>
    %130 = vector.extract_strided_slice %41 {offsets = [0, 96], sizes = [16, 32], strides = [1, 1]} : vector<16x128xf32> to vector<16x32xf32>
    %cst_55 = arith.constant dense<0.000000e+00> : vector<64x32xf32>
    %131 = tpu.matmul %129, %130, %cst_55 {dimension_numbers = #tpu.dot_dimension_numbers<[1], [0], [0], [1], [0, 0, 1, 1], [], []>} : vector<64x16xf32>, vector<16x32xf32>, vector<64x32xf32> -> vector<64x32xf32>
    %132 = arith.truncf %131 : vector<64x32xf32> to vector<64x32xbf16>
    %c96 = arith.constant 96 : index
    %c0_56 = arith.constant 0 : index
    %133 = vector.load %arg10[%c96, %c0_56] : memref<128x128xbf16, #tpu.memory_space<vmem>>, vector<32x128xbf16>
    %cst_57 = arith.constant dense<0.000000e+00> : vector<64x128xf32>
    %134 = tpu.matmul %132, %133, %cst_57 {dimension_numbers = #tpu.dot_dimension_numbers<[1], [0], [0], [1], [0, 0, 1, 1], [], []>} : vector<64x32xbf16>, vector<32x128xbf16>, vector<64x128xf32> -> vector<64x128xf32>
    %135 = arith.addf %112, %134 : vector<64x128xf32>
    %c0_58 = arith.constant 0 : index
    %c0_59 = arith.constant 0 : index
    %136 = vector.load %arg11[%c0_58, %c0_59] : memref<64x128xf32, #tpu.memory_space<vmem>>, vector<64x128xf32>
    tpu.vector_store %arg11[%c0_58, %c0_59], %135 {strides = array<i32>} : memref<64x128xf32, #tpu.memory_space<vmem>>, vector<64x128xf32>,
    %137 = tpu.concatenate %60, %83, %106, %129 in 1 : vector<64x16xf32>, vector<64x16xf32>, vector<64x16xf32>, vector<64x16xf32> -> vector<64x64xf32>
    %c0_60 = arith.constant 0 : index
    %c0_61 = arith.constant 0 : index
    %138 = vector.load %arg12[%c0_60, %c0_61] : memref<64x64xf32, #tpu.memory_space<vmem>>, vector<64x64xf32>
    tpu.vector_store %arg12[%c0_60, %c0_61], %137 {strides = array<i32>} : memref<64x64xf32, #tpu.memory_space<vmem>>, vector<64x64xf32>,
    return
  }
}

</mosaic_0001>

<llo_original>
// kernel: _forward_core.1
$region0: #{_forward_core.1}
  #allocation0 [shape = 'u32[]', space=smem, size = 0x4, offset = 0x4, fixed_abs, tag = 'smem constant byte address 0x4 - core index']
  #allocation1 [shape = 'u32[144,128]{1,0:T(1,128)}', space=vmem, size = 0x12000, scoped, tag = 'internal scratch']
  %s0 = inlined_call_operand.vmem [shape: f32[64,128], index: 0, kind: input, shape index: {}]
  %s1 = inlined_call_operand.vmem [shape: f32[128,128], index: 1, kind: input, shape index: {}]
  %s2 = inlined_call_operand.vmem [shape: f32[128,256], index: 2, kind: input, shape index: {}]
  %s3 = inlined_call_operand.vmem [shape: bf16[256,128], index: 3, kind: input, shape index: {}]
  %s4 = inlined_call_operand.vmem [shape: f32[64,128], index: 4, kind: input, shape index: {}]
  %s5 = inlined_call_operand.vmem [shape: f32[16,128], index: 5, kind: input, shape index: {}]
  %s6 = inlined_call_operand.vmem [shape: bf16[128,128], index: 6, kind: input, shape index: {}]
  %s7 = inlined_call_operand.vmem [shape: f32[1,16], index: 7, kind: input, shape index: {}]
  %s8 = inlined_call_operand.vmem [shape: bf16[128,128], index: 8, kind: input, shape index: {}]
  %s9 = inlined_call_operand.vmem [shape: bf16[128,256], index: 9, kind: input, shape index: {}]
  %s10 = inlined_call_operand.vmem [shape: bf16[128,128], index: 10, kind: input, shape index: {}]
  %s11 = inlined_call_operand.hbm [shape: f32[64,128], index: 11, kind: output, shape index: {0}]
  %s12 = inlined_call_operand.vmem [shape: f32[64,64], index: 12, kind: output, shape index: {1}]
  %13 = xla_tuple %s11, %s12
  %s14 = sld [smem:[#allocation0]]
  $region62: #{_forward_core.1} parent=0
    _
  %s16 = ssub.s32 1, %s14
  %s17 = scalar_select 0, %s16, %s14
  $region1: #{_forward_core.1} parent=0
    #allocation2 [shape = 'u8[32768]{0}', space=vmem, size = 0x8000, scoped, tag = 'output window, operand 0, single buffered']
    #allocation3 [shape = 's32[1]{0}', space=sflag, size = 0x4, scoped, tag = 'scoped memory for _forward_core.1']
    %18 = vsyncpa [#allocation3], 0
    // Predicated region
    $region2: #{_forward_core.1} parent=1 // pred_check
      _
    $region3: #{_forward_core.1} parent=1 // pred_check_branch
      %20 = sbr.rel (0) target = $region5
    $region4: #{_forward_core.1} parent=1 // pred_region
      _
    $region5: #{_forward_core.1} parent=1 // pred_fallthru
      _
    // Predicated region
    $region6: #{_forward_core.1} parent=1 // pred_check
      _
    $region7: #{_forward_core.1} parent=1 // pred_check_branch
      %22 = sbr.rel (0) target = $region9
    $region8: #{_forward_core.1} parent=1 // pred_region
      _
    $region9: #{_forward_core.1} parent=1 // pred_fallthru
      _
    // Predicated region
    $region10: #{_forward_core.1} parent=1 // pred_check
      _
    $region11: #{_forward_core.1} parent=1 // pred_check_branch
      %24 = sbr.rel (0) target = $region13
    $region12: #{_forward_core.1} parent=1 // pred_region
      _
    $region13: #{_forward_core.1} parent=1 // pred_fallthru
      _
    // Predicated region
    $region14: #{_forward_core.1} parent=1 // pred_check
      _
    $region15: #{_forward_core.1} parent=1 // pred_check_branch
      %26 = sbr.rel (0) target = $region17
    $region16: #{_forward_core.1} parent=1 // pred_region
      _
    $region17: #{_forward_core.1} parent=1 // pred_fallthru
      _
    // Predicated region
    $region18: #{_forward_core.1} parent=1 // pred_check
      _
    $region19: #{_forward_core.1} parent=1 // pred_check_branch
      %28 = sbr.rel (0) target = $region21
    $region20: #{_forward_core.1} parent=1 // pred_region
      _
    $region21: #{_forward_core.1} parent=1 // pred_fallthru
      _
    // Predicated region
    $region22: #{_forward_core.1} parent=1 // pred_check
      _
    $region23: #{_forward_core.1} parent=1 // pred_check_branch
      %30 = sbr.rel (0) target = $region25
    $region24: #{_forward_core.1} parent=1 // pred_region
      _
    $region25: #{_forward_core.1} parent=1 // pred_fallthru
      _
    // Predicated region
    $region26: #{_forward_core.1} parent=1 // pred_check
      _
    $region27: #{_forward_core.1} parent=1 // pred_check_branch
      %32 = sbr.rel (0) target = $region29
    $region28: #{_forward_core.1} parent=1 // pred_region
      _
    $region29: #{_forward_core.1} parent=1 // pred_fallthru
      _
    // Predicated region
    $region30: #{_forward_core.1} parent=1 // pred_check
      _
    $region31: #{_forward_core.1} parent=1 // pred_check_branch
      %34 = sbr.rel (0) target = $region33
    $region32: #{_forward_core.1} parent=1 // pred_region
      _
    $region33: #{_forward_core.1} parent=1 // pred_fallthru
      _
    // Predicated region
    $region34: #{_forward_core.1} parent=1 // pred_check
      _
    $region35: #{_forward_core.1} parent=1 // pred_check_branch
      %36 = sbr.rel (0) target = $region37
    $region36: #{_forward_core.1} parent=1 // pred_region
      _
    $region37: #{_forward_core.1} parent=1 // pred_fallthru
      _
    // Predicated region
    $region38: #{_forward_core.1} parent=1 // pred_check
      _
    $region39: #{_forward_core.1} parent=1 // pred_check_branch
      %38 = sbr.rel (0) target = $region41
    $region40: #{_forward_core.1} parent=1 // pred_region
      _
    $region41: #{_forward_core.1} parent=1 // pred_fallthru
      _
    // Predicated region
    $region42: #{_forward_core.1} parent=1 // pred_check
      _
    $region43: #{_forward_core.1} parent=1 // pred_check_branch
      %40 = sbr.rel (0) target = $region45
    $region44: #{_forward_core.1} parent=1 // pred_region
      _
    $region45: #{_forward_core.1} parent=1 // pred_fallthru
      _
    %v42 = vld [vmem:[%s0] sm:$0xff]
    %v43 = vld [vmem:[%s0 + $0x8] sm:$0xff]
    %v44 = vld [vmem:[%s0 + $0x10] sm:$0xff]
    %v45 = vld [vmem:[%s0 + $0x18] sm:$0xff]
    %v46 = vld [vmem:[%s0 + $0x20] sm:$0xff]
    %v47 = vld [vmem:[%s0 + $0x28] sm:$0xff]
    %v48 = vld [vmem:[%s0 + $0x30] sm:$0xff]
    %v49 = vld [vmem:[%s0 + $0x38] sm:$0xff]
    %v50 = vld [vmem:[%s1] sm:$0xff]
    %v51 = vld [vmem:[%s1 + $0x8] sm:$0xff]
    %v52 = vld [vmem:[%s1 + $0x10] sm:$0xff]
    %v53 = vld [vmem:[%s1 + $0x18] sm:$0xff]
    %v54 = vld [vmem:[%s1 + $0x20] sm:$0xff]
    %v55 = vld [vmem:[%s1 + $0x28] sm:$0xff]
    %v56 = vld [vmem:[%s1 + $0x30] sm:$0xff]
    %v57 = vld [vmem:[%s1 + $0x38] sm:$0xff]
    %v58 = vld [vmem:[%s1 + $0x40] sm:$0xff]
    %v59 = vld [vmem:[%s1 + $0x48] sm:$0xff]
    %v60 = vld [vmem:[%s1 + $0x50] sm:$0xff]
    %v61 = vld [vmem:[%s1 + $0x58] sm:$0xff]
    %v62 = vld [vmem:[%s1 + $0x60] sm:$0xff]
    %v63 = vld [vmem:[%s1 + $0x68] sm:$0xff]
    %v64 = vld [vmem:[%s1 + $0x70] sm:$0xff]
    %v65 = vld [vmem:[%s1 + $0x78] sm:$0xff]
    %66 = vmatprep.subr.mxu0 0.0
    %67 = vmatpush1.msra.mxu0 %v50
    %68 = vmatprep.subr.mxu0 0.0
    %69 = vmatpush1.msra.mxu0 %v51
    %70 = vmatprep.subr.mxu0 0.0
    %71 = vmatpush1.msra.mxu0 %v52
    %72 = vmatprep.subr.mxu0 0.0
    %73 = vmatpush1.msra.mxu0 %v53
    %74 = vmatprep.subr.mxu0 0.0
    %75 = vmatpush1.msra.mxu0 %v54
    %76 = vmatprep.subr.mxu0 0.0
    %77 = vmatpush1.msra.mxu0 %v55
    %78 = vmatprep.subr.mxu0 0.0
    %79 = vmatpush1.msra.mxu0 %v56
    %80 = vmatprep.subr.mxu0 0.0
    %81 = vmatpush1.msra.mxu0 %v57
    %82 = vmatprep.subr.mxu0 0.0
    %83 = vmatpush1.msra.mxu0 %v58
    %84 = vmatprep.subr.mxu0 0.0
    %85 = vmatpush1.msra.mxu0 %v59
    %86 = vmatprep.subr.mxu0 0.0
    %87 = vmatpush1.msra.mxu0 %v60
    %88 = vmatprep.subr.mxu0 0.0
    %89 = vmatpush1.msra.mxu0 %v61
    %90 = vmatprep.subr.mxu0 0.0
    %91 = vmatpush1.msra.mxu0 %v62
    %92 = vmatprep.subr.mxu0 0.0
    %93 = vmatpush1.msra.mxu0 %v63
    %94 = vmatprep.subr.mxu0 0.0
    %95 = vmatpush1.msra.mxu0 %v64
    %96 = vmatprep.subr.mxu0 0.0
    %97 = vmatpush1.msra.mxu0 %v65
    %98 = vmatprep.subr.mxu0 0.0
    %99 = vmatpush1.msra.mxu0 0.0
    %100 = vmatprep.subr.mxu0 0.0
    %101 = vmatpush1.msra.mxu0 0.0
    %102 = vmatprep.subr.mxu0 0.0
    %103 = vmatpush1.msra.mxu0 0.0
    %104 = vmatprep.subr.mxu0 0.0
    %105 = vmatpush1.msra.mxu0 0.0
    %106 = vmatprep.subr.mxu0 0.0
    %107 = vmatpush1.msra.mxu0 0.0
    %108 = vmatprep.subr.mxu0 0.0
    %109 = vmatpush1.msra.mxu0 0.0
    %110 = vmatprep.subr.mxu0 0.0
    %111 = vmatpush1.msra.mxu0 0.0
    %112 = vmatprep.subr.mxu0 0.0
    %113 = vmatpush1.msra.mxu0 0.0
    %114 = vmatprep.subr.mxu0 0.0
    %115 = vmatpush1.msra.mxu0 0.0
    %116 = vmatprep.subr.mxu0 0.0
    %117 = vmatpush1.msra.mxu0 0.0
    %118 = vmatprep.subr.mxu0 0.0
    %119 = vmatpush1.msra.mxu0 0.0
    %120 = vmatprep.subr.mxu0 0.0
    %121 = vmatpush1.msra.mxu0 0.0
    %122 = vmatprep.subr.mxu0 0.0
    %123 = vmatpush1.msra.mxu0 0.0
    %124 = vmatprep.subr.mxu0 0.0
    %125 = vmatpush1.msra.mxu0 0.0
    %126 = vmatprep.subr.mxu0 0.0
    %127 = vmatpush1.msra.mxu0 0.0
    %128 = vmatprep.subr.mxu0 0.0
    %129 = vmatpush1.msra.mxu0 0.0
    %130 = vmatprep.mubr.f32.mxu0 0.0
    %131 = vmatmul.mubr.f32.gmra.mrb[0].mxu0 %v42
    %v132 = vpop.f32.mrb[0].mxu0
    %v133 = vadd.f32 0.0, %v132
    %v134 = vpop.f32.mrb[0].mxu0
    %135 = vmatprep.mubr.f32.mxu0 0.0
    %136 = vmatmul.mubr.f32.gmra.mrb[0].mxu0 %v43
    %v137 = vpop.f32.mrb[0].mxu0
    %v138 = vadd.f32 0.0, %v137
    %v139 = vpop.f32.mrb[0].mxu0
    %140 = vmatprep.mubr.f32.mxu0 0.0
    %141 = vmatmul.mubr.f32.gmra.mrb[0].mxu0 %v44
    %v142 = vpop.f32.mrb[0].mxu0
    %v143 = vadd.f32 0.0, %v142
    %v144 = vpop.f32.mrb[0].mxu0
    %145 = vmatprep.mubr.f32.mxu0 0.0
    %146 = vmatmul.mubr.f32.gmra.mrb[0].mxu0 %v45
    %v147 = vpop.f32.mrb[0].mxu0
    %v148 = vadd.f32 0.0, %v147
    %v149 = vpop.f32.mrb[0].mxu0
    %150 = vmatprep.mubr.f32.mxu0 0.0
    %151 = vmatmul.mubr.f32.gmra.mrb[0].mxu0 %v46
    %v152 = vpop.f32.mrb[0].mxu0
    %v153 = vadd.f32 0.0, %v152
    %v154 = vpop.f32.mrb[0].mxu0
    %155 = vmatprep.mubr.f32.mxu0 0.0
    %156 = vmatmul.mubr.f32.gmra.mrb[0].mxu0 %v47
    %v157 = vpop.f32.mrb[0].mxu0
    %v158 = vadd.f32 0.0, %v157
    %v159 = vpop.f32.mrb[0].mxu0
    %160 = vmatprep.mubr.f32.mxu0 0.0
    %161 = vmatmul.mubr.f32.gmra.mrb[0].mxu0 %v48
    %v162 = vpop.f32.mrb[0].mxu0
    %v163 = vadd.f32 0.0, %v162
    %v164 = vpop.f32.mrb[0].mxu0
    %165 = vmatprep.mubr.f32.mxu0 0.0
    %166 = vmatmul.mubr.f32.gmra.mrb[0].mxu0 %v49
    %v167 = vpop.f32.mrb[0].mxu0
    %v168 = vadd.f32 0.0, %v167
    %v169 = vpop.f32.mrb[0].mxu0
    %170 = vdwg.mxu0
    %v171 = vld [vmem:[%s2] sm:$0xff]
    %v172 = vld [vmem:[%s2 + $0x8] sm:$0xff]
    %v173 = vld [vmem:[%s2 + $0x10] sm:$0xff]
    %v174 = vld [vmem:[%s2 + $0x18] sm:$0xff]
    %v175 = vld [vmem:[%s2 + $0x20] sm:$0xff]
    %v176 = vld [vmem:[%s2 + $0x28] sm:$0xff]
    %v177 = vld [vmem:[%s2 + $0x30] sm:$0xff]
    %v178 = vld [vmem:[%s2 + $0x38] sm:$0xff]
    %v179 = vld [vmem:[%s2 + $0x40] sm:$0xff]
    %v180 = vld [vmem:[%s2 + $0x48] sm:$0xff]
    %v181 = vld [vmem:[%s2 + $0x50] sm:$0xff]
    %v182 = vld [vmem:[%s2 + $0x58] sm:$0xff]
    %v183 = vld [vmem:[%s2 + $0x60] sm:$0xff]
    %v184 = vld [vmem:[%s2 + $0x68] sm:$0xff]
    %v185 = vld [vmem:[%s2 + $0x70] sm:$0xff]
    %v186 = vld [vmem:[%s2 + $0x78] sm:$0xff]
    %v187 = vld [vmem:[%s2 + $0x80] sm:$0xff]
    %v188 = vld [vmem:[%s2 + $0x88] sm:$0xff]
    %v189 = vld [vmem:[%s2 + $0x90] sm:$0xff]
    %v190 = vld [vmem:[%s2 + $0x98] sm:$0xff]
    %v191 = vld [vmem:[%s2 + $0xa0] sm:$0xff]
    %v192 = vld [vmem:[%s2 + $0xa8] sm:$0xff]
    %v193 = vld [vmem:[%s2 + $0xb0] sm:$0xff]
    %v194 = vld [vmem:[%s2 + $0xb8] sm:$0xff]
    %v195 = vld [vmem:[%s2 + $0xc0] sm:$0xff]
    %v196 = vld [vmem:[%s2 + $0xc8] sm:$0xff]
    %v197 = vld [vmem:[%s2 + $0xd0] sm:$0xff]
    %v198 = vld [vmem:[%s2 + $0xd8] sm:$0xff]
    %v199 = vld [vmem:[%s2 + $0xe0] sm:$0xff]
    %v200 = vld [vmem:[%s2 + $0xe8] sm:$0xff]
    %v201 = vld [vmem:[%s2 + $0xf0] sm:$0xff]
    %v202 = vld [vmem:[%s2 + $0xf8] sm:$0xff]
    %203 = vmatprep.subr.mxu0 %v172
    %204 = vmatpush1.msra.mxu0 %v171
    %205 = vmatprep.subr.mxu0 %v174
    %206 = vmatpush1.msra.mxu0 %v173
    %207 = vmatprep.subr.mxu0 %v176
    %208 = vmatpush1.msra.mxu0 %v175
    %209 = vmatprep.subr.mxu0 %v178
    %210 = vmatpush1.msra.mxu0 %v177
    %211 = vmatprep.subr.mxu0 %v180
    %212 = vmatpush1.msra.mxu0 %v179
    %213 = vmatprep.subr.mxu0 %v182
    %214 = vmatpush1.msra.mxu0 %v181
    %215 = vmatprep.subr.mxu0 %v184
    %216 = vmatpush1.msra.mxu0 %v183
    %217 = vmatprep.subr.mxu0 %v186
    %218 = vmatpush1.msra.mxu0 %v185
    %219 = vmatprep.subr.mxu0 %v188
    %220 = vmatpush1.msra.mxu0 %v187
    %221 = vmatprep.subr.mxu0 %v190
    %222 = vmatpush1.msra.mxu0 %v189
    %223 = vmatprep.subr.mxu0 %v192
    %224 = vmatpush1.msra.mxu0 %v191
    %225 = vmatprep.subr.mxu0 %v194
    %226 = vmatpush1.msra.mxu0 %v193
    %227 = vmatprep.subr.mxu0 %v196
    %228 = vmatpush1.msra.mxu0 %v195
    %229 = vmatprep.subr.mxu0 %v198
    %230 = vmatpush1.msra.mxu0 %v197
    %231 = vmatprep.subr.mxu0 %v200
    %232 = vmatpush1.msra.mxu0 %v199
    %233 = vmatprep.subr.mxu0 %v202
    %234 = vmatpush1.msra.mxu0 %v201
    %235 = vmatprep.subr.mxu0 0.0
    %236 = vmatpush1.msra.mxu0 0.0
    %237 = vmatprep.subr.mxu0 0.0
    %238 = vmatpush1.msra.mxu0 0.0
    %239 = vmatprep.subr.mxu0 0.0
    %240 = vmatpush1.msra.mxu0 0.0
    %241 = vmatprep.subr.mxu0 0.0
    %242 = vmatpush1.msra.mxu0 0.0
    %243 = vmatprep.subr.mxu0 0.0
    %244 = vmatpush1.msra.mxu0 0.0
    %245 = vmatprep.subr.mxu0 0.0
    %246 = vmatpush1.msra.mxu0 0.0
    %247 = vmatprep.subr.mxu0 0.0
    %248 = vmatpush1.msra.mxu0 0.0
    %249 = vmatprep.subr.mxu0 0.0
    %250 = vmatpush1.msra.mxu0 0.0
    %251 = vmatprep.subr.mxu0 0.0
    %252 = vmatpush1.msra.mxu0 0.0
    %253 = vmatprep.subr.mxu0 0.0
    %254 = vmatpush1.msra.mxu0 0.0
    %255 = vmatprep.subr.mxu0 0.0
    %256 = vmatpush1.msra.mxu0 0.0
    %257 = vmatprep.subr.mxu0 0.0
    %258 = vmatpush1.msra.mxu0 0.0
    %259 = vmatprep.subr.mxu0 0.0
    %260 = vmatpush1.msra.mxu0 0.0
    %261 = vmatprep.subr.mxu0 0.0
    %262 = vmatpush1.msra.mxu0 0.0
    %263 = vmatprep.subr.mxu0 0.0
    %264 = vmatpush1.msra.mxu0 0.0
    %265 = vmatprep.subr.mxu0 0.0
    %266 = vmatpush1.msra.mxu0 0.0
    %267 = vmatprep.mubr.f32.mxu0 0.0
    %268 = vmatmul.mubr.f32.gmra.mrb[0].mxu0 %v133
    %v269 = vpop.f32.mrb[0].mxu0
    %v270 = vadd.f32 0.0, %v269
    %v271 = vpop.f32.mrb[0].mxu0
    %v272 = vadd.f32 0.0, %v271
    %273 = vmatprep.mubr.f32.mxu0 0.0
    %274 = vmatmul.mubr.f32.gmra.mrb[0].mxu0 %v138
    %v275 = vpop.f32.mrb[0].mxu0
    %v276 = vadd.f32 0.0, %v275
    %v277 = vpop.f32.mrb[0].mxu0
    %v278 = vadd.f32 0.0, %v277
    %279 = vmatprep.mubr.f32.mxu0 0.0
    %280 = vmatmul.mubr.f32.gmra.mrb[0].mxu0 %v143
    %v281 = vpop.f32.mrb[0].mxu0
    %v282 = vadd.f32 0.0, %v281
    %v283 = vpop.f32.mrb[0].mxu0
    %v284 = vadd.f32 0.0, %v283
    %285 = vmatprep.mubr.f32.mxu0 0.0
    %286 = vmatmul.mubr.f32.gmra.mrb[0].mxu0 %v148
    %v287 = vpop.f32.mrb[0].mxu0
    %v288 = vadd.f32 0.0, %v287
    %v289 = vpop.f32.mrb[0].mxu0
    %v290 = vadd.f32 0.0, %v289
    %291 = vmatprep.mubr.f32.mxu0 0.0
    %292 = vmatmul.mubr.f32.gmra.mrb[0].mxu0 %v153
    %v293 = vpop.f32.mrb[0].mxu0
    %v294 = vadd.f32 0.0, %v293
    %v295 = vpop.f32.mrb[0].mxu0
    %v296 = vadd.f32 0.0, %v295
    %297 = vmatprep.mubr.f32.mxu0 0.0
    %298 = vmatmul.mubr.f32.gmra.mrb[0].mxu0 %v158
    %v299 = vpop.f32.mrb[0].mxu0
    %v300 = vadd.f32 0.0, %v299
    %v301 = vpop.f32.mrb[0].mxu0
    %v302 = vadd.f32 0.0, %v301
    %303 = vmatprep.mubr.f32.mxu0 0.0
    %304 = vmatmul.mubr.f32.gmra.mrb[0].mxu0 %v163
    %v305 = vpop.f32.mrb[0].mxu0
    %v306 = vadd.f32 0.0, %v305
    %v307 = vpop.f32.mrb[0].mxu0
    %v308 = vadd.f32 0.0, %v307
    %309 = vmatprep.mubr.f32.mxu0 0.0
    %310 = vmatmul.mubr.f32.gmra.mrb[0].mxu0 %v168
    %v311 = vpop.f32.mrb[0].mxu0
    %v312 = vadd.f32 0.0, %v311
    %v313 = vpop.f32.mrb[0].mxu0
    %v314 = vadd.f32 0.0, %v313
    %315 = vdwg.mxu0
    %v316 = vmul.f32 %v171, %v171
    %v317 = vmul.f32 %v172, %v172
    %v318 = vmul.f32 %v173, %v173
    %v319 = vmul.f32 %v174, %v174
    %v320 = vmul.f32 %v175, %v175
    %v321 = vmul.f32 %v176, %v176
    %v322 = vmul.f32 %v177, %v177
    %v323 = vmul.f32 %v178, %v178
    %v324 = vmul.f32 %v179, %v179
    %v325 = vmul.f32 %v180, %v180
    %v326 = vmul.f32 %v181, %v181
    %v327 = vmul.f32 %v182, %v182
    %v328 = vmul.f32 %v183, %v183
    %v329 = vmul.f32 %v184, %v184
    %v330 = vmul.f32 %v185, %v185
    %v331 = vmul.f32 %v186, %v186
    %v332 = vmul.f32 %v187, %v187
    %v333 = vmul.f32 %v188, %v188
    %v334 = vmul.f32 %v189, %v189
    %v335 = vmul.f32 %v190, %v190
    %v336 = vmul.f32 %v191, %v191
    %v337 = vmul.f32 %v192, %v192
    %v338 = vmul.f32 %v193, %v193
    %v339 = vmul.f32 %v194, %v194
    %v340 = vmul.f32 %v195, %v195
    %v341 = vmul.f32 %v196, %v196
    %v342 = vmul.f32 %v197, %v197
    %v343 = vmul.f32 %v198, %v198
    %v344 = vmul.f32 %v199, %v199
    %v345 = vmul.f32 %v200, %v200
    %v346 = vmul.f32 %v201, %v201
    %v347 = vmul.f32 %v202, %v202
    %v348 = vadd.f32 %v316, %v318
    %v349 = vadd.f32 %v348, %v320
    %v350 = vadd.f32 %v349, %v322
    %v351 = vadd.f32 %v350, %v324
    %v352 = vadd.f32 %v351, %v326
    %v353 = vadd.f32 %v352, %v328
    %v354 = vadd.f32 %v353, %v330
    %v355 = vadd.f32 %v354, %v332
    %v356 = vadd.f32 %v355, %v334
    %v357 = vadd.f32 %v356, %v336
    %v358 = vadd.f32 %v357, %v338
    %v359 = vadd.f32 %v358, %v340
    %v360 = vadd.f32 %v359, %v342
    %v361 = vadd.f32 %v360, %v344
    %v362 = vadd.f32 %v361, %v346
    %v363 = vrot.slane %v362, 4
    %v364 = vadd.f32 %v362, %v363
    %v365 = vrot.slane %v364, 2
    %v366 = vadd.f32 %v364, %v365
    %v367 = vrot.slane %v366, 1
    %v368 = vadd.f32 %v366, %v367
    %v369 = vadd.f32 %v317, %v319
    %v370 = vadd.f32 %v369, %v321
    %v371 = vadd.f32 %v370, %v323
    %v372 = vadd.f32 %v371, %v325
    %v373 = vadd.f32 %v372, %v327
    %v374 = vadd.f32 %v373, %v329
    %v375 = vadd.f32 %v374, %v331
    %v376 = vadd.f32 %v375, %v333
    %v377 = vadd.f32 %v376, %v335
    %v378 = vadd.f32 %v377, %v337
    %v379 = vadd.f32 %v378, %v339
    %v380 = vadd.f32 %v379, %v341
    %v381 = vadd.f32 %v380, %v343
    %v382 = vadd.f32 %v381, %v345
    %v383 = vadd.f32 %v382, %v347
    %v384 = vrot.slane %v383, 4
    %v385 = vadd.f32 %v383, %v384
    %v386 = vrot.slane %v385, 2
    %v387 = vadd.f32 %v385, %v386
    %v388 = vrot.slane %v387, 1
    %v389 = vadd.f32 %v387, %v388
    %v390 = vmul.f32 %v270, 2.0
    %v391 = vmul.f32 %v272, 2.0
    %v392 = vmul.f32 %v276, 2.0
    %v393 = vmul.f32 %v278, 2.0
    %v394 = vmul.f32 %v282, 2.0
    %v395 = vmul.f32 %v284, 2.0
    %v396 = vmul.f32 %v288, 2.0
    %v397 = vmul.f32 %v290, 2.0
    %v398 = vmul.f32 %v294, 2.0
    %v399 = vmul.f32 %v296, 2.0
    %v400 = vmul.f32 %v300, 2.0
    %v401 = vmul.f32 %v302, 2.0
    %v402 = vmul.f32 %v306, 2.0
    %v403 = vmul.f32 %v308, 2.0
    %v404 = vmul.f32 %v312, 2.0
    %v405 = vmul.f32 %v314, 2.0
    %v406 = vsub.f32 %v368, %v390
    %v407 = vsub.f32 %v389, %v391
    %v408 = vsub.f32 %v368, %v392
    %v409 = vsub.f32 %v389, %v393
    %v410 = vsub.f32 %v368, %v394
    %v411 = vsub.f32 %v389, %v395
    %v412 = vsub.f32 %v368, %v396
    %v413 = vsub.f32 %v389, %v397
    %v414 = vsub.f32 %v368, %v398
    %v415 = vsub.f32 %v389, %v399
    %v416 = vsub.f32 %v368, %v400
    %v417 = vsub.f32 %v389, %v401
    %v418 = vsub.f32 %v368, %v402
    %v419 = vsub.f32 %v389, %v403
    %v420 = vsub.f32 %v368, %v404
    %v421 = vsub.f32 %v389, %v405
    %v422 = vmin.f32 %v406, %v407
    %423 = vmin.xlane.f32.xlu0 %v422
    %v424 = vpop.xlane.xlu0 %423
    %v425 = vmin.f32 %v408, %v409
    %426 = vmin.xlane.f32.xlu0 %v425
    %v427 = vpop.xlane.xlu0 %426
    %v428 = vmin.f32 %v410, %v411
    %429 = vmin.xlane.f32.xlu0 %v428
    %v430 = vpop.xlane.xlu0 %429
    %v431 = vmin.f32 %v412, %v413
    %432 = vmin.xlane.f32.xlu0 %v431
    %v433 = vpop.xlane.xlu0 %432
    %v434 = vmin.f32 %v414, %v415
    %435 = vmin.xlane.f32.xlu0 %v434
    %v436 = vpop.xlane.xlu0 %435
    %v437 = vmin.f32 %v416, %v417
    %438 = vmin.xlane.f32.xlu0 %v437
    %v439 = vpop.xlane.xlu0 %438
    %v440 = vmin.f32 %v418, %v419
    %441 = vmin.xlane.f32.xlu0 %v440
    %v442 = vpop.xlane.xlu0 %441
    %v443 = vmin.f32 %v420, %v421
    %444 = vmin.xlane.f32.xlu0 %v443
    %v445 = vpop.xlane.xlu0 %444
    %v446 = vlaneseq
    %v447 = vand.u32 %v446, 127
    %v448 = vadd.s32 %v447, 128
    %vm449 = vcmp.le.f32.partialorder %v406, %v424
    %vm450 = vcmp.le.f32.partialorder %v407, %v424
    %vm451 = vcmp.le.f32.partialorder %v408, %v427
    %vm452 = vcmp.le.f32.partialorder %v409, %v427
    %vm453 = vcmp.le.f32.partialorder %v410, %v430
    %vm454 = vcmp.le.f32.partialorder %v411, %v430
    %vm455 = vcmp.le.f32.partialorder %v412, %v433
    %vm456 = vcmp.le.f32.partialorder %v413, %v433
    %vm457 = vcmp.le.f32.partialorder %v414, %v436
    %vm458 = vcmp.le.f32.partialorder %v415, %v436
    %vm459 = vcmp.le.f32.partialorder %v416, %v439
    %vm460 = vcmp.le.f32.partialorder %v417, %v439
    %vm461 = vcmp.le.f32.partialorder %v418, %v442
    %vm462 = vcmp.le.f32.partialorder %v419, %v442
    %vm463 = vcmp.le.f32.partialorder %v420, %v445
    %vm464 = vcmp.le.f32.partialorder %v421, %v445
    %v465 = vsel %vm449, %v447, 256
    %v466 = vsel %vm450, %v448, 256
    %v467 = vsel %vm451, %v447, 256
    %v468 = vsel %vm452, %v448, 256
    %v469 = vsel %vm453, %v447, 256
    %v470 = vsel %vm454, %v448, 256
    %v471 = vsel %vm455, %v447, 256
    %v472 = vsel %vm456, %v448, 256
    %v473 = vsel %vm457, %v447, 256
    %v474 = vsel %vm458, %v448, 256
    %v475 = vsel %vm459, %v447, 256
    %v476 = vsel %vm460, %v448, 256
    %v477 = vsel %vm461, %v447, 256
    %v478 = vsel %vm462, %v448, 256
    %v479 = vsel %vm463, %v447, 256
    %v480 = vsel %vm464, %v448, 256
    %vm481 = vcmp.lt.s32.totalorder %v465, %v466
    %v482 = vsel %vm481, %v465, %v466
    %v483 = vand.u32 %v482, 65535
    %v484 = vshra.s32 %v482, 16
    %v485 = vcvt.s32.f32 %v483
    %v486 = vcvt.s32.f32 %v484
    %487 = vmin.xlane.f32.xlu0 %v486
    %v488 = vpop.xlane.xlu0 %487
    %vm489 = vcmp.eq.f32.partialorder %v486, %v488
    %v490 = vsel %vm489, %v485, inf
    %491 = vmin.xlane.f32.xlu0 %v490
    %v492 = vpop.xlane.xlu0 %491
    %v493 = vcvt.f32.s32 %v492
    %v494 = vcvt.f32.s32 %v488
    %v495 = vshll.u32 %v494, 16
    %v496 = vadd.s32 %v495, %v493
    %vm497 = vcmp.lt.s32.totalorder %v467, %v468
    %v498 = vsel %vm497, %v467, %v468
    %v499 = vand.u32 %v498, 65535
    %v500 = vshra.s32 %v498, 16
    %v501 = vcvt.s32.f32 %v499
    %v502 = vcvt.s32.f32 %v500
    %503 = vmin.xlane.f32.xlu0 %v502
    %v504 = vpop.xlane.xlu0 %503
    %vm505 = vcmp.eq.f32.partialorder %v502, %v504
    %v506 = vsel %vm505, %v501, inf
    %507 = vmin.xlane.f32.xlu0 %v506
    %v508 = vpop.xlane.xlu0 %507
    %v509 = vcvt.f32.s32 %v508
    %v510 = vcvt.f32.s32 %v504
    %v511 = vshll.u32 %v510, 16
    %v512 = vadd.s32 %v511, %v509
    %vm513 = vcmp.lt.s32.totalorder %v469, %v470
    %v514 = vsel %vm513, %v469, %v470
    %v515 = vand.u32 %v514, 65535
    %v516 = vshra.s32 %v514, 16
    %v517 = vcvt.s32.f32 %v515
    %v518 = vcvt.s32.f32 %v516
    %519 = vmin.xlane.f32.xlu0 %v518
    %v520 = vpop.xlane.xlu0 %519
    %vm521 = vcmp.eq.f32.partialorder %v518, %v520
    %v522 = vsel %vm521, %v517, inf
    %523 = vmin.xlane.f32.xlu0 %v522
    %v524 = vpop.xlane.xlu0 %523
    %v525 = vcvt.f32.s32 %v524
    %v526 = vcvt.f32.s32 %v520
    %v527 = vshll.u32 %v526, 16
    %v528 = vadd.s32 %v527, %v525
    %vm529 = vcmp.lt.s32.totalorder %v471, %v472
    %v530 = vsel %vm529, %v471, %v472
    %v531 = vand.u32 %v530, 65535
    %v532 = vshra.s32 %v530, 16
    %v533 = vcvt.s32.f32 %v531
    %v534 = vcvt.s32.f32 %v532
    %535 = vmin.xlane.f32.xlu0 %v534
    %v536 = vpop.xlane.xlu0 %535
    %vm537 = vcmp.eq.f32.partialorder %v534, %v536
    %v538 = vsel %vm537, %v533, inf
    %539 = vmin.xlane.f32.xlu0 %v538
    %v540 = vpop.xlane.xlu0 %539
    %v541 = vcvt.f32.s32 %v540
    %v542 = vcvt.f32.s32 %v536
    %v543 = vshll.u32 %v542, 16
    %v544 = vadd.s32 %v543, %v541
    %vm545 = vcmp.lt.s32.totalorder %v473, %v474
    %v546 = vsel %vm545, %v473, %v474
    %v547 = vand.u32 %v546, 65535
    %v548 = vshra.s32 %v546, 16
    %v549 = vcvt.s32.f32 %v547
    %v550 = vcvt.s32.f32 %v548
    %551 = vmin.xlane.f32.xlu0 %v550
    %v552 = vpop.xlane.xlu0 %551
    %vm553 = vcmp.eq.f32.partialorder %v550, %v552
    %v554 = vsel %vm553, %v549, inf
    %555 = vmin.xlane.f32.xlu0 %v554
    %v556 = vpop.xlane.xlu0 %555
    %v557 = vcvt.f32.s32 %v556
    %v558 = vcvt.f32.s32 %v552
    %v559 = vshll.u32 %v558, 16
    %v560 = vadd.s32 %v559, %v557
    %vm561 = vcmp.lt.s32.totalorder %v475, %v476
    %v562 = vsel %vm561, %v475, %v476
    %v563 = vand.u32 %v562, 65535
    %v564 = vshra.s32 %v562, 16
    %v565 = vcvt.s32.f32 %v563
    %v566 = vcvt.s32.f32 %v564
    %567 = vmin.xlane.f32.xlu0 %v566
    %v568 = vpop.xlane.xlu0 %567
    %vm569 = vcmp.eq.f32.partialorder %v566, %v568
    %v570 = vsel %vm569, %v565, inf
    %571 = vmin.xlane.f32.xlu0 %v570
    %v572 = vpop.xlane.xlu0 %571
    %v573 = vcvt.f32.s32 %v572
    %v574 = vcvt.f32.s32 %v568
    %v575 = vshll.u32 %v574, 16
    %v576 = vadd.s32 %v575, %v573
    %vm577 = vcmp.lt.s32.totalorder %v477, %v478
    %v578 = vsel %vm577, %v477, %v478
    %v579 = vand.u32 %v578, 65535
    %v580 = vshra.s32 %v578, 16
    %v581 = vcvt.s32.f32 %v579
    %v582 = vcvt.s32.f32 %v580
    %583 = vmin.xlane.f32.xlu0 %v582
    %v584 = vpop.xlane.xlu0 %583
    %vm585 = vcmp.eq.f32.partialorder %v582, %v584
    %v586 = vsel %vm585, %v581, inf
    %587 = vmin.xlane.f32.xlu0 %v586
    %v588 = vpop.xlane.xlu0 %587
    %v589 = vcvt.f32.s32 %v588
    %v590 = vcvt.f32.s32 %v584
    %v591 = vshll.u32 %v590, 16
    %v592 = vadd.s32 %v591, %v589
    %vm593 = vcmp.lt.s32.totalorder %v479, %v480
    %v594 = vsel %vm593, %v479, %v480
    %v595 = vand.u32 %v594, 65535
    %v596 = vshra.s32 %v594, 16
    %v597 = vcvt.s32.f32 %v595
    %v598 = vcvt.s32.f32 %v596
    %599 = vmin.xlane.f32.xlu0 %v598
    %v600 = vpop.xlane.xlu0 %599
    %vm601 = vcmp.eq.f32.partialorder %v598, %v600
    %v602 = vsel %vm601, %v597, inf
    %603 = vmin.xlane.f32.xlu0 %v602
    %v604 = vpop.xlane.xlu0 %603
    %v605 = vcvt.f32.s32 %v604
    %v606 = vcvt.f32.s32 %v600
    %v607 = vshll.u32 %v606, 16
    %v608 = vadd.s32 %v607, %v605
    %vm609 = vcmp.eq.s32.totalorder %v447, %v496
    %vm610 = vcmp.eq.s32.totalorder %v448, %v496
    %vm611 = vcmp.eq.s32.totalorder %v447, %v512
    %vm612 = vcmp.eq.s32.totalorder %v448, %v512
    %vm613 = vcmp.eq.s32.totalorder %v447, %v528
    %vm614 = vcmp.eq.s32.totalorder %v448, %v528
    %vm615 = vcmp.eq.s32.totalorder %v447, %v544
    %vm616 = vcmp.eq.s32.totalorder %v448, %v544
    %vm617 = vcmp.eq.s32.totalorder %v447, %v560
    %vm618 = vcmp.eq.s32.totalorder %v448, %v560
    %vm619 = vcmp.eq.s32.totalorder %v447, %v576
    %vm620 = vcmp.eq.s32.totalorder %v448, %v576
    %vm621 = vcmp.eq.s32.totalorder %v447, %v592
    %vm622 = vcmp.eq.s32.totalorder %v448, %v592
    %vm623 = vcmp.eq.s32.totalorder %v447, %v608
    %vm624 = vcmp.eq.s32.totalorder %v448, %v608
    %v625 = vsel %vm609, 1, 0
    %v626 = vsel %vm610, 1, 0
    %v627 = vsel %vm611, 1, 0
    %v628 = vsel %vm612, 1, 0
    %v629 = vsel %vm613, 1, 0
    %v630 = vsel %vm614, 1, 0
    %v631 = vsel %vm615, 1, 0
    %v632 = vsel %vm616, 1, 0
    %v633 = vsel %vm617, 1, 0
    %v634 = vsel %vm618, 1, 0
    %v635 = vsel %vm619, 1, 0
    %v636 = vsel %vm620, 1, 0
    %v637 = vsel %vm621, 1, 0
    %v638 = vsel %vm622, 1, 0
    %v639 = vsel %vm623, 1, 0
    %v640 = vsel %vm624, 1, 0
    %v641 = vcvt.s32.f32 %v625
    %v642 = vcvt.s32.f32 %v626
    %v643 = vcvt.s32.f32 %v627
    %v644 = vcvt.s32.f32 %v628
    %v645 = vcvt.s32.f32 %v629
    %v646 = vcvt.s32.f32 %v630
    %v647 = vcvt.s32.f32 %v631
    %v648 = vcvt.s32.f32 %v632
    %v649 = vcvt.s32.f32 %v633
    %v650 = vcvt.s32.f32 %v634
    %v651 = vcvt.s32.f32 %v635
    %v652 = vcvt.s32.f32 %v636
    %v653 = vcvt.s32.f32 %v637
    %v654 = vcvt.s32.f32 %v638
    %v655 = vcvt.s32.f32 %v639
    %v656 = vcvt.s32.f32 %v640
    %v657 = vpack.c.bf16 %v643, %v641
    %v658 = vpack.c.bf16 %v644, %v642
    %v659 = vpack.c.bf16 %v647, %v645
    %v660 = vpack.c.bf16 %v648, %v646
    %v661 = vpack.c.bf16 %v651, %v649
    %v662 = vpack.c.bf16 %v652, %v650
    %v663 = vpack.c.bf16 %v655, %v653
    %v664 = vpack.c.bf16 %v656, %v654
    %v665 = vld [vmem:[%s3] sm:$0xf]
    %v666 = vld [vmem:[%s3 + $0x4] sm:$0xf]
    %v667 = vld [vmem:[%s3 + $0x8] sm:$0xf]
    %v668 = vld [vmem:[%s3 + $0xc] sm:$0xf]
    %v669 = vld [vmem:[%s3 + $0x10] sm:$0xf]
    %v670 = vld [vmem:[%s3 + $0x14] sm:$0xf]
    %v671 = vld [vmem:[%s3 + $0x18] sm:$0xf]
    %v672 = vld [vmem:[%s3 + $0x1c] sm:$0xf]
    %v673 = vld [vmem:[%s3 + $0x20] sm:$0xf]
    %v674 = vld [vmem:[%s3 + $0x24] sm:$0xf]
    %v675 = vld [vmem:[%s3 + $0x28] sm:$0xf]
    %v676 = vld [vmem:[%s3 + $0x2c] sm:$0xf]
    %v677 = vld [vmem:[%s3 + $0x30] sm:$0xf]
    %v678 = vld [vmem:[%s3 + $0x34] sm:$0xf]
    %v679 = vld [vmem:[%s3 + $0x38] sm:$0xf]
    %v680 = vld [vmem:[%s3 + $0x3c] sm:$0xf]
    %v681 = vld [vmem:[%s3 + $0x40] sm:$0xf]
    %v682 = vld [vmem:[%s3 + $0x44] sm:$0xf]
    %v683 = vld [vmem:[%s3 + $0x48] sm:$0xf]
    %v684 = vld [vmem:[%s3 + $0x4c] sm:$0xf]
    %v685 = vld [vmem:[%s3 + $0x50] sm:$0xf]
    %v686 = vld [vmem:[%s3 + $0x54] sm:$0xf]
    %v687 = vld [vmem:[%s3 + $0x58] sm:$0xf]
    %v688 = vld [vmem:[%s3 + $0x5c] sm:$0xf]
    %v689 = vld [vmem:[%s3 + $0x60] sm:$0xf]
    %v690 = vld [vmem:[%s3 + $0x64] sm:$0xf]
    %v691 = vld [vmem:[%s3 + $0x68] sm:$0xf]
    %v692 = vld [vmem:[%s3 + $0x6c] sm:$0xf]
    %v693 = vld [vmem:[%s3 + $0x70] sm:$0xf]
    %v694 = vld [vmem:[%s3 + $0x74] sm:$0xf]
    %v695 = vld [vmem:[%s3 + $0x78] sm:$0xf]
    %v696 = vld [vmem:[%s3 + $0x7c] sm:$0xf]
    %v697 = vld [vmem:[%s4] sm:$0xff]
    %v698 = vld [vmem:[%s4 + $0x8] sm:$0xff]
    %v699 = vld [vmem:[%s4 + $0x10] sm:$0xff]
    %v700 = vld [vmem:[%s4 + $0x18] sm:$0xff]
    %v701 = vld [vmem:[%s4 + $0x20] sm:$0xff]
    %v702 = vld [vmem:[%s4 + $0x28] sm:$0xff]
    %v703 = vld [vmem:[%s4 + $0x30] sm:$0xff]
    %v704 = vld [vmem:[%s4 + $0x38] sm:$0xff]
    %v737 = vunpack.c.l.b16 %v665
    %v738 = vunpack.c.l.b16 %v666
    %v739 = vunpack.c.l.b16 %v667
    %v740 = vunpack.c.l.b16 %v668
    %v741 = vunpack.c.l.b16 %v669
    %v742 = vunpack.c.l.b16 %v670
    %v743 = vunpack.c.l.b16 %v671
    %v744 = vunpack.c.l.b16 %v672
    %v745 = vunpack.c.l.b16 %v673
    %v746 = vunpack.c.l.b16 %v674
    %v747 = vunpack.c.l.b16 %v675
    %v748 = vunpack.c.l.b16 %v676
    %v749 = vunpack.c.l.b16 %v677
    %v750 = vunpack.c.l.b16 %v678
    %v751 = vunpack.c.l.b16 %v679
    %v752 = vunpack.c.l.b16 %v680
    %v753 = vunpack.c.l.b16 %v681
    %v754 = vunpack.c.l.b16 %v682
    %v755 = vunpack.c.l.b16 %v683
    %v756 = vunpack.c.l.b16 %v684
    %v757 = vunpack.c.l.b16 %v685
    %v758 = vunpack.c.l.b16 %v686
    %v759 = vunpack.c.l.b16 %v687
    %v760 = vunpack.c.l.b16 %v688
    %v761 = vunpack.c.l.b16 %v689
    %v762 = vunpack.c.l.b16 %v690
    %v763 = vunpack.c.l.b16 %v691
    %v764 = vunpack.c.l.b16 %v692
    %v765 = vunpack.c.l.b16 %v693
    %v766 = vunpack.c.l.b16 %v694
    %v767 = vunpack.c.l.b16 %v695
    %v768 = vunpack.c.l.b16 %v696
    %v769 = vpack.c.b16 %v738, %v737
    %v770 = vpack.c.b16 %v740, %v739
    %v771 = vpack.c.b16 %v742, %v741
    %v772 = vpack.c.b16 %v744, %v743
    %v773 = vpack.c.b16 %v746, %v745
    %v774 = vpack.c.b16 %v748, %v747
    %v775 = vpack.c.b16 %v750, %v749
    %v776 = vpack.c.b16 %v752, %v751
    %v777 = vpack.c.b16 %v754, %v753
    %v778 = vpack.c.b16 %v756, %v755
    %v779 = vpack.c.b16 %v758, %v757
    %v780 = vpack.c.b16 %v760, %v759
    %v781 = vpack.c.b16 %v762, %v761
    %v782 = vpack.c.b16 %v764, %v763
    %v783 = vpack.c.b16 %v766, %v765
    %v784 = vpack.c.b16 %v768, %v767
    %801 = vmatprep.subr.bf16.mxu0 0
    %802 = vmatpush1.bf16.msra.mxu0 %v769
    %803 = vmatprep.subr.bf16.mxu0 0
    %804 = vmatpush1.bf16.msra.mxu0 %v770
    %805 = vmatprep.subr.bf16.mxu0 0
    %806 = vmatpush1.bf16.msra.mxu0 %v771
    %807 = vmatprep.subr.bf16.mxu0 0
    %808 = vmatpush1.bf16.msra.mxu0 %v772
    %809 = vmatprep.subr.bf16.mxu0 0
    %810 = vmatpush1.bf16.msra.mxu0 %v773
    %811 = vmatprep.subr.bf16.mxu0 0
    %812 = vmatpush1.bf16.msra.mxu0 %v774
    %813 = vmatprep.subr.bf16.mxu0 0
    %814 = vmatpush1.bf16.msra.mxu0 %v775
    %815 = vmatprep.subr.bf16.mxu0 0
    %816 = vmatpush1.bf16.msra.mxu0 %v776
    %817 = vmatprep.subr.bf16.mxu0 0
    %818 = vmatpush1.bf16.msra.mxu0 %v777
    %819 = vmatprep.subr.bf16.mxu0 0
    %820 = vmatpush1.bf16.msra.mxu0 %v778
    %821 = vmatprep.subr.bf16.mxu0 0
    %822 = vmatpush1.bf16.msra.mxu0 %v779
    %823 = vmatprep.subr.bf16.mxu0 0
    %824 = vmatpush1.bf16.msra.mxu0 %v780
    %825 = vmatprep.subr.bf16.mxu0 0
    %826 = vmatpush1.bf16.msra.mxu0 %v781
    %827 = vmatprep.subr.bf16.mxu0 0
    %828 = vmatpush1.bf16.msra.mxu0 %v782
    %829 = vmatprep.subr.bf16.mxu0 0
    %830 = vmatpush1.bf16.msra.mxu0 %v783
    %831 = vmatprep.subr.bf16.mxu0 0
    %832 = vmatpush1.bf16.msra.mxu0 %v784
    %833 = vmatprep.mubr.bf16.mxu0 %v658
    %834 = vmatmul.mubr.bf16.gmra.mrb[0].mxu0 %v657
    %v835 = vpop.f32.mrb[0].mxu0
    %v836 = vadd.f32 %v697, %v835
    %v837 = vpop.f32.mrb[0].mxu0
    %v838 = vpop.f32.mrb[0].mxu0
    %v839 = vadd.f32 %v698, %v838
    %v840 = vpop.f32.mrb[0].mxu0
    %841 = vmatprep.mubr.bf16.mxu0 %v660
    %842 = vmatmul.mubr.bf16.gmra.mrb[0].mxu0 %v659
    %v843 = vpop.f32.mrb[0].mxu0
    %v844 = vadd.f32 %v699, %v843
    %v845 = vpop.f32.mrb[0].mxu0
    %v846 = vpop.f32.mrb[0].mxu0
    %v847 = vadd.f32 %v700, %v846
    %v848 = vpop.f32.mrb[0].mxu0
    %849 = vmatprep.mubr.bf16.mxu0 %v662
    %850 = vmatmul.mubr.bf16.gmra.mrb[0].mxu0 %v661
    %v851 = vpop.f32.mrb[0].mxu0
    %v852 = vadd.f32 %v701, %v851
    %v853 = vpop.f32.mrb[0].mxu0
    %v854 = vpop.f32.mrb[0].mxu0
    %v855 = vadd.f32 %v702, %v854
    %v856 = vpop.f32.mrb[0].mxu0
    %857 = vmatprep.mubr.bf16.mxu0 %v664
    %858 = vmatmul.mubr.bf16.gmra.mrb[0].mxu0 %v663
    %v859 = vpop.f32.mrb[0].mxu0
    %v860 = vadd.f32 %v703, %v859
    %v861 = vpop.f32.mrb[0].mxu0
    %v862 = vpop.f32.mrb[0].mxu0
    %v863 = vadd.f32 %v704, %v862
    %v864 = vpop.f32.mrb[0].mxu0
    %865 = vdwg.mxu0
    %v866 = vld [vmem:[%s5] sm:$0xff]
    %v867 = vld [vmem:[%s5 + $0x8] sm:$0xff]
    %v868 = vpack.c.bf16 %v867, %v866
    %v869 = vld [vmem:[%s6] sm:$0xf]
    %v870 = vld [vmem:[%s6 + $0x4] sm:$0xf]
    %v871 = vld [vmem:[%s6 + $0x8] sm:$0xf]
    %v872 = vld [vmem:[%s6 + $0xc] sm:$0xf]
    %v873 = vld [vmem:[%s6 + $0x10] sm:$0xf]
    %v874 = vld [vmem:[%s6 + $0x14] sm:$0xf]
    %v875 = vld [vmem:[%s6 + $0x18] sm:$0xf]
    %v876 = vld [vmem:[%s6 + $0x1c] sm:$0xf]
    %v877 = vld [vmem:[%s6 + $0x20] sm:$0xf]
    %v878 = vld [vmem:[%s6 + $0x24] sm:$0xf]
    %v879 = vld [vmem:[%s6 + $0x28] sm:$0xf]
    %v880 = vld [vmem:[%s6 + $0x2c] sm:$0xf]
    %v881 = vld [vmem:[%s6 + $0x30] sm:$0xf]
    %v882 = vld [vmem:[%s6 + $0x34] sm:$0xf]
    %v883 = vld [vmem:[%s6 + $0x38] sm:$0xf]
    %v884 = vld [vmem:[%s6 + $0x3c] sm:$0xf]
    %v901 = vunpack.c.l.b16 %v869
    %v902 = vunpack.c.l.b16 %v870
    %v903 = vunpack.c.l.b16 %v871
    %v904 = vunpack.c.l.b16 %v872
    %v905 = vunpack.c.l.b16 %v873
    %v906 = vunpack.c.l.b16 %v874
    %v907 = vunpack.c.l.b16 %v875
    %v908 = vunpack.c.l.b16 %v876
    %v909 = vunpack.c.l.b16 %v877
    %v910 = vunpack.c.l.b16 %v878
    %v911 = vunpack.c.l.b16 %v879
    %v912 = vunpack.c.l.b16 %v880
    %v913 = vunpack.c.l.b16 %v881
    %v914 = vunpack.c.l.b16 %v882
    %v915 = vunpack.c.l.b16 %v883
    %v916 = vunpack.c.l.b16 %v884
    %v917 = vpack.c.b16 %v902, %v901
    %v918 = vpack.c.b16 %v904, %v903
    %v919 = vpack.c.b16 %v906, %v905
    %v920 = vpack.c.b16 %v908, %v907
    %v921 = vpack.c.b16 %v910, %v909
    %v922 = vpack.c.b16 %v912, %v911
    %v923 = vpack.c.b16 %v914, %v913
    %v924 = vpack.c.b16 %v916, %v915
    %933 = vmatprep.subr.bf16.mxu0 0
    %934 = vmatpush1.bf16.msra.mxu0 %v917
    %935 = vmatprep.subr.bf16.mxu0 0
    %936 = vmatpush1.bf16.msra.mxu0 %v918
    %937 = vmatprep.subr.bf16.mxu0 0
    %938 = vmatpush1.bf16.msra.mxu0 %v919
    %939 = vmatprep.subr.bf16.mxu0 0
    %940 = vmatpush1.bf16.msra.mxu0 %v920
    %941 = vmatprep.subr.bf16.mxu0 0
    %942 = vmatpush1.bf16.msra.mxu0 %v921
    %943 = vmatprep.subr.bf16.mxu0 0
    %944 = vmatpush1.bf16.msra.mxu0 %v922
    %945 = vmatprep.subr.bf16.mxu0 0
    %946 = vmatpush1.bf16.msra.mxu0 %v923
    %947 = vmatprep.subr.bf16.mxu0 0
    %948 = vmatpush1.bf16.msra.mxu0 %v924
    %949 = vmatprep.subr.bf16.mxu0 0
    %950 = vmatpush1.bf16.msra.mxu0 0
    %951 = vmatprep.subr.bf16.mxu0 0
    %952 = vmatpush1.bf16.msra.mxu0 0
    %953 = vmatprep.subr.bf16.mxu0 0
    %954 = vmatpush1.bf16.msra.mxu0 0
    %955 = vmatprep.subr.bf16.mxu0 0
    %956 = vmatpush1.bf16.msra.mxu0 0
    %957 = vmatprep.subr.bf16.mxu0 0
    %958 = vmatpush1.bf16.msra.mxu0 0
    %959 = vmatprep.subr.bf16.mxu0 0
    %960 = vmatpush1.bf16.msra.mxu0 0
    %961 = vmatprep.subr.bf16.mxu0 0
    %962 = vmatpush1.bf16.msra.mxu0 0
    %963 = vmatprep.subr.bf16.mxu0 0
    %964 = vmatpush1.bf16.msra.mxu0 0
    %965 = vmatprep.mubr.bf16.mxu0 0
    %966 = vmatmul.mubr.bf16.gmra.mrb[0].mxu0 %v868
    %v967 = vpop.f32.mrb[0].mxu0
    %v968 = vadd.f32 0.0, %v967
    %v969 = vpop.f32.mrb[0].mxu0
    %v970 = vpop.f32.mrb[0].mxu0
    %v971 = vadd.f32 0.0, %v970
    %v972 = vpop.f32.mrb[0].mxu0
    %973 = vdwg.mxu0
    %v974 = vpack.c.bf16 %v839, %v836
    %v975 = vpack.c.bf16 %v847, %v844
    %v976 = vpack.c.bf16 %v855, %v852
    %v977 = vpack.c.bf16 %v863, %v860
    %v978 = vld [vmem:[%s8] sm:$0xf]
    %v979 = vld [vmem:[%s8 + $0x4] sm:$0xf]
    %v980 = vld [vmem:[%s8 + $0x8] sm:$0xf]
    %v981 = vld [vmem:[%s8 + $0xc] sm:$0xf]
    %v982 = vld [vmem:[%s8 + $0x10] sm:$0xf]
    %v983 = vld [vmem:[%s8 + $0x14] sm:$0xf]
    %v984 = vld [vmem:[%s8 + $0x18] sm:$0xf]
    %v985 = vld [vmem:[%s8 + $0x1c] sm:$0xf]
    %v986 = vld [vmem:[%s8 + $0x20] sm:$0xf]
    %v987 = vld [vmem:[%s8 + $0x24] sm:$0xf]
    %v988 = vld [vmem:[%s8 + $0x28] sm:$0xf]
    %v989 = vld [vmem:[%s8 + $0x2c] sm:$0xf]
    %v990 = vld [vmem:[%s8 + $0x30] sm:$0xf]
    %v991 = vld [vmem:[%s8 + $0x34] sm:$0xf]
    %v992 = vld [vmem:[%s8 + $0x38] sm:$0xf]
    %v993 = vld [vmem:[%s8 + $0x3c] sm:$0xf]
    %v1010 = vunpack.c.l.b16 %v978
    %v1011 = vunpack.c.l.b16 %v979
    %v1012 = vunpack.c.l.b16 %v980
    %v1013 = vunpack.c.l.b16 %v981
    %v1014 = vunpack.c.l.b16 %v982
    %v1015 = vunpack.c.l.b16 %v983
    %v1016 = vunpack.c.l.b16 %v984
    %v1017 = vunpack.c.l.b16 %v985
    %v1018 = vunpack.c.l.b16 %v986
    %v1019 = vunpack.c.l.b16 %v987
    %v1020 = vunpack.c.l.b16 %v988
    %v1021 = vunpack.c.l.b16 %v989
    %v1022 = vunpack.c.l.b16 %v990
    %v1023 = vunpack.c.l.b16 %v991
    %v1024 = vunpack.c.l.b16 %v992
    %v1025 = vunpack.c.l.b16 %v993
    %v1026 = vpack.c.b16 %v1011, %v1010
    %v1027 = vpack.c.b16 %v1013, %v1012
    %v1028 = vpack.c.b16 %v1015, %v1014
    %v1029 = vpack.c.b16 %v1017, %v1016
    %v1030 = vpack.c.b16 %v1019, %v1018
    %v1031 = vpack.c.b16 %v1021, %v1020
    %v1032 = vpack.c.b16 %v1023, %v1022
    %v1033 = vpack.c.b16 %v1025, %v1024
    %1042 = vmatprep.subr.bf16.mxu0 0
    %1043 = vmatpush1.bf16.msra.mxu0 %v1026
    %1044 = vmatprep.subr.bf16.mxu0 0
    %1045 = vmatpush1.bf16.msra.mxu0 %v1027
    %1046 = vmatprep.subr.bf16.mxu0 0
    %1047 = vmatpush1.bf16.msra.mxu0 %v1028
    %1048 = vmatprep.subr.bf16.mxu0 0
    %1049 = vmatpush1.bf16.msra.mxu0 %v1029
    %1050 = vmatprep.subr.bf16.mxu0 0
    %1051 = vmatpush1.bf16.msra.mxu0 %v1030
    %1052 = vmatprep.subr.bf16.mxu0 0
    %1053 = vmatpush1.bf16.msra.mxu0 %v1031
    %1054 = vmatprep.subr.bf16.mxu0 0
    %1055 = vmatpush1.bf16.msra.mxu0 %v1032
    %1056 = vmatprep.subr.bf16.mxu0 0
    %1057 = vmatpush1.bf16.msra.mxu0 %v1033
    %1058 = vmatprep.subr.bf16.mxu0 0
    %1059 = vmatpush1.bf16.msra.mxu0 0
    %1060 = vmatprep.subr.bf16.mxu0 0
    %1061 = vmatpush1.bf16.msra.mxu0 0
    %1062 = vmatprep.subr.bf16.mxu0 0
    %1063 = vmatpush1.bf16.msra.mxu0 0
    %1064 = vmatprep.subr.bf16.mxu0 0
    %1065 = vmatpush1.bf16.msra.mxu0 0
    %1066 = vmatprep.subr.bf16.mxu0 0
    %1067 = vmatpush1.bf16.msra.mxu0 0
    %1068 = vmatprep.subr.bf16.mxu0 0
    %1069 = vmatpush1.bf16.msra.mxu0 0
    %1070 = vmatprep.subr.bf16.mxu0 0
    %1071 = vmatpush1.bf16.msra.mxu0 0
    %1072 = vmatprep.subr.bf16.mxu0 0
    %1073 = vmatpush1.bf16.msra.mxu0 0
    %1074 = vmatprep.mubr.bf16.mxu0 0
    %1075 = vmatmul.mubr.bf16.gmra.mrb[0].mxu0 %v974
    %v1076 = vpop.f32.mrb[0].mxu0
    %v1077 = vadd.f32 0.0, %v1076
    %v1078 = vpop.f32.mrb[0].mxu0
    %v1079 = vpop.f32.mrb[0].mxu0
    %v1080 = vadd.f32 0.0, %v1079
    %v1081 = vpop.f32.mrb[0].mxu0
    %1082 = vmatprep.mubr.bf16.mxu0 0
    %1083 = vmatmul.mubr.bf16.gmra.mrb[0].mxu0 %v975
    %v1084 = vpop.f32.mrb[0].mxu0
    %v1085 = vadd.f32 0.0, %v1084
    %v1086 = vpop.f32.mrb[0].mxu0
    %v1087 = vpop.f32.mrb[0].mxu0
    %v1088 = vadd.f32 0.0, %v1087
    %v1089 = vpop.f32.mrb[0].mxu0
    %1090 = vmatprep.mubr.bf16.mxu0 0
    %1091 = vmatmul.mubr.bf16.gmra.mrb[0].mxu0 %v976
    %v1092 = vpop.f32.mrb[0].mxu0
    %v1093 = vadd.f32 0.0, %v1092
    %v1094 = vpop.f32.mrb[0].mxu0
    %v1095 = vpop.f32.mrb[0].mxu0
    %v1096 = vadd.f32 0.0, %v1095
    %v1097 = vpop.f32.mrb[0].mxu0
    %1098 = vmatprep.mubr.bf16.mxu0 0
    %1099 = vmatmul.mubr.bf16.gmra.mrb[0].mxu0 %v977
    %v1100 = vpop.f32.mrb[0].mxu0
    %v1101 = vadd.f32 0.0, %v1100
    %v1102 = vpop.f32.mrb[0].mxu0
    %v1103 = vpop.f32.mrb[0].mxu0
    %v1104 = vadd.f32 0.0, %v1103
    %v1105 = vpop.f32.mrb[0].mxu0
    %1106 = vdwg.mxu0
    %v1107 = vpack.c.bf16 %v971, %v968
    %v1108 = vld [vmem:[%s9] sm:$0xff]
    %v1109 = vld [vmem:[%s9 + $0x8] sm:$0xff]
    %v1110 = vld [vmem:[%s9 + $0x10] sm:$0xff]
    %v1111 = vld [vmem:[%s9 + $0x18] sm:$0xff]
    %v1112 = vld [vmem:[%s9 + $0x20] sm:$0xff]
    %v1113 = vld [vmem:[%s9 + $0x28] sm:$0xff]
    %v1114 = vld [vmem:[%s9 + $0x30] sm:$0xff]
    %v1115 = vld [vmem:[%s9 + $0x38] sm:$0xff]
    %v1116 = vld [vmem:[%s9 + $0x40] sm:$0xff]
    %v1117 = vld [vmem:[%s9 + $0x48] sm:$0xff]
    %v1118 = vld [vmem:[%s9 + $0x50] sm:$0xff]
    %v1119 = vld [vmem:[%s9 + $0x58] sm:$0xff]
    %v1120 = vld [vmem:[%s9 + $0x60] sm:$0xff]
    %v1121 = vld [vmem:[%s9 + $0x68] sm:$0xff]
    %v1122 = vld [vmem:[%s9 + $0x70] sm:$0xff]
    %v1123 = vld [vmem:[%s9 + $0x78] sm:$0xff]
    %v1140 = vunpack.c.l.b16 %v1108
    %v1141 = vunpack.c.h.b16 %v1108
    %v1142 = vunpack.c.l.b16 %v1109
    %v1143 = vunpack.c.h.b16 %v1109
    %v1144 = vunpack.c.l.b16 %v1110
    %v1145 = vunpack.c.h.b16 %v1110
    %v1146 = vunpack.c.l.b16 %v1111
    %v1147 = vunpack.c.h.b16 %v1111
    %v1148 = vunpack.c.l.b16 %v1112
    %v1149 = vunpack.c.h.b16 %v1112
    %v1150 = vunpack.c.l.b16 %v1113
    %v1151 = vunpack.c.h.b16 %v1113
    %v1152 = vunpack.c.l.b16 %v1114
    %v1153 = vunpack.c.h.b16 %v1114
    %v1154 = vunpack.c.l.b16 %v1115
    %v1155 = vunpack.c.h.b16 %v1115
    %v1156 = vunpack.c.l.b16 %v1116
    %v1157 = vunpack.c.h.b16 %v1116
    %v1158 = vunpack.c.l.b16 %v1117
    %v1159 = vunpack.c.h.b16 %v1117
    %v1160 = vunpack.c.l.b16 %v1118
    %v1161 = vunpack.c.h.b16 %v1118
    %v1162 = vunpack.c.l.b16 %v1119
    %v1163 = vunpack.c.h.b16 %v1119
    %v1164 = vunpack.c.l.b16 %v1120
    %v1165 = vunpack.c.h.b16 %v1120
    %v1166 = vunpack.c.l.b16 %v1121
    %v1167 = vunpack.c.h.b16 %v1121
    %v1168 = vunpack.c.l.b16 %v1122
    %v1169 = vunpack.c.h.b16 %v1122
    %v1170 = vunpack.c.l.b16 %v1123
    %v1171 = vunpack.c.h.b16 %v1123
    %v1172 = vpack.c.b16 %v1142, %v1140
    %v1173 = vpack.c.b16 %v1143, %v1141
    %v1174 = vpack.c.b16 %v1146, %v1144
    %v1175 = vpack.c.b16 %v1147, %v1145
    %v1176 = vpack.c.b16 %v1150, %v1148
    %v1177 = vpack.c.b16 %v1151, %v1149
    %v1178 = vpack.c.b16 %v1154, %v1152
    %v1179 = vpack.c.b16 %v1155, %v1153
    %v1180 = vpack.c.b16 %v1158, %v1156
    %v1181 = vpack.c.b16 %v1159, %v1157
    %v1182 = vpack.c.b16 %v1162, %v1160
    %v1183 = vpack.c.b16 %v1163, %v1161
    %v1184 = vpack.c.b16 %v1166, %v1164
    %v1185 = vpack.c.b16 %v1167, %v1165
    %v1186 = vpack.c.b16 %v1170, %v1168
    %v1187 = vpack.c.b16 %v1171, %v1169
    %1204 = vmatprep.subr.bf16.mxu0 %v1173
    %1205 = vmatpush1.bf16.msra.mxu0 %v1172
    %1206 = vmatprep.subr.bf16.mxu0 %v1175
    %1207 = vmatpush1.bf16.msra.mxu0 %v1174
    %1208 = vmatprep.subr.bf16.mxu0 %v1177
    %1209 = vmatpush1.bf16.msra.mxu0 %v1176
    %1210 = vmatprep.subr.bf16.mxu0 %v1179
    %1211 = vmatpush1.bf16.msra.mxu0 %v1178
    %1212 = vmatprep.subr.bf16.mxu0 %v1181
    %1213 = vmatpush1.bf16.msra.mxu0 %v1180
    %1214 = vmatprep.subr.bf16.mxu0 %v1183
    %1215 = vmatpush1.bf16.msra.mxu0 %v1182
    %1216 = vmatprep.subr.bf16.mxu0 %v1185
    %1217 = vmatpush1.bf16.msra.mxu0 %v1184
    %1218 = vmatprep.subr.bf16.mxu0 %v1187
    %1219 = vmatpush1.bf16.msra.mxu0 %v1186
    %1220 = vmatprep.subr.bf16.mxu0 0
    %1221 = vmatpush1.bf16.msra.mxu0 0
    %1222 = vmatprep.subr.bf16.mxu0 0
    %1223 = vmatpush1.bf16.msra.mxu0 0
    %1224 = vmatprep.subr.bf16.mxu0 0
    %1225 = vmatpush1.bf16.msra.mxu0 0
    %1226 = vmatprep.subr.bf16.mxu0 0
    %1227 = vmatpush1.bf16.msra.mxu0 0
    %1228 = vmatprep.subr.bf16.mxu0 0
    %1229 = vmatpush1.bf16.msra.mxu0 0
    %1230 = vmatprep.subr.bf16.mxu0 0
    %1231 = vmatpush1.bf16.msra.mxu0 0
    %1232 = vmatprep.subr.bf16.mxu0 0
    %1233 = vmatpush1.bf16.msra.mxu0 0
    %1234 = vmatprep.subr.bf16.mxu0 0
    %1235 = vmatpush1.bf16.msra.mxu0 0
    %1236 = vmatprep.mubr.bf16.mxu0 0
    %1237 = vmatmul.mubr.bf16.gmra.mrb[0].mxu0 %v1107
    %v1238 = vpop.f32.mrb[0].mxu0
    %v1239 = vadd.f32 0.0, %v1238
    %v1240 = vpop.f32.mrb[0].mxu0
    %v1241 = vadd.f32 0.0, %v1240
    %v1242 = vpop.f32.mrb[0].mxu0
    %v1243 = vadd.f32 0.0, %v1242
    %v1244 = vpop.f32.mrb[0].mxu0
    %v1245 = vadd.f32 0.0, %v1244
    %1246 = vdwg.mxu0
    %v1247 = vld [vmem:[%s7] sm:$0x1]
    %vm1248 = vcmask 261120
    %v1250 = vsel %vm1248, %v1077, 0
    %v1253 = vsel %vm1248, %v1080, 0
    %v1256 = vsel %vm1248, %v1085, 0
    %v1259 = vsel %vm1248, %v1088, 0
    %v1262 = vsel %vm1248, %v1093, 0
    %v1265 = vsel %vm1248, %v1096, 0
    %v1268 = vsel %vm1248, %v1101, 0
    %v1271 = vsel %vm1248, %v1104, 0
    %v1274 = vsel %vm1248, %v1239, 0
    %v1277 = vsel %vm1248, %v1243, 0
    %1279 = vmatprep.subr.mxu0 0.0
    %1280 = vmatpush1.xpose.msra.mxu0 %v1274
    %1281 = vmatprep.subr.mxu0 0.0
    %1282 = vmatpush1.xpose.msra.mxu0 %v1277
    %1283 = vmatprep.subr.mxu0 0.0
    %1284 = vmatpush1.xpose.msra.mxu0 0.0
    %1285 = vmatprep.subr.mxu0 0.0
    %1286 = vmatpush1.xpose.msra.mxu0 0.0
    %1287 = vmatprep.subr.mxu0 0.0
    %1288 = vmatpush1.xpose.msra.mxu0 0.0
    %1289 = vmatprep.subr.mxu0 0.0
    %1290 = vmatpush1.xpose.msra.mxu0 0.0
    %1291 = vmatprep.subr.mxu0 0.0
    %1292 = vmatpush1.xpose.msra.mxu0 0.0
    %1293 = vmatprep.subr.mxu0 0.0
    %1294 = vmatpush1.xpose.msra.mxu0 0.0
    %1295 = vmatprep.subr.mxu0 0.0
    %1296 = vmatpush1.xpose.msra.mxu0 0.0
    %1297 = vmatprep.subr.mxu0 0.0
    %1298 = vmatpush1.xpose.msra.mxu0 0.0
    %1299 = vmatprep.subr.mxu0 0.0
    %1300 = vmatpush1.xpose.msra.mxu0 0.0
    %1301 = vmatprep.subr.mxu0 0.0
    %1302 = vmatpush1.xpose.msra.mxu0 0.0
    %1303 = vmatprep.subr.mxu0 0.0
    %1304 = vmatpush1.xpose.msra.mxu0 0.0
    %1305 = vmatprep.subr.mxu0 0.0
    %1306 = vmatpush1.xpose.msra.mxu0 0.0
    %1307 = vmatprep.subr.mxu0 0.0
    %1308 = vmatpush1.xpose.msra.mxu0 0.0
    %1309 = vmatprep.subr.mxu0 0.0
    %1310 = vmatpush1.xpose.msra.mxu0 0.0
    %1311 = vmatprep.subr.mxu0 0.0
    %1312 = vmatpush1.xpose.msra.mxu0 0.0
    %1313 = vmatprep.subr.mxu0 0.0
    %1314 = vmatpush1.xpose.msra.mxu0 0.0
    %1315 = vmatprep.subr.mxu0 0.0
    %1316 = vmatpush1.xpose.msra.mxu0 0.0
    %1317 = vmatprep.subr.mxu0 0.0
    %1318 = vmatpush1.xpose.msra.mxu0 0.0
    %1319 = vmatprep.subr.mxu0 0.0
    %1320 = vmatpush1.xpose.msra.mxu0 0.0
    %1321 = vmatprep.subr.mxu0 0.0
    %1322 = vmatpush1.xpose.msra.mxu0 0.0
    %1323 = vmatprep.subr.mxu0 0.0
    %1324 = vmatpush1.xpose.msra.mxu0 0.0
    %1325 = vmatprep.subr.mxu0 0.0
    %1326 = vmatpush1.xpose.msra.mxu0 0.0
    %1327 = vmatprep.subr.mxu0 0.0
    %1328 = vmatpush1.xpose.msra.mxu0 0.0
    %1329 = vmatprep.subr.mxu0 0.0
    %1330 = vmatpush1.xpose.msra.mxu0 0.0
    %1331 = vmatprep.subr.mxu0 0.0
    %1332 = vmatpush1.xpose.msra.mxu0 0.0
    %1333 = vmatprep.subr.mxu0 0.0
    %1334 = vmatpush1.xpose.msra.mxu0 0.0
    %1335 = vmatprep.subr.mxu0 0.0
    %1336 = vmatpush1.xpose.msra.mxu0 0.0
    %1337 = vmatprep.subr.mxu0 0.0
    %1338 = vmatpush1.xpose.msra.mxu0 0.0
    %1339 = vmatprep.subr.mxu0 0.0
    %1340 = vmatpush1.xpose.msra.mxu0 0.0
    %1341 = vmatprep.subr.mxu0 0.0
    %1342 = vmatpush1.xpose.msra.mxu0 0.0
    %1343 = vmatprep.mubr.f32.mxu0 0.0
    %1344 = vmatmul.mubr.f32.gmra.mrb[0].mxu0 %v1250
    %v1345 = vpop.f32.mrb[0].mxu0
    %v1346 = vadd.f32 0.0, %v1345
    %v1347 = vpop.f32.mrb[0].mxu0
    %1348 = vmatprep.mubr.f32.mxu0 0.0
    %1349 = vmatmul.mubr.f32.gmra.mrb[0].mxu0 %v1253
    %v1350 = vpop.f32.mrb[0].mxu0
    %v1351 = vadd.f32 0.0, %v1350
    %v1352 = vpop.f32.mrb[0].mxu0
    %1353 = vmatprep.mubr.f32.mxu0 0.0
    %1354 = vmatmul.mubr.f32.gmra.mrb[0].mxu0 %v1256
    %v1355 = vpop.f32.mrb[0].mxu0
    %v1356 = vadd.f32 0.0, %v1355
    %v1357 = vpop.f32.mrb[0].mxu0
    %1358 = vmatprep.mubr.f32.mxu0 0.0
    %1359 = vmatmul.mubr.f32.gmra.mrb[0].mxu0 %v1259
    %v1360 = vpop.f32.mrb[0].mxu0
    %v1361 = vadd.f32 0.0, %v1360
    %v1362 = vpop.f32.mrb[0].mxu0
    %1363 = vmatprep.mubr.f32.mxu0 0.0
    %1364 = vmatmul.mubr.f32.gmra.mrb[0].mxu0 %v1262
    %v1365 = vpop.f32.mrb[0].mxu0
    %v1366 = vadd.f32 0.0, %v1365
    %v1367 = vpop.f32.mrb[0].mxu0
    %1368 = vmatprep.mubr.f32.mxu0 0.0
    %1369 = vmatmul.mubr.f32.gmra.mrb[0].mxu0 %v1265
    %v1370 = vpop.f32.mrb[0].mxu0
    %v1371 = vadd.f32 0.0, %v1370
    %v1372 = vpop.f32.mrb[0].mxu0
    %1373 = vmatprep.mubr.f32.mxu0 0.0
    %1374 = vmatmul.mubr.f32.gmra.mrb[0].mxu0 %v1268
    %v1375 = vpop.f32.mrb[0].mxu0
    %v1376 = vadd.f32 0.0, %v1375
    %v1377 = vpop.f32.mrb[0].mxu0
    %1378 = vmatprep.mubr.f32.mxu0 0.0
    %1379 = vmatmul.mubr.f32.gmra.mrb[0].mxu0 %v1271
    %v1380 = vpop.f32.mrb[0].mxu0
    %v1381 = vadd.f32 0.0, %v1380
    %v1382 = vpop.f32.mrb[0].mxu0
    %1383 = vdwg.mxu0
    %v1384 = vmul.f32 %v1346, 0.17677669
    %v1385 = vmul.f32 %v1351, 0.17677669
    %v1386 = vmul.f32 %v1356, 0.17677669
    %v1387 = vmul.f32 %v1361, 0.17677669
    %v1388 = vmul.f32 %v1366, 0.17677669
    %v1389 = vmul.f32 %v1371, 0.17677669
    %v1390 = vmul.f32 %v1376, 0.17677669
    %v1391 = vmul.f32 %v1381, 0.17677669
    %v1393 = vlaneseq
    %v1394 = vshrl.u32 %v1393, 7
    %v1395 = vsub.s32 0, %v1394
    %v1396 = vrot.slane %v1247, %v1395
    %v1398 = vadd.f32 %v1384, %v1396
    %v1399 = vadd.f32 %v1385, %v1396
    %v1400 = vadd.f32 %v1386, %v1396
    %v1401 = vadd.f32 %v1387, %v1396
    %v1402 = vadd.f32 %v1388, %v1396
    %v1403 = vadd.f32 %v1389, %v1396
    %v1404 = vadd.f32 %v1390, %v1396
    %v1405 = vadd.f32 %v1391, %v1396
    %vm1406 = vcmask 130048
    %v1407 = vsel %vm1406, %v1398, -inf
    %1408 = vmax.xlane.f32.xlu0 %v1407
    %v1409 = vpop.xlane.xlu0 %1408
    %v1410 = vsel %vm1406, %v1399, -inf
    %1411 = vmax.xlane.f32.xlu0 %v1410
    %v1412 = vpop.xlane.xlu0 %1411
    %v1413 = vsel %vm1406, %v1400, -inf
    %1414 = vmax.xlane.f32.xlu0 %v1413
    %v1415 = vpop.xlane.xlu0 %1414
    %v1416 = vsel %vm1406, %v1401, -inf
    %1417 = vmax.xlane.f32.xlu0 %v1416
    %v1418 = vpop.xlane.xlu0 %1417
    %v1419 = vsel %vm1406, %v1402, -inf
    %1420 = vmax.xlane.f32.xlu0 %v1419
    %v1421 = vpop.xlane.xlu0 %1420
    %v1422 = vsel %vm1406, %v1403, -inf
    %1423 = vmax.xlane.f32.xlu0 %v1422
    %v1424 = vpop.xlane.xlu0 %1423
    %v1425 = vsel %vm1406, %v1404, -inf
    %1426 = vmax.xlane.f32.xlu0 %v1425
    %v1427 = vpop.xlane.xlu0 %1426
    %v1428 = vsel %vm1406, %v1405, -inf
    %1429 = vmax.xlane.f32.xlu0 %v1428
    %v1430 = vpop.xlane.xlu0 %1429
    %v1431 = vsub.f32 %v1398, %v1409
    %v1432 = vsub.f32 %v1399, %v1412
    %v1433 = vsub.f32 %v1400, %v1415
    %v1434 = vsub.f32 %v1401, %v1418
    %v1435 = vsub.f32 %v1402, %v1421
    %v1436 = vsub.f32 %v1403, %v1424
    %v1437 = vsub.f32 %v1404, %v1427
    %v1438 = vsub.f32 %v1405, %v1430
    %v1439 = vmul.f32 %v1431, 1.442695
    %v1440 = vpow.pop %v1439
    %v1441 = vmul.f32 %v1432, 1.442695
    %v1442 = vpow.pop %v1441
    %v1443 = vmul.f32 %v1433, 1.442695
    %v1444 = vpow.pop %v1443
    %v1445 = vmul.f32 %v1434, 1.442695
    %v1446 = vpow.pop %v1445
    %v1447 = vmul.f32 %v1435, 1.442695
    %v1448 = vpow.pop %v1447
    %v1449 = vmul.f32 %v1436, 1.442695
    %v1450 = vpow.pop %v1449
    %v1451 = vmul.f32 %v1437, 1.442695
    %v1452 = vpow.pop %v1451
    %v1453 = vmul.f32 %v1438, 1.442695
    %v1454 = vpow.pop %v1453
    %v1455 = vsel %vm1406, %v1440, 0.0
    %1456 = vadd.xlane.f32.xlu0 %v1455
    %v1457 = vpop.xlane.xlu0 %1456
    %v1458 = vsel %vm1406, %v1442, 0.0
    %1459 = vadd.xlane.f32.xlu0 %v1458
    %v1460 = vpop.xlane.xlu0 %1459
    %v1461 = vsel %vm1406, %v1444, 0.0
    %1462 = vadd.xlane.f32.xlu0 %v1461
    %v1463 = vpop.xlane.xlu0 %1462
    %v1464 = vsel %vm1406, %v1446, 0.0
    %1465 = vadd.xlane.f32.xlu0 %v1464
    %v1466 = vpop.xlane.xlu0 %1465
    %v1467 = vsel %vm1406, %v1448, 0.0
    %1468 = vadd.xlane.f32.xlu0 %v1467
    %v1469 = vpop.xlane.xlu0 %1468
    %v1470 = vsel %vm1406, %v1450, 0.0
    %1471 = vadd.xlane.f32.xlu0 %v1470
    %v1472 = vpop.xlane.xlu0 %1471
    %v1473 = vsel %vm1406, %v1452, 0.0
    %1474 = vadd.xlane.f32.xlu0 %v1473
    %v1475 = vpop.xlane.xlu0 %1474
    %v1476 = vsel %vm1406, %v1454, 0.0
    %1477 = vadd.xlane.f32.xlu0 %v1476
    %v1478 = vpop.xlane.xlu0 %1477
    %v1479 = vrcp.pop %v1457
    %v1480 = vrcp.pop %v1460
    %v1481 = vrcp.pop %v1463
    %v1482 = vrcp.pop %v1466
    %v1483 = vrcp.pop %v1469
    %v1484 = vrcp.pop %v1472
    %v1485 = vrcp.pop %v1475
    %v1486 = vrcp.pop %v1478
    %v1487 = vmul.f32 %v1440, %v1479
    %v1488 = vmul.f32 %v1442, %v1480
    %v1489 = vmul.f32 %v1444, %v1481
    %v1490 = vmul.f32 %v1446, %v1482
    %v1491 = vmul.f32 %v1448, %v1483
    %v1492 = vmul.f32 %v1450, %v1484
    %v1493 = vmul.f32 %v1452, %v1485
    %v1494 = vmul.f32 %v1454, %v1486
    %v1496 = vsel %vm1406, %v1487, 0
    %v1499 = vsel %vm1406, %v1488, 0
    %v1502 = vsel %vm1406, %v1489, 0
    %v1505 = vsel %vm1406, %v1490, 0
    %v1508 = vsel %vm1406, %v1491, 0
    %v1511 = vsel %vm1406, %v1492, 0
    %v1514 = vsel %vm1406, %v1493, 0
    %v1517 = vsel %vm1406, %v1494, 0
    %1519 = vmatprep.subr.mxu0 0.0
    %1520 = vmatpush1.msra.mxu0 %v1241
    %1521 = vmatprep.subr.mxu0 0.0
    %1522 = vmatpush1.msra.mxu0 %v1245
    %1523 = vmatprep.subr.mxu0 0.0
    %1524 = vmatpush1.msra.mxu0 0.0
    %1525 = vmatprep.subr.mxu0 0.0
    %1526 = vmatpush1.msra.mxu0 0.0
    %1527 = vmatprep.subr.mxu0 0.0
    %1528 = vmatpush1.msra.mxu0 0.0
    %1529 = vmatprep.subr.mxu0 0.0
    %1530 = vmatpush1.msra.mxu0 0.0
    %1531 = vmatprep.subr.mxu0 0.0
    %1532 = vmatpush1.msra.mxu0 0.0
    %1533 = vmatprep.subr.mxu0 0.0
    %1534 = vmatpush1.msra.mxu0 0.0
    %1535 = vmatprep.subr.mxu0 0.0
    %1536 = vmatpush1.msra.mxu0 0.0
    %1537 = vmatprep.subr.mxu0 0.0
    %1538 = vmatpush1.msra.mxu0 0.0
    %1539 = vmatprep.subr.mxu0 0.0
    %1540 = vmatpush1.msra.mxu0 0.0
    %1541 = vmatprep.subr.mxu0 0.0
    %1542 = vmatpush1.msra.mxu0 0.0
    %1543 = vmatprep.subr.mxu0 0.0
    %1544 = vmatpush1.msra.mxu0 0.0
    %1545 = vmatprep.subr.mxu0 0.0
    %1546 = vmatpush1.msra.mxu0 0.0
    %1547 = vmatprep.subr.mxu0 0.0
    %1548 = vmatpush1.msra.mxu0 0.0
    %1549 = vmatprep.subr.mxu0 0.0
    %1550 = vmatpush1.msra.mxu0 0.0
    %1551 = vmatprep.subr.mxu0 0.0
    %1552 = vmatpush1.msra.mxu0 0.0
    %1553 = vmatprep.subr.mxu0 0.0
    %1554 = vmatpush1.msra.mxu0 0.0
    %1555 = vmatprep.subr.mxu0 0.0
    %1556 = vmatpush1.msra.mxu0 0.0
    %1557 = vmatprep.subr.mxu0 0.0
    %1558 = vmatpush1.msra.mxu0 0.0
    %1559 = vmatprep.subr.mxu0 0.0
    %1560 = vmatpush1.msra.mxu0 0.0
    %1561 = vmatprep.subr.mxu0 0.0
    %1562 = vmatpush1.msra.mxu0 0.0
    %1563 = vmatprep.subr.mxu0 0.0
    %1564 = vmatpush1.msra.mxu0 0.0
    %1565 = vmatprep.subr.mxu0 0.0
    %1566 = vmatpush1.msra.mxu0 0.0
    %1567 = vmatprep.subr.mxu0 0.0
    %1568 = vmatpush1.msra.mxu0 0.0
    %1569 = vmatprep.subr.mxu0 0.0
    %1570 = vmatpush1.msra.mxu0 0.0
    %1571 = vmatprep.subr.mxu0 0.0
    %1572 = vmatpush1.msra.mxu0 0.0
    %1573 = vmatprep.subr.mxu0 0.0
    %1574 = vmatpush1.msra.mxu0 0.0
    %1575 = vmatprep.subr.mxu0 0.0
    %1576 = vmatpush1.msra.mxu0 0.0
    %1577 = vmatprep.subr.mxu0 0.0
    %1578 = vmatpush1.msra.mxu0 0.0
    %1579 = vmatprep.subr.mxu0 0.0
    %1580 = vmatpush1.msra.mxu0 0.0
    %1581 = vmatprep.subr.mxu0 0.0
    %1582 = vmatpush1.msra.mxu0 0.0
    %1583 = vmatprep.mubr.f32.mxu0 0.0
    %1584 = vmatmul.mubr.f32.gmra.mrb[0].mxu0 %v1496
    %v1585 = vpop.f32.mrb[0].mxu0
    %v1586 = vadd.f32 0.0, %v1585
    %v1587 = vpop.f32.mrb[0].mxu0
    %1588 = vmatprep.mubr.f32.mxu0 0.0
    %1589 = vmatmul.mubr.f32.gmra.mrb[0].mxu0 %v1499
    %v1590 = vpop.f32.mrb[0].mxu0
    %v1591 = vadd.f32 0.0, %v1590
    %v1592 = vpop.f32.mrb[0].mxu0
    %1593 = vmatprep.mubr.f32.mxu0 0.0
    %1594 = vmatmul.mubr.f32.gmra.mrb[0].mxu0 %v1502
    %v1595 = vpop.f32.mrb[0].mxu0
    %v1596 = vadd.f32 0.0, %v1595
    %v1597 = vpop.f32.mrb[0].mxu0
    %1598 = vmatprep.mubr.f32.mxu0 0.0
    %1599 = vmatmul.mubr.f32.gmra.mrb[0].mxu0 %v1505
    %v1600 = vpop.f32.mrb[0].mxu0
    %v1601 = vadd.f32 0.0, %v1600
    %v1602 = vpop.f32.mrb[0].mxu0
    %1603 = vmatprep.mubr.f32.mxu0 0.0
    %1604 = vmatmul.mubr.f32.gmra.mrb[0].mxu0 %v1508
    %v1605 = vpop.f32.mrb[0].mxu0
    %v1606 = vadd.f32 0.0, %v1605
    %v1607 = vpop.f32.mrb[0].mxu0
    %1608 = vmatprep.mubr.f32.mxu0 0.0
    %1609 = vmatmul.mubr.f32.gmra.mrb[0].mxu0 %v1511
    %v1610 = vpop.f32.mrb[0].mxu0
    %v1611 = vadd.f32 0.0, %v1610
    %v1612 = vpop.f32.mrb[0].mxu0
    %1613 = vmatprep.mubr.f32.mxu0 0.0
    %1614 = vmatmul.mubr.f32.gmra.mrb[0].mxu0 %v1514
    %v1615 = vpop.f32.mrb[0].mxu0
    %v1616 = vadd.f32 0.0, %v1615
    %v1617 = vpop.f32.mrb[0].mxu0
    %1618 = vmatprep.mubr.f32.mxu0 0.0
    %1619 = vmatmul.mubr.f32.gmra.mrb[0].mxu0 %v1517
    %v1620 = vpop.f32.mrb[0].mxu0
    %v1621 = vadd.f32 0.0, %v1620
    %v1622 = vpop.f32.mrb[0].mxu0
    %1623 = vdwg.mxu0
    %v1624 = vpack.c.bf16 %v1591, %v1586
    %v1625 = vpack.c.bf16 %v1601, %v1596
    %v1626 = vpack.c.bf16 %v1611, %v1606
    %v1627 = vpack.c.bf16 %v1621, %v1616
    %v1628 = vld [vmem:[%s10] sm:$0xf]
    %v1629 = vld [vmem:[%s10 + $0x4] sm:$0xf]
    %v1630 = vld [vmem:[%s10 + $0x8] sm:$0xf]
    %v1631 = vld [vmem:[%s10 + $0xc] sm:$0xf]
    %1632 = vrot.lane.b32.xlu0 %v1077, 96
    %v1633 = vpop.permute.xlu0 %1632
    %1634 = vrot.lane.b32.xlu0 %v1080, 96
    %v1635 = vpop.permute.xlu0 %1634
    %1636 = vrot.lane.b32.xlu0 %v1085, 96
    %v1637 = vpop.permute.xlu0 %1636
    %1638 = vrot.lane.b32.xlu0 %v1088, 96
    %v1639 = vpop.permute.xlu0 %1638
    %1640 = vrot.lane.b32.xlu0 %v1093, 96
    %v1641 = vpop.permute.xlu0 %1640
    %1642 = vrot.lane.b32.xlu0 %v1096, 96
    %v1643 = vpop.permute.xlu0 %1642
    %1644 = vrot.lane.b32.xlu0 %v1101, 96
    %v1645 = vpop.permute.xlu0 %1644
    %1646 = vrot.lane.b32.xlu0 %v1104, 96
    %v1647 = vpop.permute.xlu0 %1646
    %1648 = vrot.lane.b32.xlu0 %v1239, 96
    %v1649 = vpop.permute.xlu0 %1648
    %1650 = vrot.lane.b32.xlu0 %v1243, 96
    %v1651 = vpop.permute.xlu0 %1650
    %v1652 = vsel %vm1248, %v1633, 0
    %v1654 = vsel %vm1248, %v1635, 0
    %v1656 = vsel %vm1248, %v1637, 0
    %v1658 = vsel %vm1248, %v1639, 0
    %v1660 = vsel %vm1248, %v1641, 0
    %v1662 = vsel %vm1248, %v1643, 0
    %v1664 = vsel %vm1248, %v1645, 0
    %v1666 = vsel %vm1248, %v1647, 0
    %v1668 = vsel %vm1248, %v1649, 0
    %v1670 = vsel %vm1248, %v1651, 0
    %1672 = vmatprep.subr.mxu0 0.0
    %1673 = vmatpush1.xpose.msra.mxu0 %v1668
    %1674 = vmatprep.subr.mxu0 0.0
    %1675 = vmatpush1.xpose.msra.mxu0 %v1670
    %1676 = vmatprep.subr.mxu0 0.0
    %1677 = vmatpush1.xpose.msra.mxu0 0.0
    %1678 = vmatprep.subr.mxu0 0.0
    %1679 = vmatpush1.xpose.msra.mxu0 0.0
    %1680 = vmatprep.subr.mxu0 0.0
    %1681 = vmatpush1.xpose.msra.mxu0 0.0
    %1682 = vmatprep.subr.mxu0 0.0
    %1683 = vmatpush1.xpose.msra.mxu0 0.0
    %1684 = vmatprep.subr.mxu0 0.0
    %1685 = vmatpush1.xpose.msra.mxu0 0.0
    %1686 = vmatprep.subr.mxu0 0.0
    %1687 = vmatpush1.xpose.msra.mxu0 0.0
    %1688 = vmatprep.subr.mxu0 0.0
    %1689 = vmatpush1.xpose.msra.mxu0 0.0
    %1690 = vmatprep.subr.mxu0 0.0
    %1691 = vmatpush1.xpose.msra.mxu0 0.0
    %1692 = vmatprep.subr.mxu0 0.0
    %1693 = vmatpush1.xpose.msra.mxu0 0.0
    %1694 = vmatprep.subr.mxu0 0.0
    %1695 = vmatpush1.xpose.msra.mxu0 0.0
    %1696 = vmatprep.subr.mxu0 0.0
    %1697 = vmatpush1.xpose.msra.mxu0 0.0
    %1698 = vmatprep.subr.mxu0 0.0
    %1699 = vmatpush1.xpose.msra.mxu0 0.0
    %1700 = vmatprep.subr.mxu0 0.0
    %1701 = vmatpush1.xpose.msra.mxu0 0.0
    %1702 = vmatprep.subr.mxu0 0.0
    %1703 = vmatpush1.xpose.msra.mxu0 0.0
    %1704 = vmatprep.subr.mxu0 0.0
    %1705 = vmatpush1.xpose.msra.mxu0 0.0
    %1706 = vmatprep.subr.mxu0 0.0
    %1707 = vmatpush1.xpose.msra.mxu0 0.0
    %1708 = vmatprep.subr.mxu0 0.0
    %1709 = vmatpush1.xpose.msra.mxu0 0.0
    %1710 = vmatprep.subr.mxu0 0.0
    %1711 = vmatpush1.xpose.msra.mxu0 0.0
    %1712 = vmatprep.subr.mxu0 0.0
    %1713 = vmatpush1.xpose.msra.mxu0 0.0
    %1714 = vmatprep.subr.mxu0 0.0
    %1715 = vmatpush1.xpose.msra.mxu0 0.0
    %1716 = vmatprep.subr.mxu0 0.0
    %1717 = vmatpush1.xpose.msra.mxu0 0.0
    %1718 = vmatprep.subr.mxu0 0.0
    %1719 = vmatpush1.xpose.msra.mxu0 0.0
    %1720 = vmatprep.subr.mxu0 0.0
    %1721 = vmatpush1.xpose.msra.mxu0 0.0
    %1722 = vmatprep.subr.mxu0 0.0
    %1723 = vmatpush1.xpose.msra.mxu0 0.0
    %1724 = vmatprep.subr.mxu0 0.0
    %1725 = vmatpush1.xpose.msra.mxu0 0.0
    %1726 = vmatprep.subr.mxu0 0.0
    %1727 = vmatpush1.xpose.msra.mxu0 0.0
    %1728 = vmatprep.subr.mxu0 0.0
    %1729 = vmatpush1.xpose.msra.mxu0 0.0
    %1730 = vmatprep.subr.mxu0 0.0
    %1731 = vmatpush1.xpose.msra.mxu0 0.0
    %1732 = vmatprep.subr.mxu0 0.0
    %1733 = vmatpush1.xpose.msra.mxu0 0.0
    %1734 = vmatprep.subr.mxu0 0.0
    %1735 = vmatpush1.xpose.msra.mxu0 0.0
    %1736 = vmatprep.mubr.f32.mxu0 0.0
    %1737 = vmatmul.mubr.f32.gmra.mrb[0].mxu0 %v1652
    %v1738 = vpop.f32.mrb[0].mxu0
    %v1739 = vadd.f32 0.0, %v1738
    %v1740 = vpop.f32.mrb[0].mxu0
    %1741 = vmatprep.mubr.f32.mxu0 0.0
    %1742 = vmatmul.mubr.f32.gmra.mrb[0].mxu0 %v1654
    %v1743 = vpop.f32.mrb[0].mxu0
    %v1744 = vadd.f32 0.0, %v1743
    %v1745 = vpop.f32.mrb[0].mxu0
    %1746 = vmatprep.mubr.f32.mxu0 0.0
    %1747 = vmatmul.mubr.f32.gmra.mrb[0].mxu0 %v1656
    %v1748 = vpop.f32.mrb[0].mxu0
    %v1749 = vadd.f32 0.0, %v1748
    %v1750 = vpop.f32.mrb[0].mxu0
    %1751 = vmatprep.mubr.f32.mxu0 0.0
    %1752 = vmatmul.mubr.f32.gmra.mrb[0].mxu0 %v1658
    %v1753 = vpop.f32.mrb[0].mxu0
    %v1754 = vadd.f32 0.0, %v1753
    %v1755 = vpop.f32.mrb[0].mxu0
    %1756 = vmatprep.mubr.f32.mxu0 0.0
    %1757 = vmatmul.mubr.f32.gmra.mrb[0].mxu0 %v1660
    %v1758 = vpop.f32.mrb[0].mxu0
    %v1759 = vadd.f32 0.0, %v1758
    %v1760 = vpop.f32.mrb[0].mxu0
    %1761 = vmatprep.mubr.f32.mxu0 0.0
    %1762 = vmatmul.mubr.f32.gmra.mrb[0].mxu0 %v1662
    %v1763 = vpop.f32.mrb[0].mxu0
    %v1764 = vadd.f32 0.0, %v1763
    %v1765 = vpop.f32.mrb[0].mxu0
    %1766 = vmatprep.mubr.f32.mxu0 0.0
    %1767 = vmatmul.mubr.f32.gmra.mrb[0].mxu0 %v1664
    %v1768 = vpop.f32.mrb[0].mxu0
    %v1769 = vadd.f32 0.0, %v1768
    %v1770 = vpop.f32.mrb[0].mxu0
    %1771 = vmatprep.mubr.f32.mxu0 0.0
    %1772 = vmatmul.mubr.f32.gmra.mrb[0].mxu0 %v1666
    %v1773 = vpop.f32.mrb[0].mxu0
    %v1774 = vadd.f32 0.0, %v1773
    %v1775 = vpop.f32.mrb[0].mxu0
    %1776 = vdwg.mxu0
    %v1777 = vmul.f32 %v1739, 0.17677669
    %v1778 = vmul.f32 %v1744, 0.17677669
    %v1779 = vmul.f32 %v1749, 0.17677669
    %v1780 = vmul.f32 %v1754, 0.17677669
    %v1781 = vmul.f32 %v1759, 0.17677669
    %v1782 = vmul.f32 %v1764, 0.17677669
    %v1783 = vmul.f32 %v1769, 0.17677669
    %v1784 = vmul.f32 %v1774, 0.17677669
    %v1785 = vadd.f32 %v1777, %v1396
    %v1786 = vadd.f32 %v1778, %v1396
    %v1787 = vadd.f32 %v1779, %v1396
    %v1788 = vadd.f32 %v1780, %v1396
    %v1789 = vadd.f32 %v1781, %v1396
    %v1790 = vadd.f32 %v1782, %v1396
    %v1791 = vadd.f32 %v1783, %v1396
    %v1792 = vadd.f32 %v1784, %v1396
    %v1793 = vsel %vm1406, %v1785, -inf
    %1794 = vmax.xlane.f32.xlu0 %v1793
    %v1795 = vpop.xlane.xlu0 %1794
    %v1796 = vsel %vm1406, %v1786, -inf
    %1797 = vmax.xlane.f32.xlu0 %v1796
    %v1798 = vpop.xlane.xlu0 %1797
    %v1799 = vsel %vm1406, %v1787, -inf
    %1800 = vmax.xlane.f32.xlu0 %v1799
    %v1801 = vpop.xlane.xlu0 %1800
    %v1802 = vsel %vm1406, %v1788, -inf
    %1803 = vmax.xlane.f32.xlu0 %v1802
    %v1804 = vpop.xlane.xlu0 %1803
    %v1805 = vsel %vm1406, %v1789, -inf
    %1806 = vmax.xlane.f32.xlu0 %v1805
    %v1807 = vpop.xlane.xlu0 %1806
    %v1808 = vsel %vm1406, %v1790, -inf
    %1809 = vmax.xlane.f32.xlu0 %v1808
    %v1810 = vpop.xlane.xlu0 %1809
    %v1811 = vsel %vm1406, %v1791, -inf
    %1812 = vmax.xlane.f32.xlu0 %v1811
    %v1813 = vpop.xlane.xlu0 %1812
    %v1814 = vsel %vm1406, %v1792, -inf
    %1815 = vmax.xlane.f32.xlu0 %v1814
    %v1816 = vpop.xlane.xlu0 %1815
    %v1817 = vsub.f32 %v1785, %v1795
    %v1818 = vsub.f32 %v1786, %v1798
    %v1819 = vsub.f32 %v1787, %v1801
    %v1820 = vsub.f32 %v1788, %v1804
    %v1821 = vsub.f32 %v1789, %v1807
    %v1822 = vsub.f32 %v1790, %v1810
    %v1823 = vsub.f32 %v1791, %v1813
    %v1824 = vsub.f32 %v1792, %v1816
    %v1825 = vmul.f32 %v1817, 1.442695
    %v1826 = vpow.pop %v1825
    %v1827 = vmul.f32 %v1818, 1.442695
    %v1828 = vpow.pop %v1827
    %v1829 = vmul.f32 %v1819, 1.442695
    %v1830 = vpow.pop %v1829
    %v1831 = vmul.f32 %v1820, 1.442695
    %v1832 = vpow.pop %v1831
    %v1833 = vmul.f32 %v1821, 1.442695
    %v1834 = vpow.pop %v1833
    %v1835 = vmul.f32 %v1822, 1.442695
    %v1836 = vpow.pop %v1835
    %v1837 = vmul.f32 %v1823, 1.442695
    %v1838 = vpow.pop %v1837
    %v1839 = vmul.f32 %v1824, 1.442695
    %v1840 = vpow.pop %v1839
    %v1841 = vsel %vm1406, %v1826, 0.0
    %1842 = vadd.xlane.f32.xlu0 %v1841
    %v1843 = vpop.xlane.xlu0 %1842
    %v1844 = vsel %vm1406, %v1828, 0.0
    %1845 = vadd.xlane.f32.xlu0 %v1844
    %v1846 = vpop.xlane.xlu0 %1845
    %v1847 = vsel %vm1406, %v1830, 0.0
    %1848 = vadd.xlane.f32.xlu0 %v1847
    %v1849 = vpop.xlane.xlu0 %1848
    %v1850 = vsel %vm1406, %v1832, 0.0
    %1851 = vadd.xlane.f32.xlu0 %v1850
    %v1852 = vpop.xlane.xlu0 %1851
    %v1853 = vsel %vm1406, %v1834, 0.0
    %1854 = vadd.xlane.f32.xlu0 %v1853
    %v1855 = vpop.xlane.xlu0 %1854
    %v1856 = vsel %vm1406, %v1836, 0.0
    %1857 = vadd.xlane.f32.xlu0 %v1856
    %v1858 = vpop.xlane.xlu0 %1857
    %v1859 = vsel %vm1406, %v1838, 0.0
    %1860 = vadd.xlane.f32.xlu0 %v1859
    %v1861 = vpop.xlane.xlu0 %1860
    %v1862 = vsel %vm1406, %v1840, 0.0
    %1863 = vadd.xlane.f32.xlu0 %v1862
    %v1864 = vpop.xlane.xlu0 %1863
    %v1865 = vrcp.pop %v1843
    %v1866 = vrcp.pop %v1846
    %v1867 = vrcp.pop %v1849
    %v1868 = vrcp.pop %v1852
    %v1869 = vrcp.pop %v1855
    %v1870 = vrcp.pop %v1858
    %v1871 = vrcp.pop %v1861
    %v1872 = vrcp.pop %v1864
    %v1873 = vmul.f32 %v1826, %v1865
    %v1874 = vmul.f32 %v1828, %v1866
    %v1875 = vmul.f32 %v1830, %v1867
    %v1876 = vmul.f32 %v1832, %v1868
    %v1877 = vmul.f32 %v1834, %v1869
    %v1878 = vmul.f32 %v1836, %v1870
    %v1879 = vmul.f32 %v1838, %v1871
    %v1880 = vmul.f32 %v1840, %v1872
    %1883 = vrot.lane.b32.xlu0 %v1241, 96
    %v1884 = vpop.permute.xlu0 %1883
    %1885 = vrot.lane.b32.xlu0 %v1245, 96
    %v1886 = vpop.permute.xlu0 %1885
    %v1890 = vsel %vm1406, %v1873, 0
    %v1893 = vsel %vm1406, %v1874, 0
    %v1896 = vsel %vm1406, %v1875, 0
    %v1899 = vsel %vm1406, %v1876, 0
    %v1902 = vsel %vm1406, %v1877, 0
    %v1905 = vsel %vm1406, %v1878, 0
    %v1908 = vsel %vm1406, %v1879, 0
    %v1911 = vsel %vm1406, %v1880, 0
    %1913 = vmatprep.subr.mxu0 0.0
    %1914 = vmatpush1.msra.mxu0 %v1884
    %1915 = vmatprep.subr.mxu0 0.0
    %1916 = vmatpush1.msra.mxu0 %v1886
    %1917 = vmatprep.subr.mxu0 0.0
    %1918 = vmatpush1.msra.mxu0 0.0
    %1919 = vmatprep.subr.mxu0 0.0
    %1920 = vmatpush1.msra.mxu0 0.0
    %1921 = vmatprep.subr.mxu0 0.0
    %1922 = vmatpush1.msra.mxu0 0.0
    %1923 = vmatprep.subr.mxu0 0.0
    %1924 = vmatpush1.msra.mxu0 0.0
    %1925 = vmatprep.subr.mxu0 0.0
    %1926 = vmatpush1.msra.mxu0 0.0
    %1927 = vmatprep.subr.mxu0 0.0
    %1928 = vmatpush1.msra.mxu0 0.0
    %1929 = vmatprep.subr.mxu0 0.0
    %1930 = vmatpush1.msra.mxu0 0.0
    %1931 = vmatprep.subr.mxu0 0.0
    %1932 = vmatpush1.msra.mxu0 0.0
    %1933 = vmatprep.subr.mxu0 0.0
    %1934 = vmatpush1.msra.mxu0 0.0
    %1935 = vmatprep.subr.mxu0 0.0
    %1936 = vmatpush1.msra.mxu0 0.0
    %1937 = vmatprep.subr.mxu0 0.0
    %1938 = vmatpush1.msra.mxu0 0.0
    %1939 = vmatprep.subr.mxu0 0.0
    %1940 = vmatpush1.msra.mxu0 0.0
    %1941 = vmatprep.subr.mxu0 0.0
    %1942 = vmatpush1.msra.mxu0 0.0
    %1943 = vmatprep.subr.mxu0 0.0
    %1944 = vmatpush1.msra.mxu0 0.0
    %1945 = vmatprep.subr.mxu0 0.0
    %1946 = vmatpush1.msra.mxu0 0.0
    %1947 = vmatprep.subr.mxu0 0.0
    %1948 = vmatpush1.msra.mxu0 0.0
    %1949 = vmatprep.subr.mxu0 0.0
    %1950 = vmatpush1.msra.mxu0 0.0
    %1951 = vmatprep.subr.mxu0 0.0
    %1952 = vmatpush1.msra.mxu0 0.0
    %1953 = vmatprep.subr.mxu0 0.0
    %1954 = vmatpush1.msra.mxu0 0.0
    %1955 = vmatprep.subr.mxu0 0.0
    %1956 = vmatpush1.msra.mxu0 0.0
    %1957 = vmatprep.subr.mxu0 0.0
    %1958 = vmatpush1.msra.mxu0 0.0
    %1959 = vmatprep.subr.mxu0 0.0
    %1960 = vmatpush1.msra.mxu0 0.0
    %1961 = vmatprep.subr.mxu0 0.0
    %1962 = vmatpush1.msra.mxu0 0.0
    %1963 = vmatprep.subr.mxu0 0.0
    %1964 = vmatpush1.msra.mxu0 0.0
    %1965 = vmatprep.subr.mxu0 0.0
    %1966 = vmatpush1.msra.mxu0 0.0
    %1967 = vmatprep.subr.mxu0 0.0
    %1968 = vmatpush1.msra.mxu0 0.0
    %1969 = vmatprep.subr.mxu0 0.0
    %1970 = vmatpush1.msra.mxu0 0.0
    %1971 = vmatprep.subr.mxu0 0.0
    %1972 = vmatpush1.msra.mxu0 0.0
    %1973 = vmatprep.subr.mxu0 0.0
    %1974 = vmatpush1.msra.mxu0 0.0
    %1975 = vmatprep.subr.mxu0 0.0
    %1976 = vmatpush1.msra.mxu0 0.0
    %1977 = vmatprep.mubr.f32.mxu0 0.0
    %1978 = vmatmul.mubr.f32.gmra.mrb[0].mxu0 %v1890
    %v1979 = vpop.f32.mrb[0].mxu0
    %v1980 = vadd.f32 0.0, %v1979
    %v1981 = vpop.f32.mrb[0].mxu0
    %1982 = vmatprep.mubr.f32.mxu0 0.0
    %1983 = vmatmul.mubr.f32.gmra.mrb[0].mxu0 %v1893
    %v1984 = vpop.f32.mrb[0].mxu0
    %v1985 = vadd.f32 0.0, %v1984
    %v1986 = vpop.f32.mrb[0].mxu0
    %1987 = vmatprep.mubr.f32.mxu0 0.0
    %1988 = vmatmul.mubr.f32.gmra.mrb[0].mxu0 %v1896
    %v1989 = vpop.f32.mrb[0].mxu0
    %v1990 = vadd.f32 0.0, %v1989
    %v1991 = vpop.f32.mrb[0].mxu0
    %1992 = vmatprep.mubr.f32.mxu0 0.0
    %1993 = vmatmul.mubr.f32.gmra.mrb[0].mxu0 %v1899
    %v1994 = vpop.f32.mrb[0].mxu0
    %v1995 = vadd.f32 0.0, %v1994
    %v1996 = vpop.f32.mrb[0].mxu0
    %1997 = vmatprep.mubr.f32.mxu0 0.0
    %1998 = vmatmul.mubr.f32.gmra.mrb[0].mxu0 %v1902
    %v1999 = vpop.f32.mrb[0].mxu0
    %v2000 = vadd.f32 0.0, %v1999
    %v2001 = vpop.f32.mrb[0].mxu0
    %2002 = vmatprep.mubr.f32.mxu0 0.0
    %2003 = vmatmul.mubr.f32.gmra.mrb[0].mxu0 %v1905
    %v2004 = vpop.f32.mrb[0].mxu0
    %v2005 = vadd.f32 0.0, %v2004
    %v2006 = vpop.f32.mrb[0].mxu0
    %2007 = vmatprep.mubr.f32.mxu0 0.0
    %2008 = vmatmul.mubr.f32.gmra.mrb[0].mxu0 %v1908
    %v2009 = vpop.f32.mrb[0].mxu0
    %v2010 = vadd.f32 0.0, %v2009
    %v2011 = vpop.f32.mrb[0].mxu0
    %2012 = vmatprep.mubr.f32.mxu0 0.0
    %2013 = vmatmul.mubr.f32.gmra.mrb[0].mxu0 %v1911
    %v2014 = vpop.f32.mrb[0].mxu0
    %v2015 = vadd.f32 0.0, %v2014
    %v2016 = vpop.f32.mrb[0].mxu0
    %2017 = vdwg.mxu0
    %v2018 = vpack.c.bf16 %v1985, %v1980
    %v2019 = vpack.c.bf16 %v1995, %v1990
    %v2020 = vpack.c.bf16 %v2005, %v2000
    %v2021 = vpack.c.bf16 %v2015, %v2010
    %v2022 = vld [vmem:[%s10 + $0x10] sm:$0xf]
    %v2023 = vld [vmem:[%s10 + $0x14] sm:$0xf]
    %v2024 = vld [vmem:[%s10 + $0x18] sm:$0xf]
    %v2025 = vld [vmem:[%s10 + $0x1c] sm:$0xf]
    %v2030 = vunpack.c.l.b16 %v2022
    %v2031 = vunpack.c.l.b16 %v2023
    %v2032 = vunpack.c.l.b16 %v2024
    %v2033 = vunpack.c.l.b16 %v2025
    %v2034 = vpack.c.b16 %v2031, %v2030
    %v2035 = vpack.c.b16 %v2033, %v2032
    %v2039 = vsel %vm1248, %v2018, 0
    %v2042 = vsel %vm1248, %v2019, 0
    %v2045 = vsel %vm1248, %v2020, 0
    %v2048 = vsel %vm1248, %v2021, 0
    %2050 = vmatprep.subr.bf16.mxu0 0
    %2051 = vmatpush1.bf16.msra.mxu0 %v2034
    %2052 = vmatprep.subr.bf16.mxu0 0
    %2053 = vmatpush1.bf16.msra.mxu0 %v2035
    %2054 = vmatprep.subr.bf16.mxu0 0
    %2055 = vmatpush1.bf16.msra.mxu0 0
    %2056 = vmatprep.subr.bf16.mxu0 0
    %2057 = vmatpush1.bf16.msra.mxu0 0
    %2058 = vmatprep.subr.bf16.mxu0 0
    %2059 = vmatpush1.bf16.msra.mxu0 0
    %2060 = vmatprep.subr.bf16.mxu0 0
    %2061 = vmatpush1.bf16.msra.mxu0 0
    %2062 = vmatprep.subr.bf16.mxu0 0
    %2063 = vmatpush1.bf16.msra.mxu0 0
    %2064 = vmatprep.subr.bf16.mxu0 0
    %2065 = vmatpush1.bf16.msra.mxu0 0
    %2066 = vmatprep.subr.bf16.mxu0 0
    %2067 = vmatpush1.bf16.msra.mxu0 0
    %2068 = vmatprep.subr.bf16.mxu0 0
    %2069 = vmatpush1.bf16.msra.mxu0 0
    %2070 = vmatprep.subr.bf16.mxu0 0
    %2071 = vmatpush1.bf16.msra.mxu0 0
    %2072 = vmatprep.subr.bf16.mxu0 0
    %2073 = vmatpush1.bf16.msra.mxu0 0
    %2074 = vmatprep.subr.bf16.mxu0 0
    %2075 = vmatpush1.bf16.msra.mxu0 0
    %2076 = vmatprep.subr.bf16.mxu0 0
    %2077 = vmatpush1.bf16.msra.mxu0 0
    %2078 = vmatprep.subr.bf16.mxu0 0
    %2079 = vmatpush1.bf16.msra.mxu0 0
    %2080 = vmatprep.subr.bf16.mxu0 0
    %2081 = vmatpush1.bf16.msra.mxu0 0
    %2082 = vmatprep.mubr.bf16.mxu0 0
    %2083 = vmatmul.mubr.bf16.gmra.mrb[0].mxu0 %v2039
    %v2084 = vpop.f32.mrb[0].mxu0
    %v2085 = vadd.f32 0.0, %v2084
    %v2086 = vpop.f32.mrb[0].mxu0
    %v2087 = vpop.f32.mrb[0].mxu0
    %v2088 = vadd.f32 0.0, %v2087
    %v2089 = vpop.f32.mrb[0].mxu0
    %2090 = vmatprep.mubr.bf16.mxu0 0
    %2091 = vmatmul.mubr.bf16.gmra.mrb[0].mxu0 %v2042
    %v2092 = vpop.f32.mrb[0].mxu0
    %v2093 = vadd.f32 0.0, %v2092
    %v2094 = vpop.f32.mrb[0].mxu0
    %v2095 = vpop.f32.mrb[0].mxu0
    %v2096 = vadd.f32 0.0, %v2095
    %v2097 = vpop.f32.mrb[0].mxu0
    %2098 = vmatprep.mubr.bf16.mxu0 0
    %2099 = vmatmul.mubr.bf16.gmra.mrb[0].mxu0 %v2045
    %v2100 = vpop.f32.mrb[0].mxu0
    %v2101 = vadd.f32 0.0, %v2100
    %v2102 = vpop.f32.mrb[0].mxu0
    %v2103 = vpop.f32.mrb[0].mxu0
    %v2104 = vadd.f32 0.0, %v2103
    %v2105 = vpop.f32.mrb[0].mxu0
    %2106 = vmatprep.mubr.bf16.mxu0 0
    %2107 = vmatmul.mubr.bf16.gmra.mrb[0].mxu0 %v2048
    %v2108 = vpop.f32.mrb[0].mxu0
    %v2109 = vadd.f32 0.0, %v2108
    %v2110 = vpop.f32.mrb[0].mxu0
    %v2111 = vpop.f32.mrb[0].mxu0
    %v2112 = vadd.f32 0.0, %v2111
    %v2113 = vpop.f32.mrb[0].mxu0
    %2114 = vdwg.mxu0
    %v2119 = vunpack.c.l.b16 %v1628
    %v2120 = vunpack.c.l.b16 %v1629
    %v2121 = vunpack.c.l.b16 %v1630
    %v2122 = vunpack.c.l.b16 %v1631
    %v2123 = vpack.c.b16 %v2120, %v2119
    %v2124 = vpack.c.b16 %v2122, %v2121
    %v2128 = vsel %vm1248, %v1624, 0
    %v2131 = vsel %vm1248, %v1625, 0
    %v2134 = vsel %vm1248, %v1626, 0
    %v2137 = vsel %vm1248, %v1627, 0
    %2139 = vmatprep.subr.bf16.mxu0 0
    %2140 = vmatpush1.bf16.msra.mxu0 %v2123
    %2141 = vmatprep.subr.bf16.mxu0 0
    %2142 = vmatpush1.bf16.msra.mxu0 %v2124
    %2143 = vmatprep.subr.bf16.mxu0 0
    %2144 = vmatpush1.bf16.msra.mxu0 0
    %2145 = vmatprep.subr.bf16.mxu0 0
    %2146 = vmatpush1.bf16.msra.mxu0 0
    %2147 = vmatprep.subr.bf16.mxu0 0
    %2148 = vmatpush1.bf16.msra.mxu0 0
    %2149 = vmatprep.subr.bf16.mxu0 0
    %2150 = vmatpush1.bf16.msra.mxu0 0
    %2151 = vmatprep.subr.bf16.mxu0 0
    %2152 = vmatpush1.bf16.msra.mxu0 0
    %2153 = vmatprep.subr.bf16.mxu0 0
    %2154 = vmatpush1.bf16.msra.mxu0 0
    %2155 = vmatprep.subr.bf16.mxu0 0
    %2156 = vmatpush1.bf16.msra.mxu0 0
    %2157 = vmatprep.subr.bf16.mxu0 0
    %2158 = vmatpush1.bf16.msra.mxu0 0
    %2159 = vmatprep.subr.bf16.mxu0 0
    %2160 = vmatpush1.bf16.msra.mxu0 0
    %2161 = vmatprep.subr.bf16.mxu0 0
    %2162 = vmatpush1.bf16.msra.mxu0 0
    %2163 = vmatprep.subr.bf16.mxu0 0
    %2164 = vmatpush1.bf16.msra.mxu0 0
    %2165 = vmatprep.subr.bf16.mxu0 0
    %2166 = vmatpush1.bf16.msra.mxu0 0
    %2167 = vmatprep.subr.bf16.mxu0 0
    %2168 = vmatpush1.bf16.msra.mxu0 0
    %2169 = vmatprep.subr.bf16.mxu0 0
    %2170 = vmatpush1.bf16.msra.mxu0 0
    %2171 = vmatprep.mubr.bf16.mxu0 0
    %2172 = vmatmul.mubr.bf16.gmra.mrb[0].mxu0 %v2128
    %v2173 = vpop.f32.mrb[0].mxu0
    %v2174 = vadd.f32 %v2085, %v2173
    %v2175 = vpop.f32.mrb[0].mxu0
    %v2176 = vpop.f32.mrb[0].mxu0
    %v2177 = vadd.f32 %v2088, %v2176
    %v2178 = vpop.f32.mrb[0].mxu0
    %2179 = vmatprep.mubr.bf16.mxu0 0
    %2180 = vmatmul.mubr.bf16.gmra.mrb[0].mxu0 %v2131
    %v2181 = vpop.f32.mrb[0].mxu0
    %v2182 = vadd.f32 %v2093, %v2181
    %v2183 = vpop.f32.mrb[0].mxu0
    %v2184 = vpop.f32.mrb[0].mxu0
    %v2185 = vadd.f32 %v2096, %v2184
    %v2186 = vpop.f32.mrb[0].mxu0
    %2187 = vmatprep.mubr.bf16.mxu0 0
    %2188 = vmatmul.mubr.bf16.gmra.mrb[0].mxu0 %v2134
    %v2189 = vpop.f32.mrb[0].mxu0
    %v2190 = vadd.f32 %v2101, %v2189
    %v2191 = vpop.f32.mrb[0].mxu0
    %v2192 = vpop.f32.mrb[0].mxu0
    %v2193 = vadd.f32 %v2104, %v2192
    %v2194 = vpop.f32.mrb[0].mxu0
    %2195 = vmatprep.mubr.bf16.mxu0 0
    %2196 = vmatmul.mubr.bf16.gmra.mrb[0].mxu0 %v2137
    %v2197 = vpop.f32.mrb[0].mxu0
    %v2198 = vadd.f32 %v2109, %v2197
    %v2199 = vpop.f32.mrb[0].mxu0
    %v2200 = vpop.f32.mrb[0].mxu0
    %v2201 = vadd.f32 %v2112, %v2200
    %v2202 = vpop.f32.mrb[0].mxu0
    %2203 = vdwg.mxu0
    %2204 = vrot.lane.b32.xlu0 %v1077, 64
    %v2205 = vpop.permute.xlu0 %2204
    %2206 = vrot.lane.b32.xlu0 %v1080, 64
    %v2207 = vpop.permute.xlu0 %2206
    %2208 = vrot.lane.b32.xlu0 %v1085, 64
    %v2209 = vpop.permute.xlu0 %2208
    %2210 = vrot.lane.b32.xlu0 %v1088, 64
    %v2211 = vpop.permute.xlu0 %2210
    %2212 = vrot.lane.b32.xlu0 %v1093, 64
    %v2213 = vpop.permute.xlu0 %2212
    %2214 = vrot.lane.b32.xlu0 %v1096, 64
    %v2215 = vpop.permute.xlu0 %2214
    %2216 = vrot.lane.b32.xlu0 %v1101, 64
    %v2217 = vpop.permute.xlu0 %2216
    %2218 = vrot.lane.b32.xlu0 %v1104, 64
    %v2219 = vpop.permute.xlu0 %2218
    %2220 = vrot.lane.b32.xlu0 %v1239, 64
    %v2221 = vpop.permute.xlu0 %2220
    %2222 = vrot.lane.b32.xlu0 %v1243, 64
    %v2223 = vpop.permute.xlu0 %2222
    %v2224 = vsel %vm1248, %v2205, 0
    %v2226 = vsel %vm1248, %v2207, 0
    %v2228 = vsel %vm1248, %v2209, 0
    %v2230 = vsel %vm1248, %v2211, 0
    %v2232 = vsel %vm1248, %v2213, 0
    %v2234 = vsel %vm1248, %v2215, 0
    %v2236 = vsel %vm1248, %v2217, 0
    %v2238 = vsel %vm1248, %v2219, 0
    %v2240 = vsel %vm1248, %v2221, 0
    %v2242 = vsel %vm1248, %v2223, 0
    %2244 = vmatprep.subr.mxu0 0.0
    %2245 = vmatpush1.xpose.msra.mxu0 %v2240
    %2246 = vmatprep.subr.mxu0 0.0
    %2247 = vmatpush1.xpose.msra.mxu0 %v2242
    %2248 = vmatprep.subr.mxu0 0.0
    %2249 = vmatpush1.xpose.msra.mxu0 0.0
    %2250 = vmatprep.subr.mxu0 0.0
    %2251 = vmatpush1.xpose.msra.mxu0 0.0
    %2252 = vmatprep.subr.mxu0 0.0
    %2253 = vmatpush1.xpose.msra.mxu0 0.0
    %2254 = vmatprep.subr.mxu0 0.0
    %2255 = vmatpush1.xpose.msra.mxu0 0.0
    %2256 = vmatprep.subr.mxu0 0.0
    %2257 = vmatpush1.xpose.msra.mxu0 0.0
    %2258 = vmatprep.subr.mxu0 0.0
    %2259 = vmatpush1.xpose.msra.mxu0 0.0
    %2260 = vmatprep.subr.mxu0 0.0
    %2261 = vmatpush1.xpose.msra.mxu0 0.0
    %2262 = vmatprep.subr.mxu0 0.0
    %2263 = vmatpush1.xpose.msra.mxu0 0.0
    %2264 = vmatprep.subr.mxu0 0.0
    %2265 = vmatpush1.xpose.msra.mxu0 0.0
    %2266 = vmatprep.subr.mxu0 0.0
    %2267 = vmatpush1.xpose.msra.mxu0 0.0
    %2268 = vmatprep.subr.mxu0 0.0
    %2269 = vmatpush1.xpose.msra.mxu0 0.0
    %2270 = vmatprep.subr.mxu0 0.0
    %2271 = vmatpush1.xpose.msra.mxu0 0.0
    %2272 = vmatprep.subr.mxu0 0.0
    %2273 = vmatpush1.xpose.msra.mxu0 0.0
    %2274 = vmatprep.subr.mxu0 0.0
    %2275 = vmatpush1.xpose.msra.mxu0 0.0
    %2276 = vmatprep.subr.mxu0 0.0
    %2277 = vmatpush1.xpose.msra.mxu0 0.0
    %2278 = vmatprep.subr.mxu0 0.0
    %2279 = vmatpush1.xpose.msra.mxu0 0.0
    %2280 = vmatprep.subr.mxu0 0.0
    %2281 = vmatpush1.xpose.msra.mxu0 0.0
    %2282 = vmatprep.subr.mxu0 0.0
    %2283 = vmatpush1.xpose.msra.mxu0 0.0
    %2284 = vmatprep.subr.mxu0 0.0
    %2285 = vmatpush1.xpose.msra.mxu0 0.0
    %2286 = vmatprep.subr.mxu0 0.0
    %2287 = vmatpush1.xpose.msra.mxu0 0.0
    %2288 = vmatprep.subr.mxu0 0.0
    %2289 = vmatpush1.xpose.msra.mxu0 0.0
    %2290 = vmatprep.subr.mxu0 0.0
    %2291 = vmatpush1.xpose.msra.mxu0 0.0
    %2292 = vmatprep.subr.mxu0 0.0
    %2293 = vmatpush1.xpose.msra.mxu0 0.0
    %2294 = vmatprep.subr.mxu0 0.0
    %2295 = vmatpush1.xpose.msra.mxu0 0.0
    %2296 = vmatprep.subr.mxu0 0.0
    %2297 = vmatpush1.xpose.msra.mxu0 0.0
    %2298 = vmatprep.subr.mxu0 0.0
    %2299 = vmatpush1.xpose.msra.mxu0 0.0
    %2300 = vmatprep.subr.mxu0 0.0
    %2301 = vmatpush1.xpose.msra.mxu0 0.0
    %2302 = vmatprep.subr.mxu0 0.0
    %2303 = vmatpush1.xpose.msra.mxu0 0.0
    %2304 = vmatprep.subr.mxu0 0.0
    %2305 = vmatpush1.xpose.msra.mxu0 0.0
    %2306 = vmatprep.subr.mxu0 0.0
    %2307 = vmatpush1.xpose.msra.mxu0 0.0
    %2308 = vmatprep.mubr.f32.mxu0 0.0
    %2309 = vmatmul.mubr.f32.gmra.mrb[0].mxu0 %v2224
    %v2310 = vpop.f32.mrb[0].mxu0
    %v2311 = vadd.f32 0.0, %v2310
    %v2312 = vpop.f32.mrb[0].mxu0
    %2313 = vmatprep.mubr.f32.mxu0 0.0
    %2314 = vmatmul.mubr.f32.gmra.mrb[0].mxu0 %v2226
    %v2315 = vpop.f32.mrb[0].mxu0
    %v2316 = vadd.f32 0.0, %v2315
    %v2317 = vpop.f32.mrb[0].mxu0
    %2318 = vmatprep.mubr.f32.mxu0 0.0
    %2319 = vmatmul.mubr.f32.gmra.mrb[0].mxu0 %v2228
    %v2320 = vpop.f32.mrb[0].mxu0
    %v2321 = vadd.f32 0.0, %v2320
    %v2322 = vpop.f32.mrb[0].mxu0
    %2323 = vmatprep.mubr.f32.mxu0 0.0
    %2324 = vmatmul.mubr.f32.gmra.mrb[0].mxu0 %v2230
    %v2325 = vpop.f32.mrb[0].mxu0
    %v2326 = vadd.f32 0.0, %v2325
    %v2327 = vpop.f32.mrb[0].mxu0
    %2328 = vmatprep.mubr.f32.mxu0 0.0
    %2329 = vmatmul.mubr.f32.gmra.mrb[0].mxu0 %v2232
    %v2330 = vpop.f32.mrb[0].mxu0
    %v2331 = vadd.f32 0.0, %v2330
    %v2332 = vpop.f32.mrb[0].mxu0
    %2333 = vmatprep.mubr.f32.mxu0 0.0
    %2334 = vmatmul.mubr.f32.gmra.mrb[0].mxu0 %v2234
    %v2335 = vpop.f32.mrb[0].mxu0
    %v2336 = vadd.f32 0.0, %v2335
    %v2337 = vpop.f32.mrb[0].mxu0
    %2338 = vmatprep.mubr.f32.mxu0 0.0
    %2339 = vmatmul.mubr.f32.gmra.mrb[0].mxu0 %v2236
    %v2340 = vpop.f32.mrb[0].mxu0
    %v2341 = vadd.f32 0.0, %v2340
    %v2342 = vpop.f32.mrb[0].mxu0
    %2343 = vmatprep.mubr.f32.mxu0 0.0
    %2344 = vmatmul.mubr.f32.gmra.mrb[0].mxu0 %v2238
    %v2345 = vpop.f32.mrb[0].mxu0
    %v2346 = vadd.f32 0.0, %v2345
    %v2347 = vpop.f32.mrb[0].mxu0
    %2348 = vdwg.mxu0
    %v2349 = vmul.f32 %v2311, 0.17677669
    %v2350 = vmul.f32 %v2316, 0.17677669
    %v2351 = vmul.f32 %v2321, 0.17677669
    %v2352 = vmul.f32 %v2326, 0.17677669
    %v2353 = vmul.f32 %v2331, 0.17677669
    %v2354 = vmul.f32 %v2336, 0.17677669
    %v2355 = vmul.f32 %v2341, 0.17677669
    %v2356 = vmul.f32 %v2346, 0.17677669
    %v2357 = vadd.f32 %v2349, %v1396
    %v2358 = vadd.f32 %v2350, %v1396
    %v2359 = vadd.f32 %v2351, %v1396
    %v2360 = vadd.f32 %v2352, %v1396
    %v2361 = vadd.f32 %v2353, %v1396
    %v2362 = vadd.f32 %v2354, %v1396
    %v2363 = vadd.f32 %v2355, %v1396
    %v2364 = vadd.f32 %v2356, %v1396
    %v2365 = vsel %vm1406, %v2357, -inf
    %2366 = vmax.xlane.f32.xlu0 %v2365
    %v2367 = vpop.xlane.xlu0 %2366
    %v2368 = vsel %vm1406, %v2358, -inf
    %2369 = vmax.xlane.f32.xlu0 %v2368
    %v2370 = vpop.xlane.xlu0 %2369
    %v2371 = vsel %vm1406, %v2359, -inf
    %2372 = vmax.xlane.f32.xlu0 %v2371
    %v2373 = vpop.xlane.xlu0 %2372
    %v2374 = vsel %vm1406, %v2360, -inf
    %2375 = vmax.xlane.f32.xlu0 %v2374
    %v2376 = vpop.xlane.xlu0 %2375
    %v2377 = vsel %vm1406, %v2361, -inf
    %2378 = vmax.xlane.f32.xlu0 %v2377
    %v2379 = vpop.xlane.xlu0 %2378
    %v2380 = vsel %vm1406, %v2362, -inf
    %2381 = vmax.xlane.f32.xlu0 %v2380
    %v2382 = vpop.xlane.xlu0 %2381
    %v2383 = vsel %vm1406, %v2363, -inf
    %2384 = vmax.xlane.f32.xlu0 %v2383
    %v2385 = vpop.xlane.xlu0 %2384
    %v2386 = vsel %vm1406, %v2364, -inf
    %2387 = vmax.xlane.f32.xlu0 %v2386
    %v2388 = vpop.xlane.xlu0 %2387
    %v2389 = vsub.f32 %v2357, %v2367
    %v2390 = vsub.f32 %v2358, %v2370
    %v2391 = vsub.f32 %v2359, %v2373
    %v2392 = vsub.f32 %v2360, %v2376
    %v2393 = vsub.f32 %v2361, %v2379
    %v2394 = vsub.f32 %v2362, %v2382
    %v2395 = vsub.f32 %v2363, %v2385
    %v2396 = vsub.f32 %v2364, %v2388
    %v2397 = vmul.f32 %v2389, 1.442695
    %v2398 = vpow.pop %v2397
    %v2399 = vmul.f32 %v2390, 1.442695
    %v2400 = vpow.pop %v2399
    %v2401 = vmul.f32 %v2391, 1.442695
    %v2402 = vpow.pop %v2401
    %v2403 = vmul.f32 %v2392, 1.442695
    %v2404 = vpow.pop %v2403
    %v2405 = vmul.f32 %v2393, 1.442695
    %v2406 = vpow.pop %v2405
    %v2407 = vmul.f32 %v2394, 1.442695
    %v2408 = vpow.pop %v2407
    %v2409 = vmul.f32 %v2395, 1.442695
    %v2410 = vpow.pop %v2409
    %v2411 = vmul.f32 %v2396, 1.442695
    %v2412 = vpow.pop %v2411
    %v2413 = vsel %vm1406, %v2398, 0.0
    %2414 = vadd.xlane.f32.xlu0 %v2413
    %v2415 = vpop.xlane.xlu0 %2414
    %v2416 = vsel %vm1406, %v2400, 0.0
    %2417 = vadd.xlane.f32.xlu0 %v2416
    %v2418 = vpop.xlane.xlu0 %2417
    %v2419 = vsel %vm1406, %v2402, 0.0
    %2420 = vadd.xlane.f32.xlu0 %v2419
    %v2421 = vpop.xlane.xlu0 %2420
    %v2422 = vsel %vm1406, %v2404, 0.0
    %2423 = vadd.xlane.f32.xlu0 %v2422
    %v2424 = vpop.xlane.xlu0 %2423
    %v2425 = vsel %vm1406, %v2406, 0.0
    %2426 = vadd.xlane.f32.xlu0 %v2425
    %v2427 = vpop.xlane.xlu0 %2426
    %v2428 = vsel %vm1406, %v2408, 0.0
    %2429 = vadd.xlane.f32.xlu0 %v2428
    %v2430 = vpop.xlane.xlu0 %2429
    %v2431 = vsel %vm1406, %v2410, 0.0
    %2432 = vadd.xlane.f32.xlu0 %v2431
    %v2433 = vpop.xlane.xlu0 %2432
    %v2434 = vsel %vm1406, %v2412, 0.0
    %2435 = vadd.xlane.f32.xlu0 %v2434
    %v2436 = vpop.xlane.xlu0 %2435
    %v2437 = vrcp.pop %v2415
    %v2438 = vrcp.pop %v2418
    %v2439 = vrcp.pop %v2421
    %v2440 = vrcp.pop %v2424
    %v2441 = vrcp.pop %v2427
    %v2442 = vrcp.pop %v2430
    %v2443 = vrcp.pop %v2433
    %v2444 = vrcp.pop %v2436
    %v2445 = vmul.f32 %v2398, %v2437
    %v2446 = vmul.f32 %v2400, %v2438
    %v2447 = vmul.f32 %v2402, %v2439
    %v2448 = vmul.f32 %v2404, %v2440
    %v2449 = vmul.f32 %v2406, %v2441
    %v2450 = vmul.f32 %v2408, %v2442
    %v2451 = vmul.f32 %v2410, %v2443
    %v2452 = vmul.f32 %v2412, %v2444
    %2453 = vrot.lane.b32.xlu0 %v1241, 64
    %v2454 = vpop.permute.xlu0 %2453
    %2455 = vrot.lane.b32.xlu0 %v1245, 64
    %v2456 = vpop.permute.xlu0 %2455
    %v2460 = vsel %vm1406, %v2445, 0
    %v2463 = vsel %vm1406, %v2446, 0
    %v2466 = vsel %vm1406, %v2447, 0
    %v2469 = vsel %vm1406, %v2448, 0
    %v2472 = vsel %vm1406, %v2449, 0
    %v2475 = vsel %vm1406, %v2450, 0
    %v2478 = vsel %vm1406, %v2451, 0
    %v2481 = vsel %vm1406, %v2452, 0
    %2483 = vmatprep.subr.mxu0 0.0
    %2484 = vmatpush1.msra.mxu0 %v2454
    %2485 = vmatprep.subr.mxu0 0.0
    %2486 = vmatpush1.msra.mxu0 %v2456
    %2487 = vmatprep.subr.mxu0 0.0
    %2488 = vmatpush1.msra.mxu0 0.0
    %2489 = vmatprep.subr.mxu0 0.0
    %2490 = vmatpush1.msra.mxu0 0.0
    %2491 = vmatprep.subr.mxu0 0.0
    %2492 = vmatpush1.msra.mxu0 0.0
    %2493 = vmatprep.subr.mxu0 0.0
    %2494 = vmatpush1.msra.mxu0 0.0
    %2495 = vmatprep.subr.mxu0 0.0
    %2496 = vmatpush1.msra.mxu0 0.0
    %2497 = vmatprep.subr.mxu0 0.0
    %2498 = vmatpush1.msra.mxu0 0.0
    %2499 = vmatprep.subr.mxu0 0.0
    %2500 = vmatpush1.msra.mxu0 0.0
    %2501 = vmatprep.subr.mxu0 0.0
    %2502 = vmatpush1.msra.mxu0 0.0
    %2503 = vmatprep.subr.mxu0 0.0
    %2504 = vmatpush1.msra.mxu0 0.0
    %2505 = vmatprep.subr.mxu0 0.0
    %2506 = vmatpush1.msra.mxu0 0.0
    %2507 = vmatprep.subr.mxu0 0.0
    %2508 = vmatpush1.msra.mxu0 0.0
    %2509 = vmatprep.subr.mxu0 0.0
    %2510 = vmatpush1.msra.mxu0 0.0
    %2511 = vmatprep.subr.mxu0 0.0
    %2512 = vmatpush1.msra.mxu0 0.0
    %2513 = vmatprep.subr.mxu0 0.0
    %2514 = vmatpush1.msra.mxu0 0.0
    %2515 = vmatprep.subr.mxu0 0.0
    %2516 = vmatpush1.msra.mxu0 0.0
    %2517 = vmatprep.subr.mxu0 0.0
    %2518 = vmatpush1.msra.mxu0 0.0
    %2519 = vmatprep.subr.mxu0 0.0
    %2520 = vmatpush1.msra.mxu0 0.0
    %2521 = vmatprep.subr.mxu0 0.0
    %2522 = vmatpush1.msra.mxu0 0.0
    %2523 = vmatprep.subr.mxu0 0.0
    %2524 = vmatpush1.msra.mxu0 0.0
    %2525 = vmatprep.subr.mxu0 0.0
    %2526 = vmatpush1.msra.mxu0 0.0
    %2527 = vmatprep.subr.mxu0 0.0
    %2528 = vmatpush1.msra.mxu0 0.0
    %2529 = vmatprep.subr.mxu0 0.0
    %2530 = vmatpush1.msra.mxu0 0.0
    %2531 = vmatprep.subr.mxu0 0.0
    %2532 = vmatpush1.msra.mxu0 0.0
    %2533 = vmatprep.subr.mxu0 0.0
    %2534 = vmatpush1.msra.mxu0 0.0
    %2535 = vmatprep.subr.mxu0 0.0
    %2536 = vmatpush1.msra.mxu0 0.0
    %2537 = vmatprep.subr.mxu0 0.0
    %2538 = vmatpush1.msra.mxu0 0.0
    %2539 = vmatprep.subr.mxu0 0.0
    %2540 = vmatpush1.msra.mxu0 0.0
    %2541 = vmatprep.subr.mxu0 0.0
    %2542 = vmatpush1.msra.mxu0 0.0
    %2543 = vmatprep.subr.mxu0 0.0
    %2544 = vmatpush1.msra.mxu0 0.0
    %2545 = vmatprep.subr.mxu0 0.0
    %2546 = vmatpush1.msra.mxu0 0.0
    %2547 = vmatprep.mubr.f32.mxu0 0.0
    %2548 = vmatmul.mubr.f32.gmra.mrb[0].mxu0 %v2460
    %v2549 = vpop.f32.mrb[0].mxu0
    %v2550 = vadd.f32 0.0, %v2549
    %v2551 = vpop.f32.mrb[0].mxu0
    %2552 = vmatprep.mubr.f32.mxu0 0.0
    %2553 = vmatmul.mubr.f32.gmra.mrb[0].mxu0 %v2463
    %v2554 = vpop.f32.mrb[0].mxu0
    %v2555 = vadd.f32 0.0, %v2554
    %v2556 = vpop.f32.mrb[0].mxu0
    %2557 = vmatprep.mubr.f32.mxu0 0.0
    %2558 = vmatmul.mubr.f32.gmra.mrb[0].mxu0 %v2466
    %v2559 = vpop.f32.mrb[0].mxu0
    %v2560 = vadd.f32 0.0, %v2559
    %v2561 = vpop.f32.mrb[0].mxu0
    %2562 = vmatprep.mubr.f32.mxu0 0.0
    %2563 = vmatmul.mubr.f32.gmra.mrb[0].mxu0 %v2469
    %v2564 = vpop.f32.mrb[0].mxu0
    %v2565 = vadd.f32 0.0, %v2564
    %v2566 = vpop.f32.mrb[0].mxu0
    %2567 = vmatprep.mubr.f32.mxu0 0.0
    %2568 = vmatmul.mubr.f32.gmra.mrb[0].mxu0 %v2472
    %v2569 = vpop.f32.mrb[0].mxu0
    %v2570 = vadd.f32 0.0, %v2569
    %v2571 = vpop.f32.mrb[0].mxu0
    %2572 = vmatprep.mubr.f32.mxu0 0.0
    %2573 = vmatmul.mubr.f32.gmra.mrb[0].mxu0 %v2475
    %v2574 = vpop.f32.mrb[0].mxu0
    %v2575 = vadd.f32 0.0, %v2574
    %v2576 = vpop.f32.mrb[0].mxu0
    %2577 = vmatprep.mubr.f32.mxu0 0.0
    %2578 = vmatmul.mubr.f32.gmra.mrb[0].mxu0 %v2478
    %v2579 = vpop.f32.mrb[0].mxu0
    %v2580 = vadd.f32 0.0, %v2579
    %v2581 = vpop.f32.mrb[0].mxu0
    %2582 = vmatprep.mubr.f32.mxu0 0.0
    %2583 = vmatmul.mubr.f32.gmra.mrb[0].mxu0 %v2481
    %v2584 = vpop.f32.mrb[0].mxu0
    %v2585 = vadd.f32 0.0, %v2584
    %v2586 = vpop.f32.mrb[0].mxu0
    %2587 = vdwg.mxu0
    %v2588 = vpack.c.bf16 %v2555, %v2550
    %v2589 = vpack.c.bf16 %v2565, %v2560
    %v2590 = vpack.c.bf16 %v2575, %v2570
    %v2591 = vpack.c.bf16 %v2585, %v2580
    %v2592 = vld [vmem:[%s10 + $0x20] sm:$0xf]
    %v2593 = vld [vmem:[%s10 + $0x24] sm:$0xf]
    %v2594 = vld [vmem:[%s10 + $0x28] sm:$0xf]
    %v2595 = vld [vmem:[%s10 + $0x2c] sm:$0xf]
    %v2600 = vunpack.c.l.b16 %v2592
    %v2601 = vunpack.c.l.b16 %v2593
    %v2602 = vunpack.c.l.b16 %v2594
    %v2603 = vunpack.c.l.b16 %v2595
    %v2604 = vpack.c.b16 %v2601, %v2600
    %v2605 = vpack.c.b16 %v2603, %v2602
    %v2609 = vsel %vm1248, %v2588, 0
    %v2612 = vsel %vm1248, %v2589, 0
    %v2615 = vsel %vm1248, %v2590, 0
    %v2618 = vsel %vm1248, %v2591, 0
    %2620 = vmatprep.subr.bf16.mxu0 0
    %2621 = vmatpush1.bf16.msra.mxu0 %v2604
    %2622 = vmatprep.subr.bf16.mxu0 0
    %2623 = vmatpush1.bf16.msra.mxu0 %v2605
    %2624 = vmatprep.subr.bf16.mxu0 0
    %2625 = vmatpush1.bf16.msra.mxu0 0
    %2626 = vmatprep.subr.bf16.mxu0 0
    %2627 = vmatpush1.bf16.msra.mxu0 0
    %2628 = vmatprep.subr.bf16.mxu0 0
    %2629 = vmatpush1.bf16.msra.mxu0 0
    %2630 = vmatprep.subr.bf16.mxu0 0
    %2631 = vmatpush1.bf16.msra.mxu0 0
    %2632 = vmatprep.subr.bf16.mxu0 0
    %2633 = vmatpush1.bf16.msra.mxu0 0
    %2634 = vmatprep.subr.bf16.mxu0 0
    %2635 = vmatpush1.bf16.msra.mxu0 0
    %2636 = vmatprep.subr.bf16.mxu0 0
    %2637 = vmatpush1.bf16.msra.mxu0 0
    %2638 = vmatprep.subr.bf16.mxu0 0
    %2639 = vmatpush1.bf16.msra.mxu0 0
    %2640 = vmatprep.subr.bf16.mxu0 0
    %2641 = vmatpush1.bf16.msra.mxu0 0
    %2642 = vmatprep.subr.bf16.mxu0 0
    %2643 = vmatpush1.bf16.msra.mxu0 0
    %2644 = vmatprep.subr.bf16.mxu0 0
    %2645 = vmatpush1.bf16.msra.mxu0 0
    %2646 = vmatprep.subr.bf16.mxu0 0
    %2647 = vmatpush1.bf16.msra.mxu0 0
    %2648 = vmatprep.subr.bf16.mxu0 0
    %2649 = vmatpush1.bf16.msra.mxu0 0
    %2650 = vmatprep.subr.bf16.mxu0 0
    %2651 = vmatpush1.bf16.msra.mxu0 0
    %2652 = vmatprep.mubr.bf16.mxu0 0
    %2653 = vmatmul.mubr.bf16.gmra.mrb[0].mxu0 %v2609
    %v2654 = vpop.f32.mrb[0].mxu0
    %v2655 = vadd.f32 0.0, %v2654
    %v2656 = vpop.f32.mrb[0].mxu0
    %v2657 = vpop.f32.mrb[0].mxu0
    %v2658 = vadd.f32 0.0, %v2657
    %v2659 = vpop.f32.mrb[0].mxu0
    %2660 = vmatprep.mubr.bf16.mxu0 0
    %2661 = vmatmul.mubr.bf16.gmra.mrb[0].mxu0 %v2612
    %v2662 = vpop.f32.mrb[0].mxu0
    %v2663 = vadd.f32 0.0, %v2662
    %v2664 = vpop.f32.mrb[0].mxu0
    %v2665 = vpop.f32.mrb[0].mxu0
    %v2666 = vadd.f32 0.0, %v2665
    %v2667 = vpop.f32.mrb[0].mxu0
    %2668 = vmatprep.mubr.bf16.mxu0 0
    %2669 = vmatmul.mubr.bf16.gmra.mrb[0].mxu0 %v2615
    %v2670 = vpop.f32.mrb[0].mxu0
    %v2671 = vadd.f32 0.0, %v2670
    %v2672 = vpop.f32.mrb[0].mxu0
    %v2673 = vpop.f32.mrb[0].mxu0
    %v2674 = vadd.f32 0.0, %v2673
    %v2675 = vpop.f32.mrb[0].mxu0
    %2676 = vmatprep.mubr.bf16.mxu0 0
    %2677 = vmatmul.mubr.bf16.gmra.mrb[0].mxu0 %v2618
    %v2678 = vpop.f32.mrb[0].mxu0
    %v2679 = vadd.f32 0.0, %v2678
    %v2680 = vpop.f32.mrb[0].mxu0
    %v2681 = vpop.f32.mrb[0].mxu0
    %v2682 = vadd.f32 0.0, %v2681
    %v2683 = vpop.f32.mrb[0].mxu0
    %2684 = vdwg.mxu0
    %v2685 = vadd.f32 %v2174, %v2655
    %v2686 = vadd.f32 %v2177, %v2658
    %v2687 = vadd.f32 %v2182, %v2663
    %v2688 = vadd.f32 %v2185, %v2666
    %v2689 = vadd.f32 %v2190, %v2671
    %v2690 = vadd.f32 %v2193, %v2674
    %v2691 = vadd.f32 %v2198, %v2679
    %v2692 = vadd.f32 %v2201, %v2682
    %2693 = vrot.lane.b32.xlu0 %v1077, 32
    %v2694 = vpop.permute.xlu0 %2693
    %2695 = vrot.lane.b32.xlu0 %v1080, 32
    %v2696 = vpop.permute.xlu0 %2695
    %2697 = vrot.lane.b32.xlu0 %v1085, 32
    %v2698 = vpop.permute.xlu0 %2697
    %2699 = vrot.lane.b32.xlu0 %v1088, 32
    %v2700 = vpop.permute.xlu0 %2699
    %2701 = vrot.lane.b32.xlu0 %v1093, 32
    %v2702 = vpop.permute.xlu0 %2701
    %2703 = vrot.lane.b32.xlu0 %v1096, 32
    %v2704 = vpop.permute.xlu0 %2703
    %2705 = vrot.lane.b32.xlu0 %v1101, 32
    %v2706 = vpop.permute.xlu0 %2705
    %2707 = vrot.lane.b32.xlu0 %v1104, 32
    %v2708 = vpop.permute.xlu0 %2707
    %2709 = vrot.lane.b32.xlu0 %v1239, 32
    %v2710 = vpop.permute.xlu0 %2709
    %2711 = vrot.lane.b32.xlu0 %v1243, 32
    %v2712 = vpop.permute.xlu0 %2711
    %v2713 = vsel %vm1248, %v2694, 0
    %v2715 = vsel %vm1248, %v2696, 0
    %v2717 = vsel %vm1248, %v2698, 0
    %v2719 = vsel %vm1248, %v2700, 0
    %v2721 = vsel %vm1248, %v2702, 0
    %v2723 = vsel %vm1248, %v2704, 0
    %v2725 = vsel %vm1248, %v2706, 0
    %v2727 = vsel %vm1248, %v2708, 0
    %v2729 = vsel %vm1248, %v2710, 0
    %v2731 = vsel %vm1248, %v2712, 0
    %2733 = vmatprep.subr.mxu0 0.0
    %2734 = vmatpush1.xpose.msra.mxu0 %v2729
    %2735 = vmatprep.subr.mxu0 0.0
    %2736 = vmatpush1.xpose.msra.mxu0 %v2731
    %2737 = vmatprep.subr.mxu0 0.0
    %2738 = vmatpush1.xpose.msra.mxu0 0.0
    %2739 = vmatprep.subr.mxu0 0.0
    %2740 = vmatpush1.xpose.msra.mxu0 0.0
    %2741 = vmatprep.subr.mxu0 0.0
    %2742 = vmatpush1.xpose.msra.mxu0 0.0
    %2743 = vmatprep.subr.mxu0 0.0
    %2744 = vmatpush1.xpose.msra.mxu0 0.0
    %2745 = vmatprep.subr.mxu0 0.0
    %2746 = vmatpush1.xpose.msra.mxu0 0.0
    %2747 = vmatprep.subr.mxu0 0.0
    %2748 = vmatpush1.xpose.msra.mxu0 0.0
    %2749 = vmatprep.subr.mxu0 0.0
    %2750 = vmatpush1.xpose.msra.mxu0 0.0
    %2751 = vmatprep.subr.mxu0 0.0
    %2752 = vmatpush1.xpose.msra.mxu0 0.0
    %2753 = vmatprep.subr.mxu0 0.0
    %2754 = vmatpush1.xpose.msra.mxu0 0.0
    %2755 = vmatprep.subr.mxu0 0.0
    %2756 = vmatpush1.xpose.msra.mxu0 0.0
    %2757 = vmatprep.subr.mxu0 0.0
    %2758 = vmatpush1.xpose.msra.mxu0 0.0
    %2759 = vmatprep.subr.mxu0 0.0
    %2760 = vmatpush1.xpose.msra.mxu0 0.0
    %2761 = vmatprep.subr.mxu0 0.0
    %2762 = vmatpush1.xpose.msra.mxu0 0.0
    %2763 = vmatprep.subr.mxu0 0.0
    %2764 = vmatpush1.xpose.msra.mxu0 0.0
    %2765 = vmatprep.subr.mxu0 0.0
    %2766 = vmatpush1.xpose.msra.mxu0 0.0
    %2767 = vmatprep.subr.mxu0 0.0
    %2768 = vmatpush1.xpose.msra.mxu0 0.0
    %2769 = vmatprep.subr.mxu0 0.0
    %2770 = vmatpush1.xpose.msra.mxu0 0.0
    %2771 = vmatprep.subr.mxu0 0.0
    %2772 = vmatpush1.xpose.msra.mxu0 0.0
    %2773 = vmatprep.subr.mxu0 0.0
    %2774 = vmatpush1.xpose.msra.mxu0 0.0
    %2775 = vmatprep.subr.mxu0 0.0
    %2776 = vmatpush1.xpose.msra.mxu0 0.0
    %2777 = vmatprep.subr.mxu0 0.0
    %2778 = vmatpush1.xpose.msra.mxu0 0.0
    %2779 = vmatprep.subr.mxu0 0.0
    %2780 = vmatpush1.xpose.msra.mxu0 0.0
    %2781 = vmatprep.subr.mxu0 0.0
    %2782 = vmatpush1.xpose.msra.mxu0 0.0
    %2783 = vmatprep.subr.mxu0 0.0
    %2784 = vmatpush1.xpose.msra.mxu0 0.0
    %2785 = vmatprep.subr.mxu0 0.0
    %2786 = vmatpush1.xpose.msra.mxu0 0.0
    %2787 = vmatprep.subr.mxu0 0.0
    %2788 = vmatpush1.xpose.msra.mxu0 0.0
    %2789 = vmatprep.subr.mxu0 0.0
    %2790 = vmatpush1.xpose.msra.mxu0 0.0
    %2791 = vmatprep.subr.mxu0 0.0
    %2792 = vmatpush1.xpose.msra.mxu0 0.0
    %2793 = vmatprep.subr.mxu0 0.0
    %2794 = vmatpush1.xpose.msra.mxu0 0.0
    %2795 = vmatprep.subr.mxu0 0.0
    %2796 = vmatpush1.xpose.msra.mxu0 0.0
    %2797 = vmatprep.mubr.f32.mxu0 0.0
    %2798 = vmatmul.mubr.f32.gmra.mrb[0].mxu0 %v2713
    %v2799 = vpop.f32.mrb[0].mxu0
    %v2800 = vadd.f32 0.0, %v2799
    %v2801 = vpop.f32.mrb[0].mxu0
    %2802 = vmatprep.mubr.f32.mxu0 0.0
    %2803 = vmatmul.mubr.f32.gmra.mrb[0].mxu0 %v2715
    %v2804 = vpop.f32.mrb[0].mxu0
    %v2805 = vadd.f32 0.0, %v2804
    %v2806 = vpop.f32.mrb[0].mxu0
    %2807 = vmatprep.mubr.f32.mxu0 0.0
    %2808 = vmatmul.mubr.f32.gmra.mrb[0].mxu0 %v2717
    %v2809 = vpop.f32.mrb[0].mxu0
    %v2810 = vadd.f32 0.0, %v2809
    %v2811 = vpop.f32.mrb[0].mxu0
    %2812 = vmatprep.mubr.f32.mxu0 0.0
    %2813 = vmatmul.mubr.f32.gmra.mrb[0].mxu0 %v2719
    %v2814 = vpop.f32.mrb[0].mxu0
    %v2815 = vadd.f32 0.0, %v2814
    %v2816 = vpop.f32.mrb[0].mxu0
    %2817 = vmatprep.mubr.f32.mxu0 0.0
    %2818 = vmatmul.mubr.f32.gmra.mrb[0].mxu0 %v2721
    %v2819 = vpop.f32.mrb[0].mxu0
    %v2820 = vadd.f32 0.0, %v2819
    %v2821 = vpop.f32.mrb[0].mxu0
    %2822 = vmatprep.mubr.f32.mxu0 0.0
    %2823 = vmatmul.mubr.f32.gmra.mrb[0].mxu0 %v2723
    %v2824 = vpop.f32.mrb[0].mxu0
    %v2825 = vadd.f32 0.0, %v2824
    %v2826 = vpop.f32.mrb[0].mxu0
    %2827 = vmatprep.mubr.f32.mxu0 0.0
    %2828 = vmatmul.mubr.f32.gmra.mrb[0].mxu0 %v2725
    %v2829 = vpop.f32.mrb[0].mxu0
    %v2830 = vadd.f32 0.0, %v2829
    %v2831 = vpop.f32.mrb[0].mxu0
    %2832 = vmatprep.mubr.f32.mxu0 0.0
    %2833 = vmatmul.mubr.f32.gmra.mrb[0].mxu0 %v2727
    %v2834 = vpop.f32.mrb[0].mxu0
    %v2835 = vadd.f32 0.0, %v2834
    %v2836 = vpop.f32.mrb[0].mxu0
    %2837 = vdwg.mxu0
    %v2838 = vmul.f32 %v2800, 0.17677669
    %v2839 = vmul.f32 %v2805, 0.17677669
    %v2840 = vmul.f32 %v2810, 0.17677669
    %v2841 = vmul.f32 %v2815, 0.17677669
    %v2842 = vmul.f32 %v2820, 0.17677669
    %v2843 = vmul.f32 %v2825, 0.17677669
    %v2844 = vmul.f32 %v2830, 0.17677669
    %v2845 = vmul.f32 %v2835, 0.17677669
    %v2846 = vadd.f32 %v2838, %v1396
    %v2847 = vadd.f32 %v2839, %v1396
    %v2848 = vadd.f32 %v2840, %v1396
    %v2849 = vadd.f32 %v2841, %v1396
    %v2850 = vadd.f32 %v2842, %v1396
    %v2851 = vadd.f32 %v2843, %v1396
    %v2852 = vadd.f32 %v2844, %v1396
    %v2853 = vadd.f32 %v2845, %v1396
    %v2854 = vsel %vm1406, %v2846, -inf
    %2855 = vmax.xlane.f32.xlu0 %v2854
    %v2856 = vpop.xlane.xlu0 %2855
    %v2857 = vsel %vm1406, %v2847, -inf
    %2858 = vmax.xlane.f32.xlu0 %v2857
    %v2859 = vpop.xlane.xlu0 %2858
    %v2860 = vsel %vm1406, %v2848, -inf
    %2861 = vmax.xlane.f32.xlu0 %v2860
    %v2862 = vpop.xlane.xlu0 %2861
    %v2863 = vsel %vm1406, %v2849, -inf
    %2864 = vmax.xlane.f32.xlu0 %v2863
    %v2865 = vpop.xlane.xlu0 %2864
    %v2866 = vsel %vm1406, %v2850, -inf
    %2867 = vmax.xlane.f32.xlu0 %v2866
    %v2868 = vpop.xlane.xlu0 %2867
    %v2869 = vsel %vm1406, %v2851, -inf
    %2870 = vmax.xlane.f32.xlu0 %v2869
    %v2871 = vpop.xlane.xlu0 %2870
    %v2872 = vsel %vm1406, %v2852, -inf
    %2873 = vmax.xlane.f32.xlu0 %v2872
    %v2874 = vpop.xlane.xlu0 %2873
    %v2875 = vsel %vm1406, %v2853, -inf
    %2876 = vmax.xlane.f32.xlu0 %v2875
    %v2877 = vpop.xlane.xlu0 %2876
    %v2878 = vsub.f32 %v2846, %v2856
    %v2879 = vsub.f32 %v2847, %v2859
    %v2880 = vsub.f32 %v2848, %v2862
    %v2881 = vsub.f32 %v2849, %v2865
    %v2882 = vsub.f32 %v2850, %v2868
    %v2883 = vsub.f32 %v2851, %v2871
    %v2884 = vsub.f32 %v2852, %v2874
    %v2885 = vsub.f32 %v2853, %v2877
    %v2886 = vmul.f32 %v2878, 1.442695
    %v2887 = vpow.pop %v2886
    %v2888 = vmul.f32 %v2879, 1.442695
    %v2889 = vpow.pop %v2888
    %v2890 = vmul.f32 %v2880, 1.442695
    %v2891 = vpow.pop %v2890
    %v2892 = vmul.f32 %v2881, 1.442695
    %v2893 = vpow.pop %v2892
    %v2894 = vmul.f32 %v2882, 1.442695
    %v2895 = vpow.pop %v2894
    %v2896 = vmul.f32 %v2883, 1.442695
    %v2897 = vpow.pop %v2896
    %v2898 = vmul.f32 %v2884, 1.442695
    %v2899 = vpow.pop %v2898
    %v2900 = vmul.f32 %v2885, 1.442695
    %v2901 = vpow.pop %v2900
    %v2902 = vsel %vm1406, %v2887, 0.0
    %2903 = vadd.xlane.f32.xlu0 %v2902
    %v2904 = vpop.xlane.xlu0 %2903
    %v2905 = vsel %vm1406, %v2889, 0.0
    %2906 = vadd.xlane.f32.xlu0 %v2905
    %v2907 = vpop.xlane.xlu0 %2906
    %v2908 = vsel %vm1406, %v2891, 0.0
    %2909 = vadd.xlane.f32.xlu0 %v2908
    %v2910 = vpop.xlane.xlu0 %2909
    %v2911 = vsel %vm1406, %v2893, 0.0
    %2912 = vadd.xlane.f32.xlu0 %v2911
    %v2913 = vpop.xlane.xlu0 %2912
    %v2914 = vsel %vm1406, %v2895, 0.0
    %2915 = vadd.xlane.f32.xlu0 %v2914
    %v2916 = vpop.xlane.xlu0 %2915
    %v2917 = vsel %vm1406, %v2897, 0.0
    %2918 = vadd.xlane.f32.xlu0 %v2917
    %v2919 = vpop.xlane.xlu0 %2918
    %v2920 = vsel %vm1406, %v2899, 0.0
    %2921 = vadd.xlane.f32.xlu0 %v2920
    %v2922 = vpop.xlane.xlu0 %2921
    %v2923 = vsel %vm1406, %v2901, 0.0
    %2924 = vadd.xlane.f32.xlu0 %v2923
    %v2925 = vpop.xlane.xlu0 %2924
    %v2926 = vrcp.pop %v2904
    %v2927 = vrcp.pop %v2907
    %v2928 = vrcp.pop %v2910
    %v2929 = vrcp.pop %v2913
    %v2930 = vrcp.pop %v2916
    %v2931 = vrcp.pop %v2919
    %v2932 = vrcp.pop %v2922
    %v2933 = vrcp.pop %v2925
    %v2934 = vmul.f32 %v2887, %v2926
    %v2935 = vmul.f32 %v2889, %v2927
    %v2936 = vmul.f32 %v2891, %v2928
    %v2937 = vmul.f32 %v2893, %v2929
    %v2938 = vmul.f32 %v2895, %v2930
    %v2939 = vmul.f32 %v2897, %v2931
    %v2940 = vmul.f32 %v2899, %v2932
    %v2941 = vmul.f32 %v2901, %v2933
    %2942 = vrot.lane.b32.xlu0 %v1241, 32
    %v2943 = vpop.permute.xlu0 %2942
    %2944 = vrot.lane.b32.xlu0 %v1245, 32
    %v2945 = vpop.permute.xlu0 %2944
    %v2949 = vsel %vm1406, %v2934, 0
    %v2952 = vsel %vm1406, %v2935, 0
    %v2955 = vsel %vm1406, %v2936, 0
    %v2958 = vsel %vm1406, %v2937, 0
    %v2961 = vsel %vm1406, %v2938, 0
    %v2964 = vsel %vm1406, %v2939, 0
    %v2967 = vsel %vm1406, %v2940, 0
    %v2970 = vsel %vm1406, %v2941, 0
    %2972 = vmatprep.subr.mxu0 0.0
    %2973 = vmatpush1.msra.mxu0 %v2943
    %2974 = vmatprep.subr.mxu0 0.0
    %2975 = vmatpush1.msra.mxu0 %v2945
    %2976 = vmatprep.subr.mxu0 0.0
    %2977 = vmatpush1.msra.mxu0 0.0
    %2978 = vmatprep.subr.mxu0 0.0
    %2979 = vmatpush1.msra.mxu0 0.0
    %2980 = vmatprep.subr.mxu0 0.0
    %2981 = vmatpush1.msra.mxu0 0.0
    %2982 = vmatprep.subr.mxu0 0.0
    %2983 = vmatpush1.msra.mxu0 0.0
    %2984 = vmatprep.subr.mxu0 0.0
    %2985 = vmatpush1.msra.mxu0 0.0
    %2986 = vmatprep.subr.mxu0 0.0
    %2987 = vmatpush1.msra.mxu0 0.0
    %2988 = vmatprep.subr.mxu0 0.0
    %2989 = vmatpush1.msra.mxu0 0.0
    %2990 = vmatprep.subr.mxu0 0.0
    %2991 = vmatpush1.msra.mxu0 0.0
    %2992 = vmatprep.subr.mxu0 0.0
    %2993 = vmatpush1.msra.mxu0 0.0
    %2994 = vmatprep.subr.mxu0 0.0
    %2995 = vmatpush1.msra.mxu0 0.0
    %2996 = vmatprep.subr.mxu0 0.0
    %2997 = vmatpush1.msra.mxu0 0.0
    %2998 = vmatprep.subr.mxu0 0.0
    %2999 = vmatpush1.msra.mxu0 0.0
    %3000 = vmatprep.subr.mxu0 0.0
    %3001 = vmatpush1.msra.mxu0 0.0
    %3002 = vmatprep.subr.mxu0 0.0
    %3003 = vmatpush1.msra.mxu0 0.0
    %3004 = vmatprep.subr.mxu0 0.0
    %3005 = vmatpush1.msra.mxu0 0.0
    %3006 = vmatprep.subr.mxu0 0.0
    %3007 = vmatpush1.msra.mxu0 0.0
    %3008 = vmatprep.subr.mxu0 0.0
    %3009 = vmatpush1.msra.mxu0 0.0
    %3010 = vmatprep.subr.mxu0 0.0
    %3011 = vmatpush1.msra.mxu0 0.0
    %3012 = vmatprep.subr.mxu0 0.0
    %3013 = vmatpush1.msra.mxu0 0.0
    %3014 = vmatprep.subr.mxu0 0.0
    %3015 = vmatpush1.msra.mxu0 0.0
    %3016 = vmatprep.subr.mxu0 0.0
    %3017 = vmatpush1.msra.mxu0 0.0
    %3018 = vmatprep.subr.mxu0 0.0
    %3019 = vmatpush1.msra.mxu0 0.0
    %3020 = vmatprep.subr.mxu0 0.0
    %3021 = vmatpush1.msra.mxu0 0.0
    %3022 = vmatprep.subr.mxu0 0.0
    %3023 = vmatpush1.msra.mxu0 0.0
    %3024 = vmatprep.subr.mxu0 0.0
    %3025 = vmatpush1.msra.mxu0 0.0
    %3026 = vmatprep.subr.mxu0 0.0
    %3027 = vmatpush1.msra.mxu0 0.0
    %3028 = vmatprep.subr.mxu0 0.0
    %3029 = vmatpush1.msra.mxu0 0.0
    %3030 = vmatprep.subr.mxu0 0.0
    %3031 = vmatpush1.msra.mxu0 0.0
    %3032 = vmatprep.subr.mxu0 0.0
    %3033 = vmatpush1.msra.mxu0 0.0
    %3034 = vmatprep.subr.mxu0 0.0
    %3035 = vmatpush1.msra.mxu0 0.0
    %3036 = vmatprep.mubr.f32.mxu0 0.0
    %3037 = vmatmul.mubr.f32.gmra.mrb[0].mxu0 %v2949
    %v3038 = vpop.f32.mrb[0].mxu0
    %v3039 = vadd.f32 0.0, %v3038
    %v3040 = vpop.f32.mrb[0].mxu0
    %3041 = vmatprep.mubr.f32.mxu0 0.0
    %3042 = vmatmul.mubr.f32.gmra.mrb[0].mxu0 %v2952
    %v3043 = vpop.f32.mrb[0].mxu0
    %v3044 = vadd.f32 0.0, %v3043
    %v3045 = vpop.f32.mrb[0].mxu0
    %3046 = vmatprep.mubr.f32.mxu0 0.0
    %3047 = vmatmul.mubr.f32.gmra.mrb[0].mxu0 %v2955
    %v3048 = vpop.f32.mrb[0].mxu0
    %v3049 = vadd.f32 0.0, %v3048
    %v3050 = vpop.f32.mrb[0].mxu0
    %3051 = vmatprep.mubr.f32.mxu0 0.0
    %3052 = vmatmul.mubr.f32.gmra.mrb[0].mxu0 %v2958
    %v3053 = vpop.f32.mrb[0].mxu0
    %v3054 = vadd.f32 0.0, %v3053
    %v3055 = vpop.f32.mrb[0].mxu0
    %3056 = vmatprep.mubr.f32.mxu0 0.0
    %3057 = vmatmul.mubr.f32.gmra.mrb[0].mxu0 %v2961
    %v3058 = vpop.f32.mrb[0].mxu0
    %v3059 = vadd.f32 0.0, %v3058
    %v3060 = vpop.f32.mrb[0].mxu0
    %3061 = vmatprep.mubr.f32.mxu0 0.0
    %3062 = vmatmul.mubr.f32.gmra.mrb[0].mxu0 %v2964
    %v3063 = vpop.f32.mrb[0].mxu0
    %v3064 = vadd.f32 0.0, %v3063
    %v3065 = vpop.f32.mrb[0].mxu0
    %3066 = vmatprep.mubr.f32.mxu0 0.0
    %3067 = vmatmul.mubr.f32.gmra.mrb[0].mxu0 %v2967
    %v3068 = vpop.f32.mrb[0].mxu0
    %v3069 = vadd.f32 0.0, %v3068
    %v3070 = vpop.f32.mrb[0].mxu0
    %3071 = vmatprep.mubr.f32.mxu0 0.0
    %3072 = vmatmul.mubr.f32.gmra.mrb[0].mxu0 %v2970
    %v3073 = vpop.f32.mrb[0].mxu0
    %v3074 = vadd.f32 0.0, %v3073
    %v3075 = vpop.f32.mrb[0].mxu0
    %3076 = vdwg.mxu0
    %v3077 = vpack.c.bf16 %v3044, %v3039
    %v3078 = vpack.c.bf16 %v3054, %v3049
    %v3079 = vpack.c.bf16 %v3064, %v3059
    %v3080 = vpack.c.bf16 %v3074, %v3069
    %v3081 = vld [vmem:[%s10 + $0x30] sm:$0xf]
    %v3082 = vld [vmem:[%s10 + $0x34] sm:$0xf]
    %v3083 = vld [vmem:[%s10 + $0x38] sm:$0xf]
    %v3084 = vld [vmem:[%s10 + $0x3c] sm:$0xf]
    %v3089 = vunpack.c.l.b16 %v3081
    %v3090 = vunpack.c.l.b16 %v3082
    %v3091 = vunpack.c.l.b16 %v3083
    %v3092 = vunpack.c.l.b16 %v3084
    %v3093 = vpack.c.b16 %v3090, %v3089
    %v3094 = vpack.c.b16 %v3092, %v3091
    %v3098 = vsel %vm1248, %v3077, 0
    %v3101 = vsel %vm1248, %v3078, 0
    %v3104 = vsel %vm1248, %v3079, 0
    %v3107 = vsel %vm1248, %v3080, 0
    %3109 = vmatprep.subr.bf16.mxu0 0
    %3110 = vmatpush1.bf16.msra.mxu0 %v3093
    %3111 = vmatprep.subr.bf16.mxu0 0
    %3112 = vmatpush1.bf16.msra.mxu0 %v3094
    %3113 = vmatprep.subr.bf16.mxu0 0
    %3114 = vmatpush1.bf16.msra.mxu0 0
    %3115 = vmatprep.subr.bf16.mxu0 0
    %3116 = vmatpush1.bf16.msra.mxu0 0
    %3117 = vmatprep.subr.bf16.mxu0 0
    %3118 = vmatpush1.bf16.msra.mxu0 0
    %3119 = vmatprep.subr.bf16.mxu0 0
    %3120 = vmatpush1.bf16.msra.mxu0 0
    %3121 = vmatprep.subr.bf16.mxu0 0
    %3122 = vmatpush1.bf16.msra.mxu0 0
    %3123 = vmatprep.subr.bf16.mxu0 0
    %3124 = vmatpush1.bf16.msra.mxu0 0
    %3125 = vmatprep.subr.bf16.mxu0 0
    %3126 = vmatpush1.bf16.msra.mxu0 0
    %3127 = vmatprep.subr.bf16.mxu0 0
    %3128 = vmatpush1.bf16.msra.mxu0 0
    %3129 = vmatprep.subr.bf16.mxu0 0
    %3130 = vmatpush1.bf16.msra.mxu0 0
    %3131 = vmatprep.subr.bf16.mxu0 0
    %3132 = vmatpush1.bf16.msra.mxu0 0
    %3133 = vmatprep.subr.bf16.mxu0 0
    %3134 = vmatpush1.bf16.msra.mxu0 0
    %3135 = vmatprep.subr.bf16.mxu0 0
    %3136 = vmatpush1.bf16.msra.mxu0 0
    %3137 = vmatprep.subr.bf16.mxu0 0
    %3138 = vmatpush1.bf16.msra.mxu0 0
    %3139 = vmatprep.subr.bf16.mxu0 0
    %3140 = vmatpush1.bf16.msra.mxu0 0
    %3141 = vmatprep.mubr.bf16.mxu0 0
    %3142 = vmatmul.mubr.bf16.gmra.mrb[0].mxu0 %v3098
    %v3143 = vpop.f32.mrb[0].mxu0
    %v3144 = vadd.f32 0.0, %v3143
    %v3145 = vpop.f32.mrb[0].mxu0
    %v3146 = vpop.f32.mrb[0].mxu0
    %v3147 = vadd.f32 0.0, %v3146
    %v3148 = vpop.f32.mrb[0].mxu0
    %3149 = vmatprep.mubr.bf16.mxu0 0
    %3150 = vmatmul.mubr.bf16.gmra.mrb[0].mxu0 %v3101
    %v3151 = vpop.f32.mrb[0].mxu0
    %v3152 = vadd.f32 0.0, %v3151
    %v3153 = vpop.f32.mrb[0].mxu0
    %v3154 = vpop.f32.mrb[0].mxu0
    %v3155 = vadd.f32 0.0, %v3154
    %v3156 = vpop.f32.mrb[0].mxu0
    %3157 = vmatprep.mubr.bf16.mxu0 0
    %3158 = vmatmul.mubr.bf16.gmra.mrb[0].mxu0 %v3104
    %v3159 = vpop.f32.mrb[0].mxu0
    %v3160 = vadd.f32 0.0, %v3159
    %v3161 = vpop.f32.mrb[0].mxu0
    %v3162 = vpop.f32.mrb[0].mxu0
    %v3163 = vadd.f32 0.0, %v3162
    %v3164 = vpop.f32.mrb[0].mxu0
    %3165 = vmatprep.mubr.bf16.mxu0 0
    %3166 = vmatmul.mubr.bf16.gmra.mrb[0].mxu0 %v3107
    %v3167 = vpop.f32.mrb[0].mxu0
    %v3168 = vadd.f32 0.0, %v3167
    %v3169 = vpop.f32.mrb[0].mxu0
    %v3170 = vpop.f32.mrb[0].mxu0
    %v3171 = vadd.f32 0.0, %v3170
    %v3172 = vpop.f32.mrb[0].mxu0
    %3173 = vdwg.mxu0
    %v3174 = vadd.f32 %v2685, %v3144
    %v3175 = vadd.f32 %v2686, %v3147
    %v3176 = vadd.f32 %v2687, %v3152
    %v3177 = vadd.f32 %v2688, %v3155
    %v3178 = vadd.f32 %v2689, %v3160
    %v3179 = vadd.f32 %v2690, %v3163
    %v3180 = vadd.f32 %v2691, %v3168
    %v3181 = vadd.f32 %v2692, %v3171
    %3182 = vst [vmem:[#allocation2] sm:$0xff] %v3174
    %3183 = vst [vmem:[#allocation2 + $0x8] sm:$0xff] %v3175
    %3184 = vst [vmem:[#allocation2 + $0x10] sm:$0xff] %v3176
    %3185 = vst [vmem:[#allocation2 + $0x18] sm:$0xff] %v3177
    %3186 = vst [vmem:[#allocation2 + $0x20] sm:$0xff] %v3178
    %3187 = vst [vmem:[#allocation2 + $0x28] sm:$0xff] %v3179
    %3188 = vst [vmem:[#allocation2 + $0x30] sm:$0xff] %v3180
    %3189 = vst [vmem:[#allocation2 + $0x38] sm:$0xff] %v3181
    %3190 = vrot.lane.b32.xlu0 %v1873, 16
    %v3191 = vpop.permute.xlu0 %3190
    %3192 = vrot.lane.b32.xlu0 %v1874, 16
    %v3193 = vpop.permute.xlu0 %3192
    %3194 = vrot.lane.b32.xlu0 %v1875, 16
    %v3195 = vpop.permute.xlu0 %3194
    %3196 = vrot.lane.b32.xlu0 %v1876, 16
    %v3197 = vpop.permute.xlu0 %3196
    %3198 = vrot.lane.b32.xlu0 %v1877, 16
    %v3199 = vpop.permute.xlu0 %3198
    %3200 = vrot.lane.b32.xlu0 %v1878, 16
    %v3201 = vpop.permute.xlu0 %3200
    %3202 = vrot.lane.b32.xlu0 %v1879, 16
    %v3203 = vpop.permute.xlu0 %3202
    %3204 = vrot.lane.b32.xlu0 %v1880, 16
    %v3205 = vpop.permute.xlu0 %3204
    %3214 = vrot.lane.b32.xlu0 %v2445, 32
    %v3215 = vpop.permute.xlu0 %3214
    %3216 = vrot.lane.b32.xlu0 %v2446, 32
    %v3217 = vpop.permute.xlu0 %3216
    %3218 = vrot.lane.b32.xlu0 %v2447, 32
    %v3219 = vpop.permute.xlu0 %3218
    %3220 = vrot.lane.b32.xlu0 %v2448, 32
    %v3221 = vpop.permute.xlu0 %3220
    %3222 = vrot.lane.b32.xlu0 %v2449, 32
    %v3223 = vpop.permute.xlu0 %3222
    %3224 = vrot.lane.b32.xlu0 %v2450, 32
    %v3225 = vpop.permute.xlu0 %3224
    %3226 = vrot.lane.b32.xlu0 %v2451, 32
    %v3227 = vpop.permute.xlu0 %3226
    %3228 = vrot.lane.b32.xlu0 %v2452, 32
    %v3229 = vpop.permute.xlu0 %3228
    %3238 = vrot.lane.b32.xlu0 %v2934, 48
    %v3239 = vpop.permute.xlu0 %3238
    %3240 = vrot.lane.b32.xlu0 %v2935, 48
    %v3241 = vpop.permute.xlu0 %3240
    %3242 = vrot.lane.b32.xlu0 %v2936, 48
    %v3243 = vpop.permute.xlu0 %3242
    %3244 = vrot.lane.b32.xlu0 %v2937, 48
    %v3245 = vpop.permute.xlu0 %3244
    %3246 = vrot.lane.b32.xlu0 %v2938, 48
    %v3247 = vpop.permute.xlu0 %3246
    %3248 = vrot.lane.b32.xlu0 %v2939, 48
    %v3249 = vpop.permute.xlu0 %3248
    %3250 = vrot.lane.b32.xlu0 %v2940, 48
    %v3251 = vpop.permute.xlu0 %3250
    %3252 = vrot.lane.b32.xlu0 %v2941, 48
    %v3253 = vpop.permute.xlu0 %3252
    %v3262 = vsel %vm1406, %v1487, %v3191
    %v3263 = vsel %vm1406, %v1488, %v3193
    %v3264 = vsel %vm1406, %v1489, %v3195
    %v3265 = vsel %vm1406, %v1490, %v3197
    %v3266 = vsel %vm1406, %v1491, %v3199
    %v3267 = vsel %vm1406, %v1492, %v3201
    %v3268 = vsel %vm1406, %v1493, %v3203
    %v3269 = vsel %vm1406, %v1494, %v3205
    %v3270 = vsel %vm1248, %v3262, %v3215
    %v3271 = vsel %vm1248, %v3263, %v3217
    %v3272 = vsel %vm1248, %v3264, %v3219
    %v3273 = vsel %vm1248, %v3265, %v3221
    %v3274 = vsel %vm1248, %v3266, %v3223
    %v3275 = vsel %vm1248, %v3267, %v3225
    %v3276 = vsel %vm1248, %v3268, %v3227
    %v3277 = vsel %vm1248, %v3269, %v3229
    %vm3278 = vcmask 392192
    %v3279 = vsel %vm3278, %v3270, %v3239
    %v3280 = vsel %vm3278, %v3271, %v3241
    %v3281 = vsel %vm3278, %v3272, %v3243
    %v3282 = vsel %vm3278, %v3273, %v3245
    %v3283 = vsel %vm3278, %v3274, %v3247
    %v3284 = vsel %vm3278, %v3275, %v3249
    %v3285 = vsel %vm3278, %v3276, %v3251
    %v3286 = vsel %vm3278, %v3277, %v3253
    %vm3287 = vcmask 523264
    %3288 = vst.msk [vmem:[%s12] sm:$0xff] %vm3287, %v3279
    %3289 = vst.msk [vmem:[%s12 + $0x8] sm:$0xff] %vm3287, %v3280
    %3290 = vst.msk [vmem:[%s12 + $0x10] sm:$0xff] %vm3287, %v3281
    %3291 = vst.msk [vmem:[%s12 + $0x18] sm:$0xff] %vm3287, %v3282
    %3292 = vst.msk [vmem:[%s12 + $0x20] sm:$0xff] %vm3287, %v3283
    %3293 = vst.msk [vmem:[%s12 + $0x28] sm:$0xff] %vm3287, %v3284
    %3294 = vst.msk [vmem:[%s12 + $0x30] sm:$0xff] %vm3287, %v3285
    %3295 = vst.msk [vmem:[%s12 + $0x38] sm:$0xff] %vm3287, %v3286
    // Predicated region
    $region46: #{_forward_core.1} parent=1 // pred_check
      _
    $region47: #{_forward_core.1} parent=1 // pred_check_branch
      %3297 = sbr.rel (0) target = $region49
    $region48: #{_forward_core.1} parent=1 // pred_region
      %s3299 = ssub.s32 1024, 1024
      %3300 = vsyncadd [#allocation3], %s3299
      %s3301 = sshll.u32 [#allocation2], 4
      %s3302 = int_to_ptr.vmem [resolvable:$true] %s3301
      %3307 = dma.vmem_to_hbm [thread:$0]  %s3302, 1024, %s11, [#allocation3], 128, 128, 8
    $region49: #{_forward_core.1} parent=1 // pred_fallthru
      _
    // Predicated region
    $region50: #{_forward_core.1} parent=1 // pred_check
      _
    $region51: #{_forward_core.1} parent=1 // pred_check_branch
      %3309 = sbr.rel (0) target = $region53
    $region52: #{_forward_core.1} parent=1 // pred_region
      _
    $region53: #{_forward_core.1} parent=1 // pred_fallthru
      _
    // Predicated region
    $region54: #{_forward_core.1} parent=1 // pred_check
      _
    $region55: #{_forward_core.1} parent=1 // pred_check_branch
      %3311 = sbr.rel (0) target = $region57
    $region56: #{_forward_core.1} parent=1 // pred_region
      %3312 = dma.done [#allocation3], 1024
    $region57: #{_forward_core.1} parent=1 // pred_fallthru
      _
    // Predicated region
    $region58: #{_forward_core.1} parent=1 // pred_check
      _
    $region59: #{_forward_core.1} parent=1 // pred_check_branch
      %3314 = sbr.rel (0) target = $region61
    $region60: #{_forward_core.1} parent=1 // pred_region
      _
    $region61: #{_forward_core.1} parent=1 // pred_fallthru
      _
    %3315 = vsyncpa [#allocation3], 1

</llo_original>
